<compile_context>
chip_gen: v6e
topology: v6e:2x2x1
jax: 0.10.0
libtpu: 0.0.40
codegen_flags: <defaults>
</compile_context>

<pallas_src>
import collections
import functools
import math

import jax
import jax.numpy as jnp
from jax import lax
from jax.experimental import pallas as pl
from jax.experimental.pallas import tpu as pltpu

MultiGraph = collections.namedtuple(
    "Graph", ["node_features", "reciever_features", "sender_features", "adj"]
)

LN_EPS = 1e-5          # torch.nn.LayerNorm default eps
LEAKY_SLOPE = 0.2      # nn.LeakyReLU(negative_slope=0.2)
_MASK_VALUE = -1e30    # finite stand-in for masked_fill(-inf); same softmax result
_VEC_ROWS = 8          # packed per-step (1,D) vectors: b_r, b_s, g_r, be_r, g_s, be_s, g_n, be_n


# ----------------------------------------------------------------------------
# Shared math (used both inside the Pallas kernel and by the pure-JAX ref).
# ----------------------------------------------------------------------------
def _leaky_relu(x):
    return jnp.where(x >= 0, x, LEAKY_SLOPE * x)


def _layernorm(x, gamma, beta):
    mean = jnp.mean(x, axis=-1, keepdims=True)
    cen = x - mean
    var = jnp.mean(cen * cen, axis=-1, keepdims=True)
    return cen * lax.rsqrt(var + LN_EPS) * gamma + beta


def _block_math(node, edge, adj, wn, wm, vec, *, num_heads):
    """One GraphNetBlock.

    node : [N, D]  f32         current node features
    edge : [2N, D] f32         rows 0..N-1 = reciever feats, N..2N-1 = sender feats
    adj  : [N, N]  f32
    wn   : [D, 3D] bf16        [Wr | Ws | Wq] packed along the output dim, layout [in, out]
    wm   : [D, D]  bf16        memory_linear weight, layout [in, out]
    vec  : [8, D]  f32         rows: b_r(=br+bm), b_s(=bs+bm), g_r, be_r, g_s, be_s, g_n, be_n
    """
    f32, bf16 = jnp.float32, jnp.bfloat16
    N, D = node.shape
    K = D // num_heads

    recv = edge[:N]
    send = edge[N:]

    b_r, b_s = vec[0:1], vec[1:2]
    g_r, be_r = vec[2:3], vec[3:4]
    g_s, be_s = vec[4:5], vec[5:6]
    g_n, be_n = vec[6:7], vec[7:8]

    def mm(x, wgt):  # bf16 MXU matmul, f32 accumulation
        return jnp.dot(x.astype(bf16), wgt.astype(bf16), preferred_element_type=f32)

    # --- _update_edge_features (fused projections) -------------------------
    proj = mm(node, wn)                     # [N, 3D] = node@Wr | node@Ws | node@Wq
    mem = mm(edge, wm)                      # [2N, D] = recv@Wm ; send@Wm
    pre_r = proj[:, 0:D] + mem[:N] + b_r
    pre_s = proj[:, D:2 * D] + mem[N:] + b_s
    new_recv = _layernorm(_leaky_relu(pre_r), g_r, be_r) + recv
    new_send = _layernorm(_leaky_relu(pre_s), g_s, be_s) + send

    # --- _update_node_features (multi-head attention over adj) -------------
    q = proj[:, 2 * D:3 * D]
    q_bf = q.astype(bf16)
    send_bf = send.astype(bf16)
    qprod = q * recv                                     # for the per-head diag terms
    mask_add = jnp.where(adj == 0.0, _MASK_VALUE, 0.0)   # hoisted out of head loop
    inv_sqrt_k = 1.0 / math.sqrt(K)

    aggr_heads = []
    for h in range(num_heads):
        sl = slice(h * K, (h + 1) * K)
        qr = jnp.sum(qprod[:, sl], axis=-1, keepdims=True)                  # [N,1]
        qs = lax.dot_general(q_bf[:, sl], send_bf[:, sl],
                             (((1,), (1,)), ((), ())),
                             preferred_element_type=f32)                    # [N,N]
        scores = (qr + qs + mask_add) * inv_sqrt_k
        m = jnp.max(scores, axis=-1, keepdims=True)
        p = jnp.exp(scores - m)
        inv_denom = 1.0 / jnp.sum(p, axis=-1, keepdims=True)
        # TODO(synk): nn.Dropout(p=0.2) on attention scores omitted (eval/inference).
        aggr_heads.append(
            jnp.dot(p.astype(bf16), send_bf[:, sl], preferred_element_type=f32)
            * inv_denom)                                                    # [N,K]
    aggr = jnp.concatenate(aggr_heads, axis=-1)                             # [N,D]
    new_node = _layernorm(_leaky_relu(recv + aggr), g_n, be_n) + node

    return new_node, new_recv, new_send


# ----------------------------------------------------------------------------
# Pallas kernel: whole Processor; grid axis = message-passing step.
# ----------------------------------------------------------------------------
def _processor_kernel(node_in, edge_in, adj_ref, wn_ref, wm_ref, vec_ref,
                      node_out, edge_out, node_s, edge_s, *, num_heads):
    step = pl.program_id(0)
    N = node_in.shape[0]

    @pl.when(step == 0)
    def _init():
        node_s[...] = node_in[...]
        edge_s[...] = edge_in[...]

    new_node, new_recv, new_send = _block_math(
        node_s[...], edge_s[...], adj_ref[...],
        wn_ref[...], wm_ref[...], vec_ref[...], num_heads=num_heads)

    node_s[...] = new_node
    edge_s[pl.ds(0, N), :] = new_recv
    edge_s[pl.ds(N, N), :] = new_send

    @pl.when(step == pl.num_programs(0) - 1)
    def _finalize():
        node_out[...] = new_node.astype(node_out.dtype)
        edge_out[pl.ds(0, N), :] = new_recv.astype(edge_out.dtype)
        edge_out[pl.ds(N, N), :] = new_send.astype(edge_out.dtype)


def processor_forward(graph, wn_stack, wm_stack, vec_stack, num_heads, mask=None):
    """Apply all GraphNetBlocks (one fused pallas_call)."""
    node = graph.node_features
    recv = graph.reciever_features
    send = graph.sender_features
    adj = graph.adj

    N, D = node.shape
    S = wn_stack.shape[0]
    assert D % num_heads == 0
    # Keep the latent lane-dense / sublane-aligned for TPU tiling.
    assert D % 128 == 0 and N % 8 == 0, "pad N to 8 and D to 128 for TPU layout"

    # Single stacked edge-state tensor: rows [0,N) = reciever, [N,2N) = sender.
    edge = jnp.concatenate([recv, send], axis=0)

    full2 = lambda s: (0, 0)
    kernel = functools.partial(_processor_kernel, num_heads=num_heads)

    # Explicit VMEM budget (sized against v7x's 64 MiB VMEM, with headroom).
    feat = N * D * 4
    need = (2 * (3 * feat + N * N * 4)                          # double-buffered node/edge/adj inputs
            + 2 * (4 * D * D * 2 + _VEC_ROWS * D * 4)           # double-buffered per-step params
            + 2 * 3 * feat                                      # outputs
            + 3 * feat)                                         # carried-state scratch
    vmem_limit = int(min(max(2 * need, 16 << 20), 48 << 20))

    node_out, edge_out = pl.pallas_call(
        kernel,
        out_shape=(
            jax.ShapeDtypeStruct((N, D), jnp.float32),
            jax.ShapeDtypeStruct((2 * N, D), jnp.float32),
        ),
        grid_spec=pltpu.PrefetchScalarGridSpec(
            num_scalar_prefetch=0,
            grid=(S,),
            in_specs=[
                pl.BlockSpec((N, D), full2),                              # node features
                pl.BlockSpec((2 * N, D), full2),                          # [recv ; send] features
                pl.BlockSpec((N, N), full2),                              # adjacency
                pl.BlockSpec((None, D, 3 * D), lambda s: (s, 0, 0)),      # per-step [Wr|Ws|Wq] (bf16)
                pl.BlockSpec((None, D, D), lambda s: (s, 0, 0)),          # per-step Wm (bf16)
                pl.BlockSpec((None, _VEC_ROWS, D), lambda s: (s, 0, 0)),  # per-step bias/LN vectors
            ],
            out_specs=[
                pl.BlockSpec((N, D), full2),
                pl.BlockSpec((2 * N, D), full2),
            ],
            scratch_shapes=[
                pltpu.VMEM((N, D), jnp.float32),
                pltpu.VMEM((2 * N, D), jnp.float32),
            ],
        ),
        compiler_params=pltpu.CompilerParams(
            dimension_semantics=("arbitrary",),   # message-passing steps are sequential
            vmem_limit_bytes=vmem_limit,
        ),
    )(node, edge, adj, wn_stack, wm_stack, vec_stack)

    return MultiGraph(node_out, edge_out[:N], edge_out[N:], adj)


# ----------------------------------------------------------------------------
# Parameter construction (deterministic, PyTorch-Linear-style init).
# ----------------------------------------------------------------------------
def make_processor_params(key, output_size, message_passing_steps):
    D = output_size
    lim = 1.0 / math.sqrt(D)
    step_keys = jax.random.split(key, message_passing_steps)
    wn_all, wm_all, vec_all = [], [], []
    for ks in step_keys:
        k = jax.random.split(ks, 9)
        wq = jax.random.uniform(k[0], (D, D), jnp.float32, -lim, lim)
        wr = jax.random.uniform(k[1], (D, D), jnp.float32, -lim, lim)
        ws = jax.random.uniform(k[2], (D, D), jnp.float32, -lim, lim)
        wm = jax.random.uniform(k[3], (D, D), jnp.float32, -lim, lim)
        br = jax.random.uniform(k[4], (D,), jnp.float32, -lim, lim)
        bsn = jax.random.uniform(k[5], (D,), jnp.float32, -lim, lim)
        bm = jax.random.uniform(k[6], (D,), jnp.float32, -lim, lim)
        gam = jax.random.uniform(k[7], (3, D), jnp.float32, 0.8, 1.2)   # LN gammas
        bet = jax.random.uniform(k[8], (3, D), jnp.float32, -0.1, 0.1)  # LN betas
        vec = jnp.zeros((_VEC_ROWS, D), jnp.float32)
        vec = vec.at[0].set(br + bm).at[1].set(bsn + bm)   # fused bias terms
        vec = vec.at[2].set(gam[0]).at[3].set(bet[0])      # reciever_norm
        vec = vec.at[4].set(gam[1]).at[5].set(bet[1])      # sender_norm
        vec = vec.at[6].set(gam[2]).at[7].set(bet[2])      # node_norm
        wn_all.append(jnp.concatenate([wr, ws, wq], axis=1))   # [D, 3D]
        wm_all.append(wm)
        vec_all.append(vec)
    wn_stack = jnp.stack(wn_all, axis=0).astype(jnp.bfloat16)   # (S, D, 3D)
    wm_stack = jnp.stack(wm_all, axis=0).astype(jnp.bfloat16)   # (S, D, D)
    vec_stack = jnp.stack(vec_all, axis=0)                      # (S, 8, D)
    return wn_stack, wm_stack, vec_stack


# ----------------------------------------------------------------------------
# Pure-JAX reference (identical precision choices) for the self-check.
# ----------------------------------------------------------------------------
def processor_reference(node, recv, send, adj, wn_stack, wm_stack, vec_stack, num_heads):
    for s in range(wn_stack.shape[0]):
        edge = jnp.concatenate([recv, send], axis=0)
        node, recv, send = _block_math(
            node, edge, adj, wn_stack[s], wm_stack[s], vec_stack[s],
            num_heads=num_heads)
    return node, recv, send


if __name__ == "__main__":
    key = jax.random.PRNGKey(0)
    k_n, k_r, k_s, k_a, k_p = jax.random.split(key, 5)

    # Small, TPU-friendly shapes consistent with the module:
    # this GraphNetBlock treats node / reciever / sender features as
    # [num_nodes, output_size] (it reshapes all of them per head).
    num_nodes = 128
    output_size = 128
    num_heads = 4
    message_passing_steps = 2

    node = jax.random.normal(k_n, (num_nodes, output_size), jnp.float32)
    recv = jax.random.normal(k_r, (num_nodes, output_size), jnp.float32)
    send = jax.random.normal(k_s, (num_nodes, output_size), jnp.float32)
    adj = (jax.random.uniform(k_a, (num_nodes, num_nodes)) < 0.25).astype(jnp.float32)
    adj = jnp.maximum(adj, jnp.eye(num_nodes, dtype=jnp.float32))  # every row attends somewhere

    wn_stack, wm_stack, vec_stack = make_processor_params(
        k_p, output_size, message_passing_steps)

    graph = MultiGraph(node, recv, send, adj)
    out = processor_forward(graph, wn_stack, wm_stack, vec_stack, num_heads)
    jax.block_until_ready(out.node_features)
    jax.block_until_ready(out.reciever_features)
    jax.block_until_ready(out.sender_features)

    ref_n, ref_r, ref_s = processor_reference(
        node, recv, send, adj, wn_stack, wm_stack, vec_stack, num_heads)

    assert jnp.allclose(out.node_features, ref_n, atol=2e-3, rtol=2e-3)
    assert jnp.allclose(out.reciever_features, ref_r, atol=2e-3, rtol=2e-3)
    assert jnp.allclose(out.sender_features, ref_s, atol=2e-3, rtol=2e-3)

    print("KERNEL_OK")
</pallas_src>

<mosaic_0001>
module attributes {stable_mosaic.version = 11 : i64} {
  func.func @_processor_kernel(%arg0: i32, %arg1: memref<128x128xf32, #tpu.memory_space<vmem>>, %arg2: memref<256x128xf32, #tpu.memory_space<vmem>>, %arg3: memref<128x128xf32, #tpu.memory_space<vmem>>, %arg4: memref<1x128x384xbf16, #tpu.memory_space<vmem>>, %arg5: memref<1x128x128xbf16, #tpu.memory_space<vmem>>, %arg6: memref<1x8x128xf32, #tpu.memory_space<vmem>>, %arg7: memref<128x128xf32, #tpu.memory_space<vmem>>, %arg8: memref<256x128xf32, #tpu.memory_space<vmem>>, %arg9: memref<128x128xf32, #tpu.memory_space<vmem>>, %arg10: memref<256x128xf32, #tpu.memory_space<vmem>>) attributes {dimension_semantics = [#tpu.dimension_semantics<arbitrary>], iteration_bounds = array<i64: 2>, scalar_prefetch = 0 : i64, scratch_operands = 2 : i64, tpu.core_type = #tpu.core_type<tc>, window_params = [{pipeline_mode = #tpu.pipeline_mode<synchronous>, transform_indices = @transform_0, window_bounds = array<i64: 128, 128>}, {pipeline_mode = #tpu.pipeline_mode<synchronous>, transform_indices = @transform_1, window_bounds = array<i64: 256, 128>}, {pipeline_mode = #tpu.pipeline_mode<synchronous>, transform_indices = @transform_2, window_bounds = array<i64: 128, 128>}, {transform_indices = @transform_3, window_bounds = array<i64: 1, 128, 384>}, {transform_indices = @transform_4, window_bounds = array<i64: 1, 128, 128>}, {transform_indices = @transform_5, window_bounds = array<i64: 1, 8, 128>}, {pipeline_mode = #tpu.pipeline_mode<synchronous>, transform_indices = @transform_6, window_bounds = array<i64: 128, 128>}, {pipeline_mode = #tpu.pipeline_mode<synchronous>, transform_indices = @transform_7, window_bounds = array<i64: 256, 128>}]} {
    %c0_i32 = arith.constant 0 : i32
    %0 = arith.cmpi eq, %arg0, %c0_i32 : i32
    %1 = arith.extui %0 : i1 to i32
    %c0_i32_0 = arith.constant 0 : i32
    %2 = arith.cmpi ne, %1, %c0_i32_0 : i32
    scf.if %2 {
      %c0_74 = arith.constant 0 : index
      %c0_75 = arith.constant 0 : index
      %231 = vector.load %arg1[%c0_74, %c0_75] : memref<128x128xf32, #tpu.memory_space<vmem>>, vector<128x128xf32>
      %c0_76 = arith.constant 0 : index
      %c0_77 = arith.constant 0 : index
      %232 = vector.load %arg9[%c0_76, %c0_77] : memref<128x128xf32, #tpu.memory_space<vmem>>, vector<128x128xf32>
      tpu.vector_store %arg9[%c0_76, %c0_77], %231 {strides = array<i32>} : memref<128x128xf32, #tpu.memory_space<vmem>>, vector<128x128xf32>,
      %c0_78 = arith.constant 0 : index
      %c0_79 = arith.constant 0 : index
      %233 = vector.load %arg2[%c0_78, %c0_79] : memref<256x128xf32, #tpu.memory_space<vmem>>, vector<256x128xf32>
      %c0_80 = arith.constant 0 : index
      %c0_81 = arith.constant 0 : index
      %234 = vector.load %arg10[%c0_80, %c0_81] : memref<256x128xf32, #tpu.memory_space<vmem>>, vector<256x128xf32>
      tpu.vector_store %arg10[%c0_80, %c0_81], %233 {strides = array<i32>} : memref<256x128xf32, #tpu.memory_space<vmem>>, vector<256x128xf32>,
    } else {
    }
    %c0 = arith.constant 0 : index
    %c0_1 = arith.constant 0 : index
    %3 = vector.load %arg9[%c0, %c0_1] : memref<128x128xf32, #tpu.memory_space<vmem>>, vector<128x128xf32>
    %c0_2 = arith.constant 0 : index
    %c0_3 = arith.constant 0 : index
    %4 = vector.load %arg10[%c0_2, %c0_3] : memref<256x128xf32, #tpu.memory_space<vmem>>, vector<256x128xf32>
    %c0_4 = arith.constant 0 : index
    %c0_5 = arith.constant 0 : index
    %5 = vector.load %arg3[%c0_4, %c0_5] : memref<128x128xf32, #tpu.memory_space<vmem>>, vector<128x128xf32>
    %c0_6 = arith.constant 0 : index
    %c0_7 = arith.constant 0 : index
    %c0_8 = arith.constant 0 : index
    %6 = vector.load %arg4[%c0_6, %c0_7, %c0_8] : memref<1x128x384xbf16, #tpu.memory_space<vmem>>, vector<1x128x384xbf16>
    %7 = vector.shape_cast %6 : vector<1x128x384xbf16> to vector<128x384xbf16>
    %c0_9 = arith.constant 0 : index
    %c0_10 = arith.constant 0 : index
    %c0_11 = arith.constant 0 : index
    %8 = vector.load %arg5[%c0_9, %c0_10, %c0_11] : memref<1x128x128xbf16, #tpu.memory_space<vmem>>, vector<1x128x128xbf16>
    %9 = vector.shape_cast %8 : vector<1x128x128xbf16> to vector<128x128xbf16>
    %c0_12 = arith.constant 0 : index
    %c0_13 = arith.constant 0 : index
    %c0_14 = arith.constant 0 : index
    %10 = vector.load %arg6[%c0_12, %c0_13, %c0_14] : memref<1x8x128xf32, #tpu.memory_space<vmem>>, vector<1x8x128xf32>
    %11 = vector.shape_cast %10 : vector<1x8x128xf32> to vector<8x128xf32>
    %12 = vector.extract_strided_slice %4 {offsets = [0, 0], sizes = [128, 128], strides = [1, 1]} : vector<256x128xf32> to vector<128x128xf32>
    %13 = vector.extract_strided_slice %4 {offsets = [128, 0], sizes = [128, 128], strides = [1, 1]} : vector<256x128xf32> to vector<128x128xf32>
    %14 = vector.extract_strided_slice %11 {offsets = [0, 0], sizes = [1, 128], strides = [1, 1]} : vector<8x128xf32> to vector<1x128xf32>
    %15 = vector.extract_strided_slice %11 {offsets = [1, 0], sizes = [1, 128], strides = [1, 1]} : vector<8x128xf32> to vector<1x128xf32>
    %16 = vector.extract_strided_slice %11 {offsets = [2, 0], sizes = [1, 128], strides = [1, 1]} : vector<8x128xf32> to vector<1x128xf32>
    %17 = vector.extract_strided_slice %11 {offsets = [3, 0], sizes = [1, 128], strides = [1, 1]} : vector<8x128xf32> to vector<1x128xf32>
    %18 = vector.extract_strided_slice %11 {offsets = [4, 0], sizes = [1, 128], strides = [1, 1]} : vector<8x128xf32> to vector<1x128xf32>
    %19 = vector.extract_strided_slice %11 {offsets = [5, 0], sizes = [1, 128], strides = [1, 1]} : vector<8x128xf32> to vector<1x128xf32>
    %20 = vector.extract_strided_slice %11 {offsets = [6, 0], sizes = [1, 128], strides = [1, 1]} : vector<8x128xf32> to vector<1x128xf32>
    %21 = vector.extract_strided_slice %11 {offsets = [7, 0], sizes = [1, 128], strides = [1, 1]} : vector<8x128xf32> to vector<1x128xf32>
    %22 = arith.truncf %3 : vector<128x128xf32> to vector<128x128xbf16>
    %cst = arith.constant dense<0.000000e+00> : vector<128x384xf32>
    %23 = tpu.matmul %22, %7, %cst {dimension_numbers = #tpu.dot_dimension_numbers<[1], [0], [0], [1], [0, 0, 1, 1], [], []>} : vector<128x128xbf16>, vector<128x384xbf16>, vector<128x384xf32> -> vector<128x384xf32>
    %24 = arith.truncf %4 : vector<256x128xf32> to vector<256x128xbf16>
    %cst_15 = arith.constant dense<0.000000e+00> : vector<256x128xf32>
    %25 = tpu.matmul %24, %9, %cst_15 {dimension_numbers = #tpu.dot_dimension_numbers<[1], [0], [0], [1], [0, 0, 1, 1], [], []>} : vector<256x128xbf16>, vector<128x128xbf16>, vector<256x128xf32> -> vector<256x128xf32>
    %26 = vector.extract_strided_slice %23 {offsets = [0, 0], sizes = [128, 128], strides = [1, 1]} : vector<128x384xf32> to vector<128x128xf32>
    %27 = vector.extract_strided_slice %25 {offsets = [0, 0], sizes = [128, 128], strides = [1, 1]} : vector<256x128xf32> to vector<128x128xf32>
    %28 = arith.addf %26, %27 : vector<128x128xf32>
    %29 = vector.broadcast %14 : vector<1x128xf32> to vector<128x128xf32>
    %30 = arith.addf %28, %29 : vector<128x128xf32>
    %31 = vector.extract_strided_slice %23 {offsets = [0, 128], sizes = [128, 128], strides = [1, 1]} : vector<128x384xf32> to vector<128x128xf32>
    %32 = vector.extract_strided_slice %25 {offsets = [128, 0], sizes = [128, 128], strides = [1, 1]} : vector<256x128xf32> to vector<128x128xf32>
    %33 = arith.addf %31, %32 : vector<128x128xf32>
    %34 = vector.broadcast %15 : vector<1x128xf32> to vector<128x128xf32>
    %35 = arith.addf %33, %34 : vector<128x128xf32>
    %cst_16 = arith.constant 0.000000e+00 : f32
    %36 = vector.broadcast %cst_16 : f32 to vector<128x128xf32>
    %37 = arith.cmpf oge, %30, %36 : vector<128x128xf32>
    %cst_17 = arith.constant 2.000000e-01 : f32
    %38 = vector.broadcast %cst_17 : f32 to vector<128x128xf32>
    %39 = arith.mulf %38, %30 : vector<128x128xf32>
    %40 = arith.select %37, %30, %39 : vector<128x128xi1>, vector<128x128xf32>
    %cst_18 = arith.constant dense<0.000000e+00> : vector<128xf32>
    %41 = vector.multi_reduction <add>, %40, %cst_18 [1] : vector<128x128xf32> to vector<128xf32>
    %42 = vector.shape_cast %41 : vector<128xf32> to vector<128x1xf32>
    %cst_19 = arith.constant 1.280000e+02 : f32
    %43 = vector.broadcast %cst_19 : f32 to vector<128x1xf32>
    %44 = arith.divf %42, %43 : vector<128x1xf32>
    %45 = vector.broadcast %44 : vector<128x1xf32> to vector<128x128xf32>
    %46 = arith.subf %40, %45 : vector<128x128xf32>
    %47 = arith.mulf %46, %46 : vector<128x128xf32>
    %cst_20 = arith.constant dense<0.000000e+00> : vector<128xf32>
    %48 = vector.multi_reduction <add>, %47, %cst_20 [1] : vector<128x128xf32> to vector<128xf32>
    %49 = vector.shape_cast %48 : vector<128xf32> to vector<128x1xf32>
    %cst_21 = arith.constant 1.280000e+02 : f32
    %50 = vector.broadcast %cst_21 : f32 to vector<128x1xf32>
    %51 = arith.divf %49, %50 : vector<128x1xf32>
    %cst_22 = arith.constant 9.99999974E-6 : f32
    %52 = vector.broadcast %cst_22 : f32 to vector<128x1xf32>
    %53 = arith.addf %51, %52 : vector<128x1xf32>
    %54 = math.rsqrt %53 : vector<128x1xf32>
    %55 = vector.broadcast %54 : vector<128x1xf32> to vector<128x128xf32>
    %56 = arith.mulf %46, %55 : vector<128x128xf32>
    %57 = vector.broadcast %16 : vector<1x128xf32> to vector<128x128xf32>
    %58 = arith.mulf %56, %57 : vector<128x128xf32>
    %59 = vector.broadcast %17 : vector<1x128xf32> to vector<128x128xf32>
    %60 = arith.addf %58, %59 : vector<128x128xf32>
    %61 = arith.addf %60, %12 : vector<128x128xf32>
    %cst_23 = arith.constant 0.000000e+00 : f32
    %62 = vector.broadcast %cst_23 : f32 to vector<128x128xf32>
    %63 = arith.cmpf oge, %35, %62 : vector<128x128xf32>
    %cst_24 = arith.constant 2.000000e-01 : f32
    %64 = vector.broadcast %cst_24 : f32 to vector<128x128xf32>
    %65 = arith.mulf %64, %35 : vector<128x128xf32>
    %66 = arith.select %63, %35, %65 : vector<128x128xi1>, vector<128x128xf32>
    %cst_25 = arith.constant dense<0.000000e+00> : vector<128xf32>
    %67 = vector.multi_reduction <add>, %66, %cst_25 [1] : vector<128x128xf32> to vector<128xf32>
    %68 = vector.shape_cast %67 : vector<128xf32> to vector<128x1xf32>
    %cst_26 = arith.constant 1.280000e+02 : f32
    %69 = vector.broadcast %cst_26 : f32 to vector<128x1xf32>
    %70 = arith.divf %68, %69 : vector<128x1xf32>
    %71 = vector.broadcast %70 : vector<128x1xf32> to vector<128x128xf32>
    %72 = arith.subf %66, %71 : vector<128x128xf32>
    %73 = arith.mulf %72, %72 : vector<128x128xf32>
    %cst_27 = arith.constant dense<0.000000e+00> : vector<128xf32>
    %74 = vector.multi_reduction <add>, %73, %cst_27 [1] : vector<128x128xf32> to vector<128xf32>
    %75 = vector.shape_cast %74 : vector<128xf32> to vector<128x1xf32>
    %cst_28 = arith.constant 1.280000e+02 : f32
    %76 = vector.broadcast %cst_28 : f32 to vector<128x1xf32>
    %77 = arith.divf %75, %76 : vector<128x1xf32>
    %cst_29 = arith.constant 9.99999974E-6 : f32
    %78 = vector.broadcast %cst_29 : f32 to vector<128x1xf32>
    %79 = arith.addf %77, %78 : vector<128x1xf32>
    %80 = math.rsqrt %79 : vector<128x1xf32>
    %81 = vector.broadcast %80 : vector<128x1xf32> to vector<128x128xf32>
    %82 = arith.mulf %72, %81 : vector<128x128xf32>
    %83 = vector.broadcast %18 : vector<1x128xf32> to vector<128x128xf32>
    %84 = arith.mulf %82, %83 : vector<128x128xf32>
    %85 = vector.broadcast %19 : vector<1x128xf32> to vector<128x128xf32>
    %86 = arith.addf %84, %85 : vector<128x128xf32>
    %87 = arith.addf %86, %13 : vector<128x128xf32>
    %88 = vector.extract_strided_slice %23 {offsets = [0, 256], sizes = [128, 128], strides = [1, 1]} : vector<128x384xf32> to vector<128x128xf32>
    %89 = arith.truncf %88 : vector<128x128xf32> to vector<128x128xbf16>
    %90 = arith.truncf %13 : vector<128x128xf32> to vector<128x128xbf16>
    %91 = arith.mulf %88, %12 : vector<128x128xf32>
    %cst_30 = arith.constant 0.000000e+00 : f32
    %92 = vector.broadcast %cst_30 : f32 to vector<128x128xf32>
    %93 = arith.cmpf oeq, %5, %92 : vector<128x128xf32>
    %cst_31 = arith.constant -1.000000e+30 : f32
    %cst_32 = arith.constant 0.000000e+00 : f32
    %94 = vector.broadcast %cst_31 : f32 to vector<128x128xf32>
    %95 = vector.broadcast %cst_32 : f32 to vector<128x128xf32>
    %96 = arith.select %93, %94, %95 : vector<128x128xi1>, vector<128x128xf32>
    %97 = vector.extract_strided_slice %91 {offsets = [0, 0], sizes = [128, 32], strides = [1, 1]} : vector<128x128xf32> to vector<128x32xf32>
    %cst_33 = arith.constant dense<0.000000e+00> : vector<128xf32>
    %98 = vector.multi_reduction <add>, %97, %cst_33 [1] : vector<128x32xf32> to vector<128xf32>
    %99 = vector.shape_cast %98 : vector<128xf32> to vector<128x1xf32>
    %100 = vector.extract_strided_slice %89 {offsets = [0, 0], sizes = [128, 32], strides = [1, 1]} : vector<128x128xbf16> to vector<128x32xbf16>
    %101 = vector.extract_strided_slice %90 {offsets = [0, 0], sizes = [128, 32], strides = [1, 1]} : vector<128x128xbf16> to vector<128x32xbf16>
    %cst_34 = arith.constant dense<0.000000e+00> : vector<128x128xf32>
    %102 = tpu.matmul %100, %101, %cst_34 {dimension_numbers = #tpu.dot_dimension_numbers<[1], [1], [0], [0], [0, 0, 1, 0], [], []>} : vector<128x32xbf16>, vector<128x32xbf16>, vector<128x128xf32> -> vector<128x128xf32>
    %103 = vector.broadcast %99 : vector<128x1xf32> to vector<128x128xf32>
    %104 = arith.addf %103, %102 : vector<128x128xf32>
    %105 = arith.addf %104, %96 : vector<128x128xf32>
    %cst_35 = arith.constant 0.176776692 : f32
    %106 = vector.broadcast %cst_35 : f32 to vector<128x128xf32>
    %107 = arith.mulf %105, %106 : vector<128x128xf32>
    %cst_36 = arith.constant dense<0xFF800000> : vector<128xf32>
    %108 = vector.multi_reduction <maximumf>, %107, %cst_36 [1] : vector<128x128xf32> to vector<128xf32>
    %109 = vector.shape_cast %108 : vector<128xf32> to vector<128x1xf32>
    %110 = vector.broadcast %109 : vector<128x1xf32> to vector<128x128xf32>
    %111 = arith.subf %107, %110 : vector<128x128xf32>
    %112 = math.exp %111 : vector<128x128xf32>
    %cst_37 = arith.constant dense<0.000000e+00> : vector<128xf32>
    %113 = vector.multi_reduction <add>, %112, %cst_37 [1] : vector<128x128xf32> to vector<128xf32>
    %114 = vector.shape_cast %113 : vector<128xf32> to vector<128x1xf32>
    %cst_38 = arith.constant 1.000000e+00 : f32
    %115 = vector.broadcast %cst_38 : f32 to vector<128x1xf32>
    %116 = arith.divf %115, %114 : vector<128x1xf32>
    %117 = arith.truncf %112 : vector<128x128xf32> to vector<128x128xbf16>
    %118 = vector.extract_strided_slice %90 {offsets = [0, 0], sizes = [128, 32], strides = [1, 1]} : vector<128x128xbf16> to vector<128x32xbf16>
    %cst_39 = arith.constant dense<0.000000e+00> : vector<128x32xf32>
    %119 = tpu.matmul %117, %118, %cst_39 {dimension_numbers = #tpu.dot_dimension_numbers<[1], [0], [0], [1], [0, 0, 1, 1], [], []>} : vector<128x128xbf16>, vector<128x32xbf16>, vector<128x32xf32> -> vector<128x32xf32>
    %120 = vector.broadcast %116 : vector<128x1xf32> to vector<128x32xf32>
    %121 = arith.mulf %119, %120 : vector<128x32xf32>
    %122 = vector.extract_strided_slice %91 {offsets = [0, 32], sizes = [128, 32], strides = [1, 1]} : vector<128x128xf32> to vector<128x32xf32>
    %cst_40 = arith.constant dense<0.000000e+00> : vector<128xf32>
    %123 = vector.multi_reduction <add>, %122, %cst_40 [1] : vector<128x32xf32> to vector<128xf32>
    %124 = vector.shape_cast %123 : vector<128xf32> to vector<128x1xf32>
    %125 = vector.extract_strided_slice %89 {offsets = [0, 32], sizes = [128, 32], strides = [1, 1]} : vector<128x128xbf16> to vector<128x32xbf16>
    %126 = vector.extract_strided_slice %90 {offsets = [0, 32], sizes = [128, 32], strides = [1, 1]} : vector<128x128xbf16> to vector<128x32xbf16>
    %cst_41 = arith.constant dense<0.000000e+00> : vector<128x128xf32>
    %127 = tpu.matmul %125, %126, %cst_41 {dimension_numbers = #tpu.dot_dimension_numbers<[1], [1], [0], [0], [0, 0, 1, 0], [], []>} : vector<128x32xbf16>, vector<128x32xbf16>, vector<128x128xf32> -> vector<128x128xf32>
    %128 = vector.broadcast %124 : vector<128x1xf32> to vector<128x128xf32>
    %129 = arith.addf %128, %127 : vector<128x128xf32>
    %130 = arith.addf %129, %96 : vector<128x128xf32>
    %cst_42 = arith.constant 0.176776692 : f32
    %131 = vector.broadcast %cst_42 : f32 to vector<128x128xf32>
    %132 = arith.mulf %130, %131 : vector<128x128xf32>
    %cst_43 = arith.constant dense<0xFF800000> : vector<128xf32>
    %133 = vector.multi_reduction <maximumf>, %132, %cst_43 [1] : vector<128x128xf32> to vector<128xf32>
    %134 = vector.shape_cast %133 : vector<128xf32> to vector<128x1xf32>
    %135 = vector.broadcast %134 : vector<128x1xf32> to vector<128x128xf32>
    %136 = arith.subf %132, %135 : vector<128x128xf32>
    %137 = math.exp %136 : vector<128x128xf32>
    %cst_44 = arith.constant dense<0.000000e+00> : vector<128xf32>
    %138 = vector.multi_reduction <add>, %137, %cst_44 [1] : vector<128x128xf32> to vector<128xf32>
    %139 = vector.shape_cast %138 : vector<128xf32> to vector<128x1xf32>
    %cst_45 = arith.constant 1.000000e+00 : f32
    %140 = vector.broadcast %cst_45 : f32 to vector<128x1xf32>
    %141 = arith.divf %140, %139 : vector<128x1xf32>
    %142 = arith.truncf %137 : vector<128x128xf32> to vector<128x128xbf16>
    %143 = vector.extract_strided_slice %90 {offsets = [0, 32], sizes = [128, 32], strides = [1, 1]} : vector<128x128xbf16> to vector<128x32xbf16>
    %cst_46 = arith.constant dense<0.000000e+00> : vector<128x32xf32>
    %144 = tpu.matmul %142, %143, %cst_46 {dimension_numbers = #tpu.dot_dimension_numbers<[1], [0], [0], [1], [0, 0, 1, 1], [], []>} : vector<128x128xbf16>, vector<128x32xbf16>, vector<128x32xf32> -> vector<128x32xf32>
    %145 = vector.broadcast %141 : vector<128x1xf32> to vector<128x32xf32>
    %146 = arith.mulf %144, %145 : vector<128x32xf32>
    %147 = vector.extract_strided_slice %91 {offsets = [0, 64], sizes = [128, 32], strides = [1, 1]} : vector<128x128xf32> to vector<128x32xf32>
    %cst_47 = arith.constant dense<0.000000e+00> : vector<128xf32>
    %148 = vector.multi_reduction <add>, %147, %cst_47 [1] : vector<128x32xf32> to vector<128xf32>
    %149 = vector.shape_cast %148 : vector<128xf32> to vector<128x1xf32>
    %150 = vector.extract_strided_slice %89 {offsets = [0, 64], sizes = [128, 32], strides = [1, 1]} : vector<128x128xbf16> to vector<128x32xbf16>
    %151 = vector.extract_strided_slice %90 {offsets = [0, 64], sizes = [128, 32], strides = [1, 1]} : vector<128x128xbf16> to vector<128x32xbf16>
    %cst_48 = arith.constant dense<0.000000e+00> : vector<128x128xf32>
    %152 = tpu.matmul %150, %151, %cst_48 {dimension_numbers = #tpu.dot_dimension_numbers<[1], [1], [0], [0], [0, 0, 1, 0], [], []>} : vector<128x32xbf16>, vector<128x32xbf16>, vector<128x128xf32> -> vector<128x128xf32>
    %153 = vector.broadcast %149 : vector<128x1xf32> to vector<128x128xf32>
    %154 = arith.addf %153, %152 : vector<128x128xf32>
    %155 = arith.addf %154, %96 : vector<128x128xf32>
    %cst_49 = arith.constant 0.176776692 : f32
    %156 = vector.broadcast %cst_49 : f32 to vector<128x128xf32>
    %157 = arith.mulf %155, %156 : vector<128x128xf32>
    %cst_50 = arith.constant dense<0xFF800000> : vector<128xf32>
    %158 = vector.multi_reduction <maximumf>, %157, %cst_50 [1] : vector<128x128xf32> to vector<128xf32>
    %159 = vector.shape_cast %158 : vector<128xf32> to vector<128x1xf32>
    %160 = vector.broadcast %159 : vector<128x1xf32> to vector<128x128xf32>
    %161 = arith.subf %157, %160 : vector<128x128xf32>
    %162 = math.exp %161 : vector<128x128xf32>
    %cst_51 = arith.constant dense<0.000000e+00> : vector<128xf32>
    %163 = vector.multi_reduction <add>, %162, %cst_51 [1] : vector<128x128xf32> to vector<128xf32>
    %164 = vector.shape_cast %163 : vector<128xf32> to vector<128x1xf32>
    %cst_52 = arith.constant 1.000000e+00 : f32
    %165 = vector.broadcast %cst_52 : f32 to vector<128x1xf32>
    %166 = arith.divf %165, %164 : vector<128x1xf32>
    %167 = arith.truncf %162 : vector<128x128xf32> to vector<128x128xbf16>
    %168 = vector.extract_strided_slice %90 {offsets = [0, 64], sizes = [128, 32], strides = [1, 1]} : vector<128x128xbf16> to vector<128x32xbf16>
    %cst_53 = arith.constant dense<0.000000e+00> : vector<128x32xf32>
    %169 = tpu.matmul %167, %168, %cst_53 {dimension_numbers = #tpu.dot_dimension_numbers<[1], [0], [0], [1], [0, 0, 1, 1], [], []>} : vector<128x128xbf16>, vector<128x32xbf16>, vector<128x32xf32> -> vector<128x32xf32>
    %170 = vector.broadcast %166 : vector<128x1xf32> to vector<128x32xf32>
    %171 = arith.mulf %169, %170 : vector<128x32xf32>
    %172 = vector.extract_strided_slice %91 {offsets = [0, 96], sizes = [128, 32], strides = [1, 1]} : vector<128x128xf32> to vector<128x32xf32>
    %cst_54 = arith.constant dense<0.000000e+00> : vector<128xf32>
    %173 = vector.multi_reduction <add>, %172, %cst_54 [1] : vector<128x32xf32> to vector<128xf32>
    %174 = vector.shape_cast %173 : vector<128xf32> to vector<128x1xf32>
    %175 = vector.extract_strided_slice %89 {offsets = [0, 96], sizes = [128, 32], strides = [1, 1]} : vector<128x128xbf16> to vector<128x32xbf16>
    %176 = vector.extract_strided_slice %90 {offsets = [0, 96], sizes = [128, 32], strides = [1, 1]} : vector<128x128xbf16> to vector<128x32xbf16>
    %cst_55 = arith.constant dense<0.000000e+00> : vector<128x128xf32>
    %177 = tpu.matmul %175, %176, %cst_55 {dimension_numbers = #tpu.dot_dimension_numbers<[1], [1], [0], [0], [0, 0, 1, 0], [], []>} : vector<128x32xbf16>, vector<128x32xbf16>, vector<128x128xf32> -> vector<128x128xf32>
    %178 = vector.broadcast %174 : vector<128x1xf32> to vector<128x128xf32>
    %179 = arith.addf %178, %177 : vector<128x128xf32>
    %180 = arith.addf %179, %96 : vector<128x128xf32>
    %cst_56 = arith.constant 0.176776692 : f32
    %181 = vector.broadcast %cst_56 : f32 to vector<128x128xf32>
    %182 = arith.mulf %180, %181 : vector<128x128xf32>
    %cst_57 = arith.constant dense<0xFF800000> : vector<128xf32>
    %183 = vector.multi_reduction <maximumf>, %182, %cst_57 [1] : vector<128x128xf32> to vector<128xf32>
    %184 = vector.shape_cast %183 : vector<128xf32> to vector<128x1xf32>
    %185 = vector.broadcast %184 : vector<128x1xf32> to vector<128x128xf32>
    %186 = arith.subf %182, %185 : vector<128x128xf32>
    %187 = math.exp %186 : vector<128x128xf32>
    %cst_58 = arith.constant dense<0.000000e+00> : vector<128xf32>
    %188 = vector.multi_reduction <add>, %187, %cst_58 [1] : vector<128x128xf32> to vector<128xf32>
    %189 = vector.shape_cast %188 : vector<128xf32> to vector<128x1xf32>
    %cst_59 = arith.constant 1.000000e+00 : f32
    %190 = vector.broadcast %cst_59 : f32 to vector<128x1xf32>
    %191 = arith.divf %190, %189 : vector<128x1xf32>
    %192 = arith.truncf %187 : vector<128x128xf32> to vector<128x128xbf16>
    %193 = vector.extract_strided_slice %90 {offsets = [0, 96], sizes = [128, 32], strides = [1, 1]} : vector<128x128xbf16> to vector<128x32xbf16>
    %cst_60 = arith.constant dense<0.000000e+00> : vector<128x32xf32>
    %194 = tpu.matmul %192, %193, %cst_60 {dimension_numbers = #tpu.dot_dimension_numbers<[1], [0], [0], [1], [0, 0, 1, 1], [], []>} : vector<128x128xbf16>, vector<128x32xbf16>, vector<128x32xf32> -> vector<128x32xf32>
    %195 = vector.broadcast %191 : vector<128x1xf32> to vector<128x32xf32>
    %196 = arith.mulf %194, %195 : vector<128x32xf32>
    %197 = tpu.concatenate %121, %146, %171, %196 in 1 : vector<128x32xf32>, vector<128x32xf32>, vector<128x32xf32>, vector<128x32xf32> -> vector<128x128xf32>
    %198 = arith.addf %12, %197 : vector<128x128xf32>
    %cst_61 = arith.constant 0.000000e+00 : f32
    %199 = vector.broadcast %cst_61 : f32 to vector<128x128xf32>
    %200 = arith.cmpf oge, %198, %199 : vector<128x128xf32>
    %cst_62 = arith.constant 2.000000e-01 : f32
    %201 = vector.broadcast %cst_62 : f32 to vector<128x128xf32>
    %202 = arith.mulf %201, %198 : vector<128x128xf32>
    %203 = arith.select %200, %198, %202 : vector<128x128xi1>, vector<128x128xf32>
    %cst_63 = arith.constant dense<0.000000e+00> : vector<128xf32>
    %204 = vector.multi_reduction <add>, %203, %cst_63 [1] : vector<128x128xf32> to vector<128xf32>
    %205 = vector.shape_cast %204 : vector<128xf32> to vector<128x1xf32>
    %cst_64 = arith.constant 1.280000e+02 : f32
    %206 = vector.broadcast %cst_64 : f32 to vector<128x1xf32>
    %207 = arith.divf %205, %206 : vector<128x1xf32>
    %208 = vector.broadcast %207 : vector<128x1xf32> to vector<128x128xf32>
    %209 = arith.subf %203, %208 : vector<128x128xf32>
    %210 = arith.mulf %209, %209 : vector<128x128xf32>
    %cst_65 = arith.constant dense<0.000000e+00> : vector<128xf32>
    %211 = vector.multi_reduction <add>, %210, %cst_65 [1] : vector<128x128xf32> to vector<128xf32>
    %212 = vector.shape_cast %211 : vector<128xf32> to vector<128x1xf32>
    %cst_66 = arith.constant 1.280000e+02 : f32
    %213 = vector.broadcast %cst_66 : f32 to vector<128x1xf32>
    %214 = arith.divf %212, %213 : vector<128x1xf32>
    %cst_67 = arith.constant 9.99999974E-6 : f32
    %215 = vector.broadcast %cst_67 : f32 to vector<128x1xf32>
    %216 = arith.addf %214, %215 : vector<128x1xf32>
    %217 = math.rsqrt %216 : vector<128x1xf32>
    %218 = vector.broadcast %217 : vector<128x1xf32> to vector<128x128xf32>
    %219 = arith.mulf %209, %218 : vector<128x128xf32>
    %220 = vector.broadcast %20 : vector<1x128xf32> to vector<128x128xf32>
    %221 = arith.mulf %219, %220 : vector<128x128xf32>
    %222 = vector.broadcast %21 : vector<1x128xf32> to vector<128x128xf32>
    %223 = arith.addf %221, %222 : vector<128x128xf32>
    %224 = arith.addf %223, %3 : vector<128x128xf32>
    %c0_68 = arith.constant 0 : index
    %c0_69 = arith.constant 0 : index
    %225 = vector.load %arg9[%c0_68, %c0_69] : memref<128x128xf32, #tpu.memory_space<vmem>>, vector<128x128xf32>
    tpu.vector_store %arg9[%c0_68, %c0_69], %224 {strides = array<i32>} : memref<128x128xf32, #tpu.memory_space<vmem>>, vector<128x128xf32>,
    %c0_70 = arith.constant 0 : index
    %c0_71 = arith.constant 0 : index
    %226 = vector.load %arg10[%c0_70, %c0_71] : memref<256x128xf32, #tpu.memory_space<vmem>>, vector<128x128xf32>
    tpu.vector_store %arg10[%c0_70, %c0_71], %61 {strides = array<i32>} : memref<256x128xf32, #tpu.memory_space<vmem>>, vector<128x128xf32>,
    %c128 = arith.constant 128 : index
    %c0_72 = arith.constant 0 : index
    %227 = vector.load %arg10[%c128, %c0_72] : memref<256x128xf32, #tpu.memory_space<vmem>>, vector<128x128xf32>
    tpu.vector_store %arg10[%c128, %c0_72], %87 {strides = array<i32>} : memref<256x128xf32, #tpu.memory_space<vmem>>, vector<128x128xf32>,
    %c1_i32 = arith.constant 1 : i32
    %228 = arith.cmpi eq, %arg0, %c1_i32 : i32
    %229 = arith.extui %228 : i1 to i32
    %c0_i32_73 = arith.constant 0 : i32
    %230 = arith.cmpi ne, %229, %c0_i32_73 : i32
    scf.if %230 {
      %c0_74 = arith.constant 0 : index
      %c0_75 = arith.constant 0 : index
      %231 = vector.load %arg7[%c0_74, %c0_75] : memref<128x128xf32, #tpu.memory_space<vmem>>, vector<128x128xf32>
      tpu.vector_store %arg7[%c0_74, %c0_75], %224 {strides = array<i32>} : memref<128x128xf32, #tpu.memory_space<vmem>>, vector<128x128xf32>,
      %c0_76 = arith.constant 0 : index
      %c0_77 = arith.constant 0 : index
      %232 = vector.load %arg8[%c0_76, %c0_77] : memref<256x128xf32, #tpu.memory_space<vmem>>, vector<128x128xf32>
      tpu.vector_store %arg8[%c0_76, %c0_77], %61 {strides = array<i32>} : memref<256x128xf32, #tpu.memory_space<vmem>>, vector<128x128xf32>,
      %c128_78 = arith.constant 128 : index
      %c0_79 = arith.constant 0 : index
      %233 = vector.load %arg8[%c128_78, %c0_79] : memref<256x128xf32, #tpu.memory_space<vmem>>, vector<128x128xf32>
      tpu.vector_store %arg8[%c128_78, %c0_79], %87 {strides = array<i32>} : memref<256x128xf32, #tpu.memory_space<vmem>>, vector<128x128xf32>,
    } else {
    }
    return
  }
  func.func @transform_0(%arg0: i32) -> (i32, i32) {
    %c0_i32 = arith.constant 0 : i32
    %c0_i32_0 = arith.constant 0 : i32
    %c0_i32_1 = arith.constant 0 : i32
    return %c0_i32, %c0_i32_0 : i32, i32
  }
  func.func @transform_1(%arg0: i32) -> (i32, i32) {
    %c0_i32 = arith.constant 0 : i32
    %c0_i32_0 = arith.constant 0 : i32
    %c0_i32_1 = arith.constant 0 : i32
    return %c0_i32, %c0_i32_0 : i32, i32
  }
  func.func @transform_2(%arg0: i32) -> (i32, i32) {
    %c0_i32 = arith.constant 0 : i32
    %c0_i32_0 = arith.constant 0 : i32
    %c0_i32_1 = arith.constant 0 : i32
    return %c0_i32, %c0_i32_0 : i32, i32
  }
  func.func @transform_3(%arg0: i32) -> (i32, i32, i32) {
    %c0_i32 = arith.constant 0 : i32
    %c0_i32_0 = arith.constant 0 : i32
    %c0_i32_1 = arith.constant 0 : i32
    return %arg0, %c0_i32, %c0_i32_0 : i32, i32, i32
  }
  func.func @transform_4(%arg0: i32) -> (i32, i32, i32) {
    %c0_i32 = arith.constant 0 : i32
    %c0_i32_0 = arith.constant 0 : i32
    %c0_i32_1 = arith.constant 0 : i32
    return %arg0, %c0_i32, %c0_i32_0 : i32, i32, i32
  }
  func.func @transform_5(%arg0: i32) -> (i32, i32, i32) {
    %c0_i32 = arith.constant 0 : i32
    %c0_i32_0 = arith.constant 0 : i32
    %c0_i32_1 = arith.constant 0 : i32
    return %arg0, %c0_i32, %c0_i32_0 : i32, i32, i32
  }
  func.func @transform_6(%arg0: i32) -> (i32, i32) {
    %c0_i32 = arith.constant 0 : i32
    %c0_i32_0 = arith.constant 0 : i32
    %c0_i32_1 = arith.constant 0 : i32
    return %c0_i32, %c0_i32_0 : i32, i32
  }
  func.func @transform_7(%arg0: i32) -> (i32, i32) {
    %c0_i32 = arith.constant 0 : i32
    %c0_i32_0 = arith.constant 0 : i32
    %c0_i32_1 = arith.constant 0 : i32
    return %c0_i32, %c0_i32_0 : i32, i32
  }
}

</mosaic_0001>

<llo_original>
// kernel: tpu_custom_call.1
$region0: #{tpu_custom_call.1}
  #allocation0 [shape = 'u32[]', space=smem, size = 0x4, offset = 0x4, fixed_abs, tag = 'smem constant byte address 0x4 - core index']
  #allocation1 [shape = 'u32[144,128]{1,0:T(1,128)}', space=vmem, size = 0x12000, scoped, tag = 'internal scratch']
  #allocation2 [shape = 'f32[128,128]{1,0:T(8,128)}', space=vmem, size = 0x10000, scoped, tag = 'scratch operand']
  #allocation3 [shape = 'f32[256,128]{1,0:T(8,128)}', space=vmem, size = 0x20000, scoped, tag = 'scratch operand']
  %s0 = inlined_call_operand.hbm [shape: f32[128,128], index: 0, kind: input, shape index: {}]
  %s1 = inlined_call_operand.hbm [shape: f32[256,128], index: 1, kind: input, shape index: {}]
  %s2 = inlined_call_operand.hbm [shape: f32[128,128], index: 2, kind: input, shape index: {}]
  %s3 = inlined_call_operand.hbm [shape: bf16[2,128,384], index: 3, kind: input, shape index: {}]
  %s4 = inlined_call_operand.hbm [shape: bf16[2,128,128], index: 4, kind: input, shape index: {}]
  %s5 = inlined_call_operand.hbm [shape: f32[2,8,128], index: 5, kind: input, shape index: {}]
  %s6 = inlined_call_operand.hbm [shape: f32[128,128], index: 6, kind: output, shape index: {0}]
  %s7 = inlined_call_operand.hbm [shape: f32[256,128], index: 7, kind: output, shape index: {1}]
  %8 = xla_tuple %s6, %s7
  %s9 = sld [smem:[#allocation0]]
  $region97: #{tpu_custom_call.1} parent=0
    _
  %s11 = ssub.s32 1, %s9
  %s12 = scalar_select 0, %s11, %s9
  $region1: #{tpu_custom_call.1} parent=0
    #allocation4 [shape = 'u8[65536]{0}', space=vmem, size = 0x10000, scoped, tag = 'input window, operand 0, single buffered']
    #allocation5 [shape = 's32[2]{0}', space=sflag, size = 0x8, scoped, tag = 'scoped memory for tpu_custom_call.1']
    #allocation6 [shape = 's32[2]{0}', space=sflag, size = 0x8, scoped, tag = 'scoped memory for tpu_custom_call.1']
    #allocation7 [shape = 'u8[131072]{0}', space=vmem, size = 0x20000, scoped, tag = 'input window, operand 1, single buffered']
    #allocation8 [shape = 's32[1]{0}', space=sflag, size = 0x4, scoped, tag = 'scoped memory for tpu_custom_call.1']
    #allocation9 [shape = 'u8[65536]{0}', space=vmem, size = 0x10000, scoped, tag = 'input window, operand 2, single buffered']
    #allocation10 [shape = 'u8[196608]{0}', space=vmem, size = 0x30000, scoped, tag = 'input window, operand 3']
    #allocation11 [shape = 's32[2]{0}', space=sflag, size = 0x8, scoped, tag = 'scoped memory for tpu_custom_call.1']
    #allocation12 [shape = 'u8[65536]{0}', space=vmem, size = 0x10000, scoped, tag = 'input window, operand 4']
    #allocation13 [shape = 'u8[8192]{0}', space=vmem, size = 0x2000, scoped, tag = 'input window, operand 5']
    #allocation14 [shape = 's32[2]{0}', space=sflag, size = 0x8, scoped, tag = 'scoped memory for tpu_custom_call.1']
    #allocation15 [shape = 'u8[65536]{0}', space=vmem, size = 0x10000, scoped, tag = 'output window, operand 0, single buffered']
    #allocation16 [shape = 'u8[131072]{0}', space=vmem, size = 0x20000, scoped, tag = 'output window, operand 1, single buffered']
    #allocation17 [shape = 's32[1]{0}', space=sflag, size = 0x4, scoped, tag = 'scoped memory for tpu_custom_call.1']
    %13 = vsyncpa [#allocation5], 0
    %14 = vsyncpa [#allocation8], 0
    %15 = vsyncpa [#allocation11], 0
    %s16 = scalar_lea.sflag [#allocation11], 1
    %17 = vsyncpa %s16, 0
    %18 = vsyncpa [#allocation14], 0
    %s19 = scalar_lea.sflag [#allocation14], 1
    %20 = vsyncpa %s19, 0
    %21 = vsyncpa [#allocation6], 0
    %22 = vsyncpa [#allocation17], 0
    loop: start=0, step=1, limit=4
    $region2: #{tpu_custom_call.1} parent=1 // loop_pre_header
      _
    $region3: #{tpu_custom_call.1} parent=1 // loop_header
      %s24 = sphi 0, %s28
      %p25 = scmp.ge.s32.totalorder %s24, 4
      %s32 = sphi 0, %s32
      %s34 = sphi 0, %s32
      %s35 = sphi 0, %s34
      %s49 = sphi 0, %s35
      %s53 = sphi 0, %s53
      %s55 = sphi 0, %s53
      %s56 = sphi 0, %s55
      %s70 = sphi 0, %s56
      %s74 = sphi 0, %s74
      %s76 = sphi 0, %s74
      %s77 = sphi 0, %s76
      %s91 = sphi 0, %s77
      %s97 = sphi 0, %s99
      %s100 = sphi 0, %s97
      %s101 = sphi 0, %s100
      %s117 = sphi 0, %s101
      %s123 = sphi 0, %s125
      %s126 = sphi 0, %s123
      %s127 = sphi 0, %s126
      %s143 = sphi 0, %s127
      %s149 = sphi 0, %s151
      %s152 = sphi 0, %s149
      %s153 = sphi 0, %s152
      %s169 = sphi 0, %s153
      %s173 = sphi 0, %s173
      %s175 = sphi 0, %s173
      %s176 = sphi 0, %s175
      %s190 = sphi 0, %s176
      %s194 = sphi 0, %s194
      %s196 = sphi 0, %s194
      %s197 = sphi 0, %s196
      %s211 = sphi 0, %s197
    $region4: #{tpu_custom_call.1} parent=1 // loop_header_branch
      %27 = sbr.rel (%p25) target = $region8
    $region5: #{tpu_custom_call.1} parent=1 // loop_body
      %s29 = ssub.s32 %s24, 1
      %s30 = ssub.s32 %s24, 2
      %s31 = sadd.s32 %s24, 1
      %s33 = sadd.s32 %s32, 1
      %p36 = scmp.eq.s32.totalorder %s24, 1
      %p37 = scmp.ne.s32.totalorder %s32, %s34
      %p38 = scmp.eq.s32.totalorder %s24, 0
      %p39 = por %p37, %p38
      %p40 = scmp.ne.s32.totalorder %s32, %s34
      %p41 = scmp.eq.s32.totalorder %s29, 1
      %p42 = por %p40, %p41
      %p43 = scmp.ne.s32.totalorder %s34, %s35
      %p44 = scmp.eq.s32.totalorder %s29, 0
      %p45 = por %p43, %p44
      %p46 = scmp.ne.s32.totalorder %s34, %s35
      %p47 = scmp.eq.s32.totalorder %s30, 1
      %p48 = por %p46, %p47
      %p50 = scmp.ne.s32.totalorder %s35, %s49
      %p51 = scmp.eq.s32.totalorder %s30, 0
      %p52 = por %p50, %p51
      %s54 = sadd.s32 %s53, 1
      %p57 = scmp.eq.s32.totalorder %s24, 1
      %p58 = scmp.ne.s32.totalorder %s53, %s55
      %p59 = scmp.eq.s32.totalorder %s24, 0
      %p60 = por %p58, %p59
      %p61 = scmp.ne.s32.totalorder %s53, %s55
      %p62 = scmp.eq.s32.totalorder %s29, 1
      %p63 = por %p61, %p62
      %p64 = scmp.ne.s32.totalorder %s55, %s56
      %p65 = scmp.eq.s32.totalorder %s29, 0
      %p66 = por %p64, %p65
      %p67 = scmp.ne.s32.totalorder %s55, %s56
      %p68 = scmp.eq.s32.totalorder %s30, 1
      %p69 = por %p67, %p68
      %p71 = scmp.ne.s32.totalorder %s56, %s70
      %p72 = scmp.eq.s32.totalorder %s30, 0
      %p73 = por %p71, %p72
      %s75 = sadd.s32 %s74, 1
      %p78 = scmp.eq.s32.totalorder %s24, 1
      %p79 = scmp.ne.s32.totalorder %s74, %s76
      %p80 = scmp.eq.s32.totalorder %s24, 0
      %p81 = por %p79, %p80
      %p82 = scmp.ne.s32.totalorder %s74, %s76
      %p83 = scmp.eq.s32.totalorder %s29, 1
      %p84 = por %p82, %p83
      %p85 = scmp.ne.s32.totalorder %s76, %s77
      %p86 = scmp.eq.s32.totalorder %s29, 0
      %p87 = por %p85, %p86
      %p88 = scmp.ne.s32.totalorder %s76, %s77
      %p89 = scmp.eq.s32.totalorder %s30, 1
      %p90 = por %p88, %p89
      %p92 = scmp.ne.s32.totalorder %s77, %s91
      %p93 = scmp.eq.s32.totalorder %s30, 0
      %p94 = por %p92, %p93
      %s95 = ssub.s32 %s24, %s31
      %p96 = scmp.eq.s32.totalorder %s95, 0
      %s98 = sadd.s32 %s97, 1
      %s99 = scalar_select %p96, %s97, %s98
      %p102 = pneg %p96
      %p103 = scmp.eq.s32.totalorder %s24, 1
      %p104 = por %p102, %p103
      %p105 = scmp.ne.s32.totalorder %s97, %s100
      %p106 = scmp.eq.s32.totalorder %s24, 0
      %p107 = por %p105, %p106
      %p108 = scmp.ne.s32.totalorder %s97, %s100
      %p109 = scmp.eq.s32.totalorder %s29, 1
      %p110 = por %p108, %p109
      %p111 = scmp.ne.s32.totalorder %s100, %s101
      %p112 = scmp.eq.s32.totalorder %s29, 0
      %p113 = por %p111, %p112
      %p114 = scmp.ne.s32.totalorder %s100, %s101
      %p115 = scmp.eq.s32.totalorder %s30, 1
      %p116 = por %p114, %p115
      %p118 = scmp.ne.s32.totalorder %s101, %s117
      %p119 = scmp.eq.s32.totalorder %s30, 0
      %p120 = por %p118, %p119
      %s121 = ssub.s32 %s24, %s31
      %p122 = scmp.eq.s32.totalorder %s121, 0
      %s124 = sadd.s32 %s123, 1
      %s125 = scalar_select %p122, %s123, %s124
      %p128 = pneg %p122
      %p129 = scmp.eq.s32.totalorder %s24, 1
      %p130 = por %p128, %p129
      %p131 = scmp.ne.s32.totalorder %s123, %s126
      %p132 = scmp.eq.s32.totalorder %s24, 0
      %p133 = por %p131, %p132
      %p134 = scmp.ne.s32.totalorder %s123, %s126
      %p135 = scmp.eq.s32.totalorder %s29, 1
      %p136 = por %p134, %p135
      %p137 = scmp.ne.s32.totalorder %s126, %s127
      %p138 = scmp.eq.s32.totalorder %s29, 0
      %p139 = por %p137, %p138
      %p140 = scmp.ne.s32.totalorder %s126, %s127
      %p141 = scmp.eq.s32.totalorder %s30, 1
      %p142 = por %p140, %p141
      %p144 = scmp.ne.s32.totalorder %s127, %s143
      %p145 = scmp.eq.s32.totalorder %s30, 0
      %p146 = por %p144, %p145
      %s147 = ssub.s32 %s24, %s31
      %p148 = scmp.eq.s32.totalorder %s147, 0
      %s150 = sadd.s32 %s149, 1
      %s151 = scalar_select %p148, %s149, %s150
      %p154 = pneg %p148
      %p155 = scmp.eq.s32.totalorder %s24, 1
      %p156 = por %p154, %p155
      %p157 = scmp.ne.s32.totalorder %s149, %s152
      %p158 = scmp.eq.s32.totalorder %s24, 0
      %p159 = por %p157, %p158
      %p160 = scmp.ne.s32.totalorder %s149, %s152
      %p161 = scmp.eq.s32.totalorder %s29, 1
      %p162 = por %p160, %p161
      %p163 = scmp.ne.s32.totalorder %s152, %s153
      %p164 = scmp.eq.s32.totalorder %s29, 0
      %p165 = por %p163, %p164
      %p166 = scmp.ne.s32.totalorder %s152, %s153
      %p167 = scmp.eq.s32.totalorder %s30, 1
      %p168 = por %p166, %p167
      %p170 = scmp.ne.s32.totalorder %s153, %s169
      %p171 = scmp.eq.s32.totalorder %s30, 0
      %p172 = por %p170, %p171
      %s174 = sadd.s32 %s173, 1
      %p177 = scmp.eq.s32.totalorder %s24, 1
      %p178 = scmp.ne.s32.totalorder %s173, %s175
      %p179 = scmp.eq.s32.totalorder %s24, 0
      %p180 = por %p178, %p179
      %p181 = scmp.ne.s32.totalorder %s173, %s175
      %p182 = scmp.eq.s32.totalorder %s29, 1
      %p183 = por %p181, %p182
      %p184 = scmp.ne.s32.totalorder %s175, %s176
      %p185 = scmp.eq.s32.totalorder %s29, 0
      %p186 = por %p184, %p185
      %p187 = scmp.ne.s32.totalorder %s175, %s176
      %p188 = scmp.eq.s32.totalorder %s30, 1
      %p189 = por %p187, %p188
      %p191 = scmp.ne.s32.totalorder %s176, %s190
      %p192 = scmp.eq.s32.totalorder %s30, 0
      %p193 = por %p191, %p192
      %s195 = sadd.s32 %s194, 1
      %p198 = scmp.eq.s32.totalorder %s24, 1
      %p199 = scmp.ne.s32.totalorder %s194, %s196
      %p200 = scmp.eq.s32.totalorder %s24, 0
      %p201 = por %p199, %p200
      %p202 = scmp.ne.s32.totalorder %s194, %s196
      %p203 = scmp.eq.s32.totalorder %s29, 1
      %p204 = por %p202, %p203
      %p205 = scmp.ne.s32.totalorder %s196, %s197
      %p206 = scmp.eq.s32.totalorder %s29, 0
      %p207 = por %p205, %p206
      %p208 = scmp.ne.s32.totalorder %s196, %s197
      %p209 = scmp.eq.s32.totalorder %s30, 1
      %p210 = por %p208, %p209
      %p212 = scmp.ne.s32.totalorder %s197, %s211
      %p213 = scmp.eq.s32.totalorder %s30, 0
      %p214 = por %p212, %p213
      %p215 = scmp.le.s32.totalorder 1, %s24
      %p216 = scmp.lt.s32.totalorder %s24, 3
      %p217 = pnand %p215, %p216
      %p218 = pneg %p217
      // Predicated region
      $region9: #{tpu_custom_call.1} parent=5 // pred_check
        _
      $region10: #{tpu_custom_call.1} parent=5 // pred_check_branch
        %220 = sbr.rel (%p217) target = $region12
      $region11: #{tpu_custom_call.1} parent=5 // pred_region
        %s221 = ssub.s32 %s24, 1
        // Predicated region
        $region13: #{tpu_custom_call.1} parent=11 // pred_check
          %p222 = pneg %p45
        $region14: #{tpu_custom_call.1} parent=11 // pred_check_branch
          %224 = sbr.rel (%p222) target = $region16
        $region15: #{tpu_custom_call.1} parent=11 // pred_region
          %s226 = ssub.s32 2048, 2048
          %227 = vsyncadd [#allocation5], %s226
          %s228 = sshll.u32 [#allocation4], 4
          %s229 = int_to_ptr.vmem [resolvable:$true] %s228
          %234 = dma.hbm_to_vmem [thread:$0]  %s0, 2048, %s229, [#allocation5], 128, 128, 8
        $region16: #{tpu_custom_call.1} parent=11 // pred_fallthru
          _
        // Predicated region
        $region17: #{tpu_custom_call.1} parent=11 // pred_check
          %p235 = pneg %p66
        $region18: #{tpu_custom_call.1} parent=11 // pred_check_branch
          %237 = sbr.rel (%p235) target = $region20
        $region19: #{tpu_custom_call.1} parent=11 // pred_region
          %s239 = ssub.s32 4096, 4096
          %240 = vsyncadd [#allocation8], %s239
          %s241 = sshll.u32 [#allocation7], 4
          %s242 = int_to_ptr.vmem [resolvable:$true] %s241
          %247 = dma.hbm_to_vmem [thread:$0]  %s1, 4096, %s242, [#allocation8], 128, 128, 8
        $region20: #{tpu_custom_call.1} parent=11 // pred_fallthru
          _
        // Predicated region
        $region21: #{tpu_custom_call.1} parent=11 // pred_check
          %p248 = pneg %p87
        $region22: #{tpu_custom_call.1} parent=11 // pred_check_branch
          %250 = sbr.rel (%p248) target = $region24
        $region23: #{tpu_custom_call.1} parent=11 // pred_region
          %s252 = ssub.s32 2048, 2048
          %253 = vsyncadd [#allocation8], %s252
          %s254 = sshll.u32 [#allocation9], 4
          %s255 = int_to_ptr.vmem [resolvable:$true] %s254
          %260 = dma.hbm_to_vmem [thread:$0]  %s2, 2048, %s255, [#allocation8], 128, 128, 8
        $region24: #{tpu_custom_call.1} parent=11 // pred_fallthru
          _
      $region12: #{tpu_custom_call.1} parent=5 // pred_fallthru
        _
      %p261 = scmp.lt.s32.totalorder %s24, 2
      // Predicated region
      $region25: #{tpu_custom_call.1} parent=5 // pred_check
        %p262 = pneg %p261
      $region26: #{tpu_custom_call.1} parent=5 // pred_check_branch
        %264 = sbr.rel (%p262) target = $region28
      $region27: #{tpu_custom_call.1} parent=5 // pred_region
        // Predicated region
        $region29: #{tpu_custom_call.1} parent=27 // pred_check
          %p265 = pneg %p107
        $region30: #{tpu_custom_call.1} parent=27 // pred_check_branch
          %267 = sbr.rel (%p265) target = $region32
        $region31: #{tpu_custom_call.1} parent=27 // pred_region
          %s268 = sand.u32 %s24, 1
          %s269 = scalar_lea.sflag [#allocation11], %s268
          %s270 = sand.u32 %s97, 1
          %s271 = smul.addr %s270, 192
          %s272 = scalar_lea.vmem [#allocation10], %s271
          %s274 = ssub.s32 3072, 3072
          %275 = vsyncadd %s269, %s274
          %s276 = smul.addr %s24, 48
          %s277 = smul.addr %s276, 64
          %s278 = scalar_lea.hbm %s3, %s277
          %s279 = sshll.u32 %s272, 4
          %s280 = int_to_ptr.vmem [resolvable:$true] %s279
          %285 = dma.hbm_to_vmem [thread:$0]  %s278, 3072, %s280, %s269, 192, 192, 12
        $region32: #{tpu_custom_call.1} parent=27 // pred_fallthru
          _
        // Predicated region
        $region33: #{tpu_custom_call.1} parent=27 // pred_check
          %p286 = pneg %p133
        $region34: #{tpu_custom_call.1} parent=27 // pred_check_branch
          %288 = sbr.rel (%p286) target = $region36
        $region35: #{tpu_custom_call.1} parent=27 // pred_region
          %s289 = sand.u32 %s24, 1
          %s290 = scalar_lea.sflag [#allocation11], %s289
          %s291 = sand.u32 %s123, 1
          %s292 = smul.addr %s291, 64
          %s293 = scalar_lea.vmem [#allocation12], %s292
          %s295 = ssub.s32 1024, 1024
          %296 = vsyncadd %s290, %s295
          %s297 = smul.addr %s24, 16
          %s298 = smul.addr %s297, 64
          %s299 = scalar_lea.hbm %s4, %s298
          %s300 = sshll.u32 %s293, 4
          %s301 = int_to_ptr.vmem [resolvable:$true] %s300
          %306 = dma.hbm_to_vmem [thread:$0]  %s299, 1024, %s301, %s290, 64, 64, 4
        $region36: #{tpu_custom_call.1} parent=27 // pred_fallthru
          _
        // Predicated region
        $region37: #{tpu_custom_call.1} parent=27 // pred_check
          %p307 = pneg %p159
        $region38: #{tpu_custom_call.1} parent=27 // pred_check_branch
          %309 = sbr.rel (%p307) target = $region40
        $region39: #{tpu_custom_call.1} parent=27 // pred_region
          %s310 = sand.u32 %s149, 1
          %s311 = scalar_lea.sflag [#allocation14], %s310
          %s312 = sand.u32 %s149, 1
          %s313 = smul.addr %s312, 8
          %s314 = scalar_lea.vmem [#allocation13], %s313
          %s316 = ssub.s32 128, 128
          %317 = vsyncadd %s311, %s316
          %s318 = smul.addr %s24, 128
          %s319 = scalar_lea.hbm %s5, %s318
          %s321 = sshll.u32 %s314, 4
          %s322 = int_to_ptr.vmem [resolvable:$true] %s321
          %324 = dma.hbm_to_vmem [thread:$0]  %s319, 128, %s322, %s311
        $region40: #{tpu_custom_call.1} parent=27 // pred_fallthru
          _
      $region28: #{tpu_custom_call.1} parent=5 // pred_fallthru
        _
      %p325 = scmp.le.s32.totalorder 1, %s24
      %p326 = scmp.lt.s32.totalorder %s24, 3
      %p327 = pnand %p325, %p326
      %p328 = pneg %p327
      // Predicated region
      $region41: #{tpu_custom_call.1} parent=5 // pred_check
        _
      $region42: #{tpu_custom_call.1} parent=5 // pred_check_branch
        %330 = sbr.rel (%p327) target = $region44
      $region43: #{tpu_custom_call.1} parent=5 // pred_region
        %s331 = ssub.s32 %s24, 1
        // Predicated region
        $region45: #{tpu_custom_call.1} parent=43 // pred_check
          %p332 = pneg %p45
        $region46: #{tpu_custom_call.1} parent=43 // pred_check_branch
          %334 = sbr.rel (%p332) target = $region48
        $region47: #{tpu_custom_call.1} parent=43 // pred_region
          %335 = dma.done [#allocation5], 2048
        $region48: #{tpu_custom_call.1} parent=43 // pred_fallthru
          _
        // Predicated region
        $region49: #{tpu_custom_call.1} parent=43 // pred_check
          %p336 = pneg %p66
        $region50: #{tpu_custom_call.1} parent=43 // pred_check_branch
          %338 = sbr.rel (%p336) target = $region52
        $region51: #{tpu_custom_call.1} parent=43 // pred_region
          %339 = dma.done [#allocation8], 4096
        $region52: #{tpu_custom_call.1} parent=43 // pred_fallthru
          _
        // Predicated region
        $region53: #{tpu_custom_call.1} parent=43 // pred_check
          %p340 = pneg %p87
        $region54: #{tpu_custom_call.1} parent=43 // pred_check_branch
          %342 = sbr.rel (%p340) target = $region56
        $region55: #{tpu_custom_call.1} parent=43 // pred_region
          %343 = dma.done [#allocation8], 2048
        $region56: #{tpu_custom_call.1} parent=43 // pred_fallthru
          _
        %s344 = sand.u32 %s29, 1
        %s345 = scalar_lea.sflag [#allocation11], %s344
        %s346 = sand.u32 %s100, 1
        %s347 = smul.addr %s346, 192
        %s348 = scalar_lea.vmem [#allocation10], %s347
        // Predicated region
        $region57: #{tpu_custom_call.1} parent=43 // pred_check
          %p349 = pneg %p113
        $region58: #{tpu_custom_call.1} parent=43 // pred_check_branch
          %351 = sbr.rel (%p349) target = $region60
        $region59: #{tpu_custom_call.1} parent=43 // pred_region
          %352 = dma.done %s345, 3072
        $region60: #{tpu_custom_call.1} parent=43 // pred_fallthru
          _
        %s353 = sand.u32 %s29, 1
        %s354 = scalar_lea.sflag [#allocation11], %s353
        %s355 = sand.u32 %s126, 1
        %s356 = smul.addr %s355, 64
        %s357 = scalar_lea.vmem [#allocation12], %s356
        // Predicated region
        $region61: #{tpu_custom_call.1} parent=43 // pred_check
          %p358 = pneg %p139
        $region62: #{tpu_custom_call.1} parent=43 // pred_check_branch
          %360 = sbr.rel (%p358) target = $region64
        $region63: #{tpu_custom_call.1} parent=43 // pred_region
          %361 = dma.done %s354, 1024
        $region64: #{tpu_custom_call.1} parent=43 // pred_fallthru
          _
        %s362 = sand.u32 %s152, 1
        %s363 = scalar_lea.sflag [#allocation14], %s362
        %s364 = sand.u32 %s152, 1
        %s365 = smul.addr %s364, 8
        %s366 = scalar_lea.vmem [#allocation13], %s365
        // Predicated region
        $region65: #{tpu_custom_call.1} parent=43 // pred_check
          %p367 = pneg %p165
        $region66: #{tpu_custom_call.1} parent=43 // pred_check_branch
          %369 = sbr.rel (%p367) target = $region68
        $region67: #{tpu_custom_call.1} parent=43 // pred_region
          %370 = dma.done %s363, 128
        $region68: #{tpu_custom_call.1} parent=43 // pred_fallthru
          _
        %p371 = pneg %p45
        %p372 = pneg %p42
        %p373 = pneg %p66
        %p374 = pneg %p63
        %p375 = pneg %p87
        %p376 = pneg %p84
        %s377 = sand.u32 %s29, 1
        %s378 = scalar_lea.sflag [#allocation11], %s377
        %s379 = sand.u32 %s100, 1
        %s380 = smul.addr %s379, 192
        %s381 = scalar_lea.vmem [#allocation10], %s380
        %p382 = pneg %p113
        %p383 = pneg %p110
        %s384 = sand.u32 %s29, 1
        %s385 = scalar_lea.sflag [#allocation11], %s384
        %s386 = sand.u32 %s126, 1
        %s387 = smul.addr %s386, 64
        %s388 = scalar_lea.vmem [#allocation12], %s387
        %p389 = pneg %p139
        %p390 = pneg %p136
        %s391 = sand.u32 %s152, 1
        %s392 = scalar_lea.sflag [#allocation14], %s391
        %s393 = sand.u32 %s152, 1
        %s394 = smul.addr %s393, 8
        %s395 = scalar_lea.vmem [#allocation13], %s394
        %p396 = pneg %p165
        %p397 = pneg %p162
        %p398 = pneg %p186
        %p399 = pneg %p183
        %p400 = pneg %p207
        %p401 = pneg %p204
        %p403 = scmp.eq.s32.totalorder %s29, 0
        // Predicated region
        $region69: #{tpu_custom_call.1} parent=43 // pred_check
          %p404 = pneg %p403
        $region70: #{tpu_custom_call.1} parent=43 // pred_check_branch
          %406 = sbr.rel (%p404) target = $region72
        $region71: #{tpu_custom_call.1} parent=43 // pred_region
          %v407 = vld [vmem:[#allocation4] sm:$0xff]
          %v408 = vld [vmem:[#allocation4 + $0x8] sm:$0xff]
          %v409 = vld [vmem:[#allocation4 + $0x10] sm:$0xff]
          %v410 = vld [vmem:[#allocation4 + $0x18] sm:$0xff]
          %v411 = vld [vmem:[#allocation4 + $0x20] sm:$0xff]
          %v412 = vld [vmem:[#allocation4 + $0x28] sm:$0xff]
          %v413 = vld [vmem:[#allocation4 + $0x30] sm:$0xff]
          %v414 = vld [vmem:[#allocation4 + $0x38] sm:$0xff]
          %v415 = vld [vmem:[#allocation4 + $0x40] sm:$0xff]
          %v416 = vld [vmem:[#allocation4 + $0x48] sm:$0xff]
          %v417 = vld [vmem:[#allocation4 + $0x50] sm:$0xff]
          %v418 = vld [vmem:[#allocation4 + $0x58] sm:$0xff]
          %v419 = vld [vmem:[#allocation4 + $0x60] sm:$0xff]
          %v420 = vld [vmem:[#allocation4 + $0x68] sm:$0xff]
          %v421 = vld [vmem:[#allocation4 + $0x70] sm:$0xff]
          %v422 = vld [vmem:[#allocation4 + $0x78] sm:$0xff]
          %423 = vst [vmem:[#allocation2] sm:$0xff] %v407
          %424 = vst [vmem:[#allocation2 + $0x8] sm:$0xff] %v408
          %425 = vst [vmem:[#allocation2 + $0x10] sm:$0xff] %v409
          %426 = vst [vmem:[#allocation2 + $0x18] sm:$0xff] %v410
          %427 = vst [vmem:[#allocation2 + $0x20] sm:$0xff] %v411
          %428 = vst [vmem:[#allocation2 + $0x28] sm:$0xff] %v412
          %429 = vst [vmem:[#allocation2 + $0x30] sm:$0xff] %v413
          %430 = vst [vmem:[#allocation2 + $0x38] sm:$0xff] %v414
          %431 = vst [vmem:[#allocation2 + $0x40] sm:$0xff] %v415
          %432 = vst [vmem:[#allocation2 + $0x48] sm:$0xff] %v416
          %433 = vst [vmem:[#allocation2 + $0x50] sm:$0xff] %v417
          %434 = vst [vmem:[#allocation2 + $0x58] sm:$0xff] %v418
          %435 = vst [vmem:[#allocation2 + $0x60] sm:$0xff] %v419
          %436 = vst [vmem:[#allocation2 + $0x68] sm:$0xff] %v420
          %437 = vst [vmem:[#allocation2 + $0x70] sm:$0xff] %v421
          %438 = vst [vmem:[#allocation2 + $0x78] sm:$0xff] %v422
          %v439 = vld [vmem:[#allocation7] sm:$0xff]
          %v440 = vld [vmem:[#allocation7 + $0x8] sm:$0xff]
          %v441 = vld [vmem:[#allocation7 + $0x10] sm:$0xff]
          %v442 = vld [vmem:[#allocation7 + $0x18] sm:$0xff]
          %v443 = vld [vmem:[#allocation7 + $0x20] sm:$0xff]
          %v444 = vld [vmem:[#allocation7 + $0x28] sm:$0xff]
          %v445 = vld [vmem:[#allocation7 + $0x30] sm:$0xff]
          %v446 = vld [vmem:[#allocation7 + $0x38] sm:$0xff]
          %v447 = vld [vmem:[#allocation7 + $0x40] sm:$0xff]
          %v448 = vld [vmem:[#allocation7 + $0x48] sm:$0xff]
          %v449 = vld [vmem:[#allocation7 + $0x50] sm:$0xff]
          %v450 = vld [vmem:[#allocation7 + $0x58] sm:$0xff]
          %v451 = vld [vmem:[#allocation7 + $0x60] sm:$0xff]
          %v452 = vld [vmem:[#allocation7 + $0x68] sm:$0xff]
          %v453 = vld [vmem:[#allocation7 + $0x70] sm:$0xff]
          %v454 = vld [vmem:[#allocation7 + $0x78] sm:$0xff]
          %v455 = vld [vmem:[#allocation7 + $0x80] sm:$0xff]
          %v456 = vld [vmem:[#allocation7 + $0x88] sm:$0xff]
          %v457 = vld [vmem:[#allocation7 + $0x90] sm:$0xff]
          %v458 = vld [vmem:[#allocation7 + $0x98] sm:$0xff]
          %v459 = vld [vmem:[#allocation7 + $0xa0] sm:$0xff]
          %v460 = vld [vmem:[#allocation7 + $0xa8] sm:$0xff]
          %v461 = vld [vmem:[#allocation7 + $0xb0] sm:$0xff]
          %v462 = vld [vmem:[#allocation7 + $0xb8] sm:$0xff]
          %v463 = vld [vmem:[#allocation7 + $0xc0] sm:$0xff]
          %v464 = vld [vmem:[#allocation7 + $0xc8] sm:$0xff]
          %v465 = vld [vmem:[#allocation7 + $0xd0] sm:$0xff]
          %v466 = vld [vmem:[#allocation7 + $0xd8] sm:$0xff]
          %v467 = vld [vmem:[#allocation7 + $0xe0] sm:$0xff]
          %v468 = vld [vmem:[#allocation7 + $0xe8] sm:$0xff]
          %v469 = vld [vmem:[#allocation7 + $0xf0] sm:$0xff]
          %v470 = vld [vmem:[#allocation7 + $0xf8] sm:$0xff]
          %471 = vst [vmem:[#allocation3] sm:$0xff] %v439
          %472 = vst [vmem:[#allocation3 + $0x8] sm:$0xff] %v440
          %473 = vst [vmem:[#allocation3 + $0x10] sm:$0xff] %v441
          %474 = vst [vmem:[#allocation3 + $0x18] sm:$0xff] %v442
          %475 = vst [vmem:[#allocation3 + $0x20] sm:$0xff] %v443
          %476 = vst [vmem:[#allocation3 + $0x28] sm:$0xff] %v444
          %477 = vst [vmem:[#allocation3 + $0x30] sm:$0xff] %v445
          %478 = vst [vmem:[#allocation3 + $0x38] sm:$0xff] %v446
          %479 = vst [vmem:[#allocation3 + $0x40] sm:$0xff] %v447
          %480 = vst [vmem:[#allocation3 + $0x48] sm:$0xff] %v448
          %481 = vst [vmem:[#allocation3 + $0x50] sm:$0xff] %v449
          %482 = vst [vmem:[#allocation3 + $0x58] sm:$0xff] %v450
          %483 = vst [vmem:[#allocation3 + $0x60] sm:$0xff] %v451
          %484 = vst [vmem:[#allocation3 + $0x68] sm:$0xff] %v452
          %485 = vst [vmem:[#allocation3 + $0x70] sm:$0xff] %v453
          %486 = vst [vmem:[#allocation3 + $0x78] sm:$0xff] %v454
          %487 = vst [vmem:[#allocation3 + $0x80] sm:$0xff] %v455
          %488 = vst [vmem:[#allocation3 + $0x88] sm:$0xff] %v456
          %489 = vst [vmem:[#allocation3 + $0x90] sm:$0xff] %v457
          %490 = vst [vmem:[#allocation3 + $0x98] sm:$0xff] %v458
          %491 = vst [vmem:[#allocation3 + $0xa0] sm:$0xff] %v459
          %492 = vst [vmem:[#allocation3 + $0xa8] sm:$0xff] %v460
          %493 = vst [vmem:[#allocation3 + $0xb0] sm:$0xff] %v461
          %494 = vst [vmem:[#allocation3 + $0xb8] sm:$0xff] %v462
          %495 = vst [vmem:[#allocation3 + $0xc0] sm:$0xff] %v463
          %496 = vst [vmem:[#allocation3 + $0xc8] sm:$0xff] %v464
          %497 = vst [vmem:[#allocation3 + $0xd0] sm:$0xff] %v465
          %498 = vst [vmem:[#allocation3 + $0xd8] sm:$0xff] %v466
          %499 = vst [vmem:[#allocation3 + $0xe0] sm:$0xff] %v467
          %500 = vst [vmem:[#allocation3 + $0xe8] sm:$0xff] %v468
          %501 = vst [vmem:[#allocation3 + $0xf0] sm:$0xff] %v469
          %502 = vst [vmem:[#allocation3 + $0xf8] sm:$0xff] %v470
        $region72: #{tpu_custom_call.1} parent=43 // pred_fallthru
          _
        %v503 = vld [vmem:[#allocation2] sm:$0xff]
        %v504 = vld [vmem:[#allocation2 + $0x8] sm:$0xff]
        %v505 = vld [vmem:[#allocation2 + $0x10] sm:$0xff]
        %v506 = vld [vmem:[#allocation2 + $0x18] sm:$0xff]
        %v507 = vld [vmem:[#allocation2 + $0x20] sm:$0xff]
        %v508 = vld [vmem:[#allocation2 + $0x28] sm:$0xff]
        %v509 = vld [vmem:[#allocation2 + $0x30] sm:$0xff]
        %v510 = vld [vmem:[#allocation2 + $0x38] sm:$0xff]
        %v511 = vld [vmem:[#allocation2 + $0x40] sm:$0xff]
        %v512 = vld [vmem:[#allocation2 + $0x48] sm:$0xff]
        %v513 = vld [vmem:[#allocation2 + $0x50] sm:$0xff]
        %v514 = vld [vmem:[#allocation2 + $0x58] sm:$0xff]
        %v515 = vld [vmem:[#allocation2 + $0x60] sm:$0xff]
        %v516 = vld [vmem:[#allocation2 + $0x68] sm:$0xff]
        %v517 = vld [vmem:[#allocation2 + $0x70] sm:$0xff]
        %v518 = vld [vmem:[#allocation2 + $0x78] sm:$0xff]
        %v519 = vld [vmem:[#allocation3] sm:$0xff]
        %v520 = vld [vmem:[#allocation3 + $0x8] sm:$0xff]
        %v521 = vld [vmem:[#allocation3 + $0x10] sm:$0xff]
        %v522 = vld [vmem:[#allocation3 + $0x18] sm:$0xff]
        %v523 = vld [vmem:[#allocation3 + $0x20] sm:$0xff]
        %v524 = vld [vmem:[#allocation3 + $0x28] sm:$0xff]
        %v525 = vld [vmem:[#allocation3 + $0x30] sm:$0xff]
        %v526 = vld [vmem:[#allocation3 + $0x38] sm:$0xff]
        %v527 = vld [vmem:[#allocation3 + $0x40] sm:$0xff]
        %v528 = vld [vmem:[#allocation3 + $0x48] sm:$0xff]
        %v529 = vld [vmem:[#allocation3 + $0x50] sm:$0xff]
        %v530 = vld [vmem:[#allocation3 + $0x58] sm:$0xff]
        %v531 = vld [vmem:[#allocation3 + $0x60] sm:$0xff]
        %v532 = vld [vmem:[#allocation3 + $0x68] sm:$0xff]
        %v533 = vld [vmem:[#allocation3 + $0x70] sm:$0xff]
        %v534 = vld [vmem:[#allocation3 + $0x78] sm:$0xff]
        %v535 = vld [vmem:[#allocation3 + $0x80] sm:$0xff]
        %v536 = vld [vmem:[#allocation3 + $0x88] sm:$0xff]
        %v537 = vld [vmem:[#allocation3 + $0x90] sm:$0xff]
        %v538 = vld [vmem:[#allocation3 + $0x98] sm:$0xff]
        %v539 = vld [vmem:[#allocation3 + $0xa0] sm:$0xff]
        %v540 = vld [vmem:[#allocation3 + $0xa8] sm:$0xff]
        %v541 = vld [vmem:[#allocation3 + $0xb0] sm:$0xff]
        %v542 = vld [vmem:[#allocation3 + $0xb8] sm:$0xff]
        %v543 = vld [vmem:[#allocation3 + $0xc0] sm:$0xff]
        %v544 = vld [vmem:[#allocation3 + $0xc8] sm:$0xff]
        %v545 = vld [vmem:[#allocation3 + $0xd0] sm:$0xff]
        %v546 = vld [vmem:[#allocation3 + $0xd8] sm:$0xff]
        %v547 = vld [vmem:[#allocation3 + $0xe0] sm:$0xff]
        %v548 = vld [vmem:[#allocation3 + $0xe8] sm:$0xff]
        %v549 = vld [vmem:[#allocation3 + $0xf0] sm:$0xff]
        %v550 = vld [vmem:[#allocation3 + $0xf8] sm:$0xff]
        %v551 = vld [vmem:[#allocation9] sm:$0xff]
        %v552 = vld [vmem:[#allocation9 + $0x8] sm:$0xff]
        %v553 = vld [vmem:[#allocation9 + $0x10] sm:$0xff]
        %v554 = vld [vmem:[#allocation9 + $0x18] sm:$0xff]
        %v555 = vld [vmem:[#allocation9 + $0x20] sm:$0xff]
        %v556 = vld [vmem:[#allocation9 + $0x28] sm:$0xff]
        %v557 = vld [vmem:[#allocation9 + $0x30] sm:$0xff]
        %v558 = vld [vmem:[#allocation9 + $0x38] sm:$0xff]
        %v559 = vld [vmem:[#allocation9 + $0x40] sm:$0xff]
        %v560 = vld [vmem:[#allocation9 + $0x48] sm:$0xff]
        %v561 = vld [vmem:[#allocation9 + $0x50] sm:$0xff]
        %v562 = vld [vmem:[#allocation9 + $0x58] sm:$0xff]
        %v563 = vld [vmem:[#allocation9 + $0x60] sm:$0xff]
        %v564 = vld [vmem:[#allocation9 + $0x68] sm:$0xff]
        %v565 = vld [vmem:[#allocation9 + $0x70] sm:$0xff]
        %v566 = vld [vmem:[#allocation9 + $0x78] sm:$0xff]
        %v567 = vld [vmem:[%s348] sm:$0xff]
        %v568 = vld [vmem:[%s348 + $0x8] sm:$0xf]
        %v569 = vld [vmem:[%s348 + $0xc] sm:$0xff]
        %v570 = vld [vmem:[%s348 + $0x14] sm:$0xf]
        %v571 = vld [vmem:[%s348 + $0x18] sm:$0xff]
        %v572 = vld [vmem:[%s348 + $0x20] sm:$0xf]
        %v573 = vld [vmem:[%s348 + $0x24] sm:$0xff]
        %v574 = vld [vmem:[%s348 + $0x2c] sm:$0xf]
        %v575 = vld [vmem:[%s348 + $0x30] sm:$0xff]
        %v576 = vld [vmem:[%s348 + $0x38] sm:$0xf]
        %v577 = vld [vmem:[%s348 + $0x3c] sm:$0xff]
        %v578 = vld [vmem:[%s348 + $0x44] sm:$0xf]
        %v579 = vld [vmem:[%s348 + $0x48] sm:$0xff]
        %v580 = vld [vmem:[%s348 + $0x50] sm:$0xf]
        %v581 = vld [vmem:[%s348 + $0x54] sm:$0xff]
        %v582 = vld [vmem:[%s348 + $0x5c] sm:$0xf]
        %v583 = vld [vmem:[%s348 + $0x60] sm:$0xff]
        %v584 = vld [vmem:[%s348 + $0x68] sm:$0xf]
        %v585 = vld [vmem:[%s348 + $0x6c] sm:$0xff]
        %v586 = vld [vmem:[%s348 + $0x74] sm:$0xf]
        %v587 = vld [vmem:[%s348 + $0x78] sm:$0xff]
        %v588 = vld [vmem:[%s348 + $0x80] sm:$0xf]
        %v589 = vld [vmem:[%s348 + $0x84] sm:$0xff]
        %v590 = vld [vmem:[%s348 + $0x8c] sm:$0xf]
        %v591 = vld [vmem:[%s348 + $0x90] sm:$0xff]
        %v592 = vld [vmem:[%s348 + $0x98] sm:$0xf]
        %v593 = vld [vmem:[%s348 + $0x9c] sm:$0xff]
        %v594 = vld [vmem:[%s348 + $0xa4] sm:$0xf]
        %v595 = vld [vmem:[%s348 + $0xa8] sm:$0xff]
        %v596 = vld [vmem:[%s348 + $0xb0] sm:$0xf]
        %v597 = vld [vmem:[%s348 + $0xb4] sm:$0xff]
        %v598 = vld [vmem:[%s348 + $0xbc] sm:$0xf]
        %v599 = vld [vmem:[%s357] sm:$0xf]
        %v600 = vld [vmem:[%s357 + $0x4] sm:$0xf]
        %v601 = vld [vmem:[%s357 + $0x8] sm:$0xf]
        %v602 = vld [vmem:[%s357 + $0xc] sm:$0xf]
        %v603 = vld [vmem:[%s357 + $0x10] sm:$0xf]
        %v604 = vld [vmem:[%s357 + $0x14] sm:$0xf]
        %v605 = vld [vmem:[%s357 + $0x18] sm:$0xf]
        %v606 = vld [vmem:[%s357 + $0x1c] sm:$0xf]
        %v607 = vld [vmem:[%s357 + $0x20] sm:$0xf]
        %v608 = vld [vmem:[%s357 + $0x24] sm:$0xf]
        %v609 = vld [vmem:[%s357 + $0x28] sm:$0xf]
        %v610 = vld [vmem:[%s357 + $0x2c] sm:$0xf]
        %v611 = vld [vmem:[%s357 + $0x30] sm:$0xf]
        %v612 = vld [vmem:[%s357 + $0x34] sm:$0xf]
        %v613 = vld [vmem:[%s357 + $0x38] sm:$0xf]
        %v614 = vld [vmem:[%s357 + $0x3c] sm:$0xf]
        %v615 = vld [vmem:[%s366] sm:$0xff]
        %v616 = vpack.c.bf16 %v504, %v503
        %v617 = vpack.c.bf16 %v506, %v505
        %v618 = vpack.c.bf16 %v508, %v507
        %v619 = vpack.c.bf16 %v510, %v509
        %v620 = vpack.c.bf16 %v512, %v511
        %v621 = vpack.c.bf16 %v514, %v513
        %v622 = vpack.c.bf16 %v516, %v515
        %v623 = vpack.c.bf16 %v518, %v517
        %v656 = vunpack.c.l.b16 %v567
        %v657 = vunpack.c.h.b16 %v567
        %v658 = vunpack.c.l.b16 %v568
        %v659 = vunpack.c.l.b16 %v569
        %v660 = vunpack.c.h.b16 %v569
        %v661 = vunpack.c.l.b16 %v570
        %v662 = vunpack.c.l.b16 %v571
        %v663 = vunpack.c.h.b16 %v571
        %v664 = vunpack.c.l.b16 %v572
        %v665 = vunpack.c.l.b16 %v573
        %v666 = vunpack.c.h.b16 %v573
        %v667 = vunpack.c.l.b16 %v574
        %v668 = vunpack.c.l.b16 %v575
        %v669 = vunpack.c.h.b16 %v575
        %v670 = vunpack.c.l.b16 %v576
        %v671 = vunpack.c.l.b16 %v577
        %v672 = vunpack.c.h.b16 %v577
        %v673 = vunpack.c.l.b16 %v578
        %v674 = vunpack.c.l.b16 %v579
        %v675 = vunpack.c.h.b16 %v579
        %v676 = vunpack.c.l.b16 %v580
        %v677 = vunpack.c.l.b16 %v581
        %v678 = vunpack.c.h.b16 %v581
        %v679 = vunpack.c.l.b16 %v582
        %v680 = vunpack.c.l.b16 %v583
        %v681 = vunpack.c.h.b16 %v583
        %v682 = vunpack.c.l.b16 %v584
        %v683 = vunpack.c.l.b16 %v585
        %v684 = vunpack.c.h.b16 %v585
        %v685 = vunpack.c.l.b16 %v586
        %v686 = vunpack.c.l.b16 %v587
        %v687 = vunpack.c.h.b16 %v587
        %v688 = vunpack.c.l.b16 %v588
        %v689 = vunpack.c.l.b16 %v589
        %v690 = vunpack.c.h.b16 %v589
        %v691 = vunpack.c.l.b16 %v590
        %v692 = vunpack.c.l.b16 %v591
        %v693 = vunpack.c.h.b16 %v591
        %v694 = vunpack.c.l.b16 %v592
        %v695 = vunpack.c.l.b16 %v593
        %v696 = vunpack.c.h.b16 %v593
        %v697 = vunpack.c.l.b16 %v594
        %v698 = vunpack.c.l.b16 %v595
        %v699 = vunpack.c.h.b16 %v595
        %v700 = vunpack.c.l.b16 %v596
        %v701 = vunpack.c.l.b16 %v597
        %v702 = vunpack.c.h.b16 %v597
        %v703 = vunpack.c.l.b16 %v598
        %v704 = vpack.c.b16 %v659, %v656
        %v705 = vpack.c.b16 %v660, %v657
        %v706 = vpack.c.b16 %v661, %v658
        %v707 = vpack.c.b16 %v665, %v662
        %v708 = vpack.c.b16 %v666, %v663
        %v709 = vpack.c.b16 %v667, %v664
        %v710 = vpack.c.b16 %v671, %v668
        %v711 = vpack.c.b16 %v672, %v669
        %v712 = vpack.c.b16 %v673, %v670
        %v713 = vpack.c.b16 %v677, %v674
        %v714 = vpack.c.b16 %v678, %v675
        %v715 = vpack.c.b16 %v679, %v676
        %v716 = vpack.c.b16 %v683, %v680
        %v717 = vpack.c.b16 %v684, %v681
        %v718 = vpack.c.b16 %v685, %v682
        %v719 = vpack.c.b16 %v689, %v686
        %v720 = vpack.c.b16 %v690, %v687
        %v721 = vpack.c.b16 %v691, %v688
        %v722 = vpack.c.b16 %v695, %v692
        %v723 = vpack.c.b16 %v696, %v693
        %v724 = vpack.c.b16 %v697, %v694
        %v725 = vpack.c.b16 %v701, %v698
        %v726 = vpack.c.b16 %v702, %v699
        %v727 = vpack.c.b16 %v703, %v700
        %752 = vmatprep.subr.bf16.mxu0 %v726
        %753 = vmatpush1.bf16.msra.mxu0 %v725
        %754 = vmatprep.subr.bf16.mxu0 %v723
        %755 = vmatpush1.bf16.msra.mxu0 %v722
        %756 = vmatprep.subr.bf16.mxu0 %v720
        %757 = vmatpush1.bf16.msra.mxu0 %v719
        %758 = vmatprep.subr.bf16.mxu0 %v717
        %759 = vmatpush1.bf16.msra.mxu0 %v716
        %760 = vmatprep.subr.bf16.mxu0 %v714
        %761 = vmatpush1.bf16.msra.mxu0 %v713
        %762 = vmatprep.subr.bf16.mxu0 %v711
        %763 = vmatpush1.bf16.msra.mxu0 %v710
        %764 = vmatprep.subr.bf16.mxu0 %v708
        %765 = vmatpush1.bf16.msra.mxu0 %v707
        %766 = vmatprep.subr.bf16.mxu0 %v705
        %767 = vmatpush1.bf16.msra.mxu0 %v704
        %768 = vmatprep.subr.bf16.mxu0 0
        %769 = vmatpush2.bf16.msra.mxu0 0
        %770 = vmatprep.subr.bf16.mxu0 0
        %771 = vmatpush2.bf16.msra.mxu0 0
        %772 = vmatprep.subr.bf16.mxu0 0
        %773 = vmatpush2.bf16.msra.mxu0 0
        %774 = vmatprep.subr.bf16.mxu0 0
        %775 = vmatpush2.bf16.msra.mxu0 0
        %776 = vmatprep.subr.bf16.mxu0 0
        %777 = vmatpush2.bf16.msra.mxu0 0
        %778 = vmatprep.subr.bf16.mxu0 0
        %779 = vmatpush2.bf16.msra.mxu0 0
        %780 = vmatprep.subr.bf16.mxu0 0
        %781 = vmatpush2.bf16.msra.mxu0 0
        %782 = vmatprep.subr.bf16.mxu0 0
        %783 = vmatpush2.bf16.msra.mxu0 0
        %784 = vmatprep.mubr.bf16.mxu0 0
        %785 = vmatmul.mubr.bf16.gmra.mxu0 %v616
        %v786 = vpop.f32.mrf.mxu0
        %v787 = vadd.f32 0.0, %v786
        %v788 = vpop.f32.mrf.mxu0
        %v789 = vadd.f32 0.0, %v788
        %v790 = vpop.f32.mrf.mxu0
        %v791 = vadd.f32 0.0, %v790
        %v792 = vpop.f32.mrf.mxu0
        %v793 = vadd.f32 0.0, %v792
        %794 = vmatprep.mubr.bf16.mxu0 0
        %795 = vmatmul.mubr.bf16.gmra.mxu0 %v617
        %v796 = vpop.f32.mrf.mxu0
        %v797 = vadd.f32 0.0, %v796
        %v798 = vpop.f32.mrf.mxu0
        %v799 = vadd.f32 0.0, %v798
        %v800 = vpop.f32.mrf.mxu0
        %v801 = vadd.f32 0.0, %v800
        %v802 = vpop.f32.mrf.mxu0
        %v803 = vadd.f32 0.0, %v802
        %804 = vmatprep.mubr.bf16.mxu0 0
        %805 = vmatmul.mubr.bf16.gmra.mxu0 %v618
        %v806 = vpop.f32.mrf.mxu0
        %v807 = vadd.f32 0.0, %v806
        %v808 = vpop.f32.mrf.mxu0
        %v809 = vadd.f32 0.0, %v808
        %v810 = vpop.f32.mrf.mxu0
        %v811 = vadd.f32 0.0, %v810
        %v812 = vpop.f32.mrf.mxu0
        %v813 = vadd.f32 0.0, %v812
        %814 = vmatprep.mubr.bf16.mxu0 0
        %815 = vmatmul.mubr.bf16.gmra.mxu0 %v619
        %v816 = vpop.f32.mrf.mxu0
        %v817 = vadd.f32 0.0, %v816
        %v818 = vpop.f32.mrf.mxu0
        %v819 = vadd.f32 0.0, %v818
        %v820 = vpop.f32.mrf.mxu0
        %v821 = vadd.f32 0.0, %v820
        %v822 = vpop.f32.mrf.mxu0
        %v823 = vadd.f32 0.0, %v822
        %824 = vmatprep.mubr.bf16.mxu0 0
        %825 = vmatmul.mubr.bf16.gmra.mxu0 %v620
        %v826 = vpop.f32.mrf.mxu0
        %v827 = vadd.f32 0.0, %v826
        %v828 = vpop.f32.mrf.mxu0
        %v829 = vadd.f32 0.0, %v828
        %v830 = vpop.f32.mrf.mxu0
        %v831 = vadd.f32 0.0, %v830
        %v832 = vpop.f32.mrf.mxu0
        %v833 = vadd.f32 0.0, %v832
        %834 = vmatprep.mubr.bf16.mxu0 0
        %835 = vmatmul.mubr.bf16.gmra.mxu0 %v621
        %v836 = vpop.f32.mrf.mxu0
        %v837 = vadd.f32 0.0, %v836
        %v838 = vpop.f32.mrf.mxu0
        %v839 = vadd.f32 0.0, %v838
        %v840 = vpop.f32.mrf.mxu0
        %v841 = vadd.f32 0.0, %v840
        %v842 = vpop.f32.mrf.mxu0
        %v843 = vadd.f32 0.0, %v842
        %844 = vmatprep.mubr.bf16.mxu0 0
        %845 = vmatmul.mubr.bf16.gmra.mxu0 %v622
        %v846 = vpop.f32.mrf.mxu0
        %v847 = vadd.f32 0.0, %v846
        %v848 = vpop.f32.mrf.mxu0
        %v849 = vadd.f32 0.0, %v848
        %v850 = vpop.f32.mrf.mxu0
        %v851 = vadd.f32 0.0, %v850
        %v852 = vpop.f32.mrf.mxu0
        %v853 = vadd.f32 0.0, %v852
        %854 = vmatprep.mubr.bf16.mxu0 0
        %855 = vmatmul.mubr.bf16.gmra.mxu0 %v623
        %v856 = vpop.f32.mrf.mxu0
        %v857 = vadd.f32 0.0, %v856
        %v858 = vpop.f32.mrf.mxu0
        %v859 = vadd.f32 0.0, %v858
        %v860 = vpop.f32.mrf.mxu0
        %v861 = vadd.f32 0.0, %v860
        %v862 = vpop.f32.mrf.mxu0
        %v863 = vadd.f32 0.0, %v862
        %864 = vdwg.mxu0
        %865 = vmatprep.subr.bf16.mxu0 0
        %866 = vmatpush1.bf16.msra.mxu0 %v727
        %867 = vmatprep.subr.bf16.mxu0 0
        %868 = vmatpush1.bf16.msra.mxu0 %v724
        %869 = vmatprep.subr.bf16.mxu0 0
        %870 = vmatpush1.bf16.msra.mxu0 %v721
        %871 = vmatprep.subr.bf16.mxu0 0
        %872 = vmatpush1.bf16.msra.mxu0 %v718
        %873 = vmatprep.subr.bf16.mxu0 0
        %874 = vmatpush1.bf16.msra.mxu0 %v715
        %875 = vmatprep.subr.bf16.mxu0 0
        %876 = vmatpush1.bf16.msra.mxu0 %v712
        %877 = vmatprep.subr.bf16.mxu0 0
        %878 = vmatpush1.bf16.msra.mxu0 %v709
        %879 = vmatprep.subr.bf16.mxu0 0
        %880 = vmatpush1.bf16.msra.mxu0 %v706
        %881 = vmatprep.subr.bf16.mxu0 0
        %882 = vmatpush2.bf16.msra.mxu0 0
        %883 = vmatprep.subr.bf16.mxu0 0
        %884 = vmatpush2.bf16.msra.mxu0 0
        %885 = vmatprep.subr.bf16.mxu0 0
        %886 = vmatpush2.bf16.msra.mxu0 0
        %887 = vmatprep.subr.bf16.mxu0 0
        %888 = vmatpush2.bf16.msra.mxu0 0
        %889 = vmatprep.subr.bf16.mxu0 0
        %890 = vmatpush2.bf16.msra.mxu0 0
        %891 = vmatprep.subr.bf16.mxu0 0
        %892 = vmatpush2.bf16.msra.mxu0 0
        %893 = vmatprep.subr.bf16.mxu0 0
        %894 = vmatpush2.bf16.msra.mxu0 0
        %895 = vmatprep.subr.bf16.mxu0 0
        %896 = vmatpush2.bf16.msra.mxu0 0
        %897 = vmatprep.mubr.bf16.mxu0 0
        %898 = vmatmul.mubr.bf16.gmra.mxu0 %v616
        %v899 = vpop.f32.mrf.mxu0
        %v900 = vadd.f32 0.0, %v899
        %v901 = vpop.f32.mrf.mxu0
        %v902 = vpop.f32.mrf.mxu0
        %v903 = vadd.f32 0.0, %v902
        %v904 = vpop.f32.mrf.mxu0
        %905 = vmatprep.mubr.bf16.mxu0 0
        %906 = vmatmul.mubr.bf16.gmra.mxu0 %v617
        %v907 = vpop.f32.mrf.mxu0
        %v908 = vadd.f32 0.0, %v907
        %v909 = vpop.f32.mrf.mxu0
        %v910 = vpop.f32.mrf.mxu0
        %v911 = vadd.f32 0.0, %v910
        %v912 = vpop.f32.mrf.mxu0
        %913 = vmatprep.mubr.bf16.mxu0 0
        %914 = vmatmul.mubr.bf16.gmra.mxu0 %v618
        %v915 = vpop.f32.mrf.mxu0
        %v916 = vadd.f32 0.0, %v915
        %v917 = vpop.f32.mrf.mxu0
        %v918 = vpop.f32.mrf.mxu0
        %v919 = vadd.f32 0.0, %v918
        %v920 = vpop.f32.mrf.mxu0
        %921 = vmatprep.mubr.bf16.mxu0 0
        %922 = vmatmul.mubr.bf16.gmra.mxu0 %v619
        %v923 = vpop.f32.mrf.mxu0
        %v924 = vadd.f32 0.0, %v923
        %v925 = vpop.f32.mrf.mxu0
        %v926 = vpop.f32.mrf.mxu0
        %v927 = vadd.f32 0.0, %v926
        %v928 = vpop.f32.mrf.mxu0
        %929 = vmatprep.mubr.bf16.mxu0 0
        %930 = vmatmul.mubr.bf16.gmra.mxu0 %v620
        %v931 = vpop.f32.mrf.mxu0
        %v932 = vadd.f32 0.0, %v931
        %v933 = vpop.f32.mrf.mxu0
        %v934 = vpop.f32.mrf.mxu0
        %v935 = vadd.f32 0.0, %v934
        %v936 = vpop.f32.mrf.mxu0
        %937 = vmatprep.mubr.bf16.mxu0 0
        %938 = vmatmul.mubr.bf16.gmra.mxu0 %v621
        %v939 = vpop.f32.mrf.mxu0
        %v940 = vadd.f32 0.0, %v939
        %v941 = vpop.f32.mrf.mxu0
        %v942 = vpop.f32.mrf.mxu0
        %v943 = vadd.f32 0.0, %v942
        %v944 = vpop.f32.mrf.mxu0
        %945 = vmatprep.mubr.bf16.mxu0 0
        %946 = vmatmul.mubr.bf16.gmra.mxu0 %v622
        %v947 = vpop.f32.mrf.mxu0
        %v948 = vadd.f32 0.0, %v947
        %v949 = vpop.f32.mrf.mxu0
        %v950 = vpop.f32.mrf.mxu0
        %v951 = vadd.f32 0.0, %v950
        %v952 = vpop.f32.mrf.mxu0
        %953 = vmatprep.mubr.bf16.mxu0 0
        %954 = vmatmul.mubr.bf16.gmra.mxu0 %v623
        %v955 = vpop.f32.mrf.mxu0
        %v956 = vadd.f32 0.0, %v955
        %v957 = vpop.f32.mrf.mxu0
        %v958 = vpop.f32.mrf.mxu0
        %v959 = vadd.f32 0.0, %v958
        %v960 = vpop.f32.mrf.mxu0
        %961 = vdwg.mxu0
        %v962 = vpack.c.bf16 %v520, %v519
        %v963 = vpack.c.bf16 %v522, %v521
        %v964 = vpack.c.bf16 %v524, %v523
        %v965 = vpack.c.bf16 %v526, %v525
        %v966 = vpack.c.bf16 %v528, %v527
        %v967 = vpack.c.bf16 %v530, %v529
        %v968 = vpack.c.bf16 %v532, %v531
        %v969 = vpack.c.bf16 %v534, %v533
        %v970 = vpack.c.bf16 %v536, %v535
        %v971 = vpack.c.bf16 %v538, %v537
        %v972 = vpack.c.bf16 %v540, %v539
        %v973 = vpack.c.bf16 %v542, %v541
        %v974 = vpack.c.bf16 %v544, %v543
        %v975 = vpack.c.bf16 %v546, %v545
        %v976 = vpack.c.bf16 %v548, %v547
        %v977 = vpack.c.bf16 %v550, %v549
        %v994 = vunpack.c.l.b16 %v599
        %v995 = vunpack.c.l.b16 %v600
        %v996 = vunpack.c.l.b16 %v601
        %v997 = vunpack.c.l.b16 %v602
        %v998 = vunpack.c.l.b16 %v603
        %v999 = vunpack.c.l.b16 %v604
        %v1000 = vunpack.c.l.b16 %v605
        %v1001 = vunpack.c.l.b16 %v606
        %v1002 = vunpack.c.l.b16 %v607
        %v1003 = vunpack.c.l.b16 %v608
        %v1004 = vunpack.c.l.b16 %v609
        %v1005 = vunpack.c.l.b16 %v610
        %v1006 = vunpack.c.l.b16 %v611
        %v1007 = vunpack.c.l.b16 %v612
        %v1008 = vunpack.c.l.b16 %v613
        %v1009 = vunpack.c.l.b16 %v614
        %v1010 = vpack.c.b16 %v995, %v994
        %v1011 = vpack.c.b16 %v997, %v996
        %v1012 = vpack.c.b16 %v999, %v998
        %v1013 = vpack.c.b16 %v1001, %v1000
        %v1014 = vpack.c.b16 %v1003, %v1002
        %v1015 = vpack.c.b16 %v1005, %v1004
        %v1016 = vpack.c.b16 %v1007, %v1006
        %v1017 = vpack.c.b16 %v1009, %v1008
        %1026 = vmatprep.subr.bf16.mxu0 0
        %1027 = vmatpush1.bf16.msra.mxu0 %v1017
        %1028 = vmatprep.subr.bf16.mxu0 0
        %1029 = vmatpush1.bf16.msra.mxu0 %v1016
        %1030 = vmatprep.subr.bf16.mxu0 0
        %1031 = vmatpush1.bf16.msra.mxu0 %v1015
        %1032 = vmatprep.subr.bf16.mxu0 0
        %1033 = vmatpush1.bf16.msra.mxu0 %v1014
        %1034 = vmatprep.subr.bf16.mxu0 0
        %1035 = vmatpush1.bf16.msra.mxu0 %v1013
        %1036 = vmatprep.subr.bf16.mxu0 0
        %1037 = vmatpush1.bf16.msra.mxu0 %v1012
        %1038 = vmatprep.subr.bf16.mxu0 0
        %1039 = vmatpush1.bf16.msra.mxu0 %v1011
        %1040 = vmatprep.subr.bf16.mxu0 0
        %1041 = vmatpush1.bf16.msra.mxu0 %v1010
        %1042 = vmatprep.subr.bf16.mxu0 0
        %1043 = vmatpush2.bf16.msra.mxu0 0
        %1044 = vmatprep.subr.bf16.mxu0 0
        %1045 = vmatpush2.bf16.msra.mxu0 0
        %1046 = vmatprep.subr.bf16.mxu0 0
        %1047 = vmatpush2.bf16.msra.mxu0 0
        %1048 = vmatprep.subr.bf16.mxu0 0
        %1049 = vmatpush2.bf16.msra.mxu0 0
        %1050 = vmatprep.subr.bf16.mxu0 0
        %1051 = vmatpush2.bf16.msra.mxu0 0
        %1052 = vmatprep.subr.bf16.mxu0 0
        %1053 = vmatpush2.bf16.msra.mxu0 0
        %1054 = vmatprep.subr.bf16.mxu0 0
        %1055 = vmatpush2.bf16.msra.mxu0 0
        %1056 = vmatprep.subr.bf16.mxu0 0
        %1057 = vmatpush2.bf16.msra.mxu0 0
        %1058 = vmatprep.mubr.bf16.mxu0 0
        %1059 = vmatmul.mubr.bf16.gmra.mxu0 %v962
        %v1060 = vpop.f32.mrf.mxu0
        %v1061 = vadd.f32 0.0, %v1060
        %v1062 = vpop.f32.mrf.mxu0
        %v1063 = vpop.f32.mrf.mxu0
        %v1064 = vadd.f32 0.0, %v1063
        %v1065 = vpop.f32.mrf.mxu0
        %1066 = vmatprep.mubr.bf16.mxu0 0
        %1067 = vmatmul.mubr.bf16.gmra.mxu0 %v963
        %v1068 = vpop.f32.mrf.mxu0
        %v1069 = vadd.f32 0.0, %v1068
        %v1070 = vpop.f32.mrf.mxu0
        %v1071 = vpop.f32.mrf.mxu0
        %v1072 = vadd.f32 0.0, %v1071
        %v1073 = vpop.f32.mrf.mxu0
        %1074 = vmatprep.mubr.bf16.mxu0 0
        %1075 = vmatmul.mubr.bf16.gmra.mxu0 %v964
        %v1076 = vpop.f32.mrf.mxu0
        %v1077 = vadd.f32 0.0, %v1076
        %v1078 = vpop.f32.mrf.mxu0
        %v1079 = vpop.f32.mrf.mxu0
        %v1080 = vadd.f32 0.0, %v1079
        %v1081 = vpop.f32.mrf.mxu0
        %1082 = vmatprep.mubr.bf16.mxu0 0
        %1083 = vmatmul.mubr.bf16.gmra.mxu0 %v965
        %v1084 = vpop.f32.mrf.mxu0
        %v1085 = vadd.f32 0.0, %v1084
        %v1086 = vpop.f32.mrf.mxu0
        %v1087 = vpop.f32.mrf.mxu0
        %v1088 = vadd.f32 0.0, %v1087
        %v1089 = vpop.f32.mrf.mxu0
        %1090 = vmatprep.mubr.bf16.mxu0 0
        %1091 = vmatmul.mubr.bf16.gmra.mxu0 %v966
        %v1092 = vpop.f32.mrf.mxu0
        %v1093 = vadd.f32 0.0, %v1092
        %v1094 = vpop.f32.mrf.mxu0
        %v1095 = vpop.f32.mrf.mxu0
        %v1096 = vadd.f32 0.0, %v1095
        %v1097 = vpop.f32.mrf.mxu0
        %1098 = vmatprep.mubr.bf16.mxu0 0
        %1099 = vmatmul.mubr.bf16.gmra.mxu0 %v967
        %v1100 = vpop.f32.mrf.mxu0
        %v1101 = vadd.f32 0.0, %v1100
        %v1102 = vpop.f32.mrf.mxu0
        %v1103 = vpop.f32.mrf.mxu0
        %v1104 = vadd.f32 0.0, %v1103
        %v1105 = vpop.f32.mrf.mxu0
        %1106 = vmatprep.mubr.bf16.mxu0 0
        %1107 = vmatmul.mubr.bf16.gmra.mxu0 %v968
        %v1108 = vpop.f32.mrf.mxu0
        %v1109 = vadd.f32 0.0, %v1108
        %v1110 = vpop.f32.mrf.mxu0
        %v1111 = vpop.f32.mrf.mxu0
        %v1112 = vadd.f32 0.0, %v1111
        %v1113 = vpop.f32.mrf.mxu0
        %1114 = vmatprep.mubr.bf16.mxu0 0
        %1115 = vmatmul.mubr.bf16.gmra.mxu0 %v969
        %v1116 = vpop.f32.mrf.mxu0
        %v1117 = vadd.f32 0.0, %v1116
        %v1118 = vpop.f32.mrf.mxu0
        %v1119 = vpop.f32.mrf.mxu0
        %v1120 = vadd.f32 0.0, %v1119
        %v1121 = vpop.f32.mrf.mxu0
        %1122 = vmatprep.mubr.bf16.mxu0 0
        %1123 = vmatmul.mubr.bf16.gmra.mxu0 %v970
        %v1124 = vpop.f32.mrf.mxu0
        %v1125 = vadd.f32 0.0, %v1124
        %v1126 = vpop.f32.mrf.mxu0
        %v1127 = vpop.f32.mrf.mxu0
        %v1128 = vadd.f32 0.0, %v1127
        %v1129 = vpop.f32.mrf.mxu0
        %1130 = vmatprep.mubr.bf16.mxu0 0
        %1131 = vmatmul.mubr.bf16.gmra.mxu0 %v971
        %v1132 = vpop.f32.mrf.mxu0
        %v1133 = vadd.f32 0.0, %v1132
        %v1134 = vpop.f32.mrf.mxu0
        %v1135 = vpop.f32.mrf.mxu0
        %v1136 = vadd.f32 0.0, %v1135
        %v1137 = vpop.f32.mrf.mxu0
        %1138 = vmatprep.mubr.bf16.mxu0 0
        %1139 = vmatmul.mubr.bf16.gmra.mxu0 %v972
        %v1140 = vpop.f32.mrf.mxu0
        %v1141 = vadd.f32 0.0, %v1140
        %v1142 = vpop.f32.mrf.mxu0
        %v1143 = vpop.f32.mrf.mxu0
        %v1144 = vadd.f32 0.0, %v1143
        %v1145 = vpop.f32.mrf.mxu0
        %1146 = vmatprep.mubr.bf16.mxu0 0
        %1147 = vmatmul.mubr.bf16.gmra.mxu0 %v973
        %v1148 = vpop.f32.mrf.mxu0
        %v1149 = vadd.f32 0.0, %v1148
        %v1150 = vpop.f32.mrf.mxu0
        %v1151 = vpop.f32.mrf.mxu0
        %v1152 = vadd.f32 0.0, %v1151
        %v1153 = vpop.f32.mrf.mxu0
        %1154 = vmatprep.mubr.bf16.mxu0 0
        %1155 = vmatmul.mubr.bf16.gmra.mxu0 %v974
        %v1156 = vpop.f32.mrf.mxu0
        %v1157 = vadd.f32 0.0, %v1156
        %v1158 = vpop.f32.mrf.mxu0
        %v1159 = vpop.f32.mrf.mxu0
        %v1160 = vadd.f32 0.0, %v1159
        %v1161 = vpop.f32.mrf.mxu0
        %1162 = vmatprep.mubr.bf16.mxu0 0
        %1163 = vmatmul.mubr.bf16.gmra.mxu0 %v975
        %v1164 = vpop.f32.mrf.mxu0
        %v1165 = vadd.f32 0.0, %v1164
        %v1166 = vpop.f32.mrf.mxu0
        %v1167 = vpop.f32.mrf.mxu0
        %v1168 = vadd.f32 0.0, %v1167
        %v1169 = vpop.f32.mrf.mxu0
        %1170 = vmatprep.mubr.bf16.mxu0 0
        %1171 = vmatmul.mubr.bf16.gmra.mxu0 %v976
        %v1172 = vpop.f32.mrf.mxu0
        %v1173 = vadd.f32 0.0, %v1172
        %v1174 = vpop.f32.mrf.mxu0
        %v1175 = vpop.f32.mrf.mxu0
        %v1176 = vadd.f32 0.0, %v1175
        %v1177 = vpop.f32.mrf.mxu0
        %1178 = vmatprep.mubr.bf16.mxu0 0
        %1179 = vmatmul.mubr.bf16.gmra.mxu0 %v977
        %v1180 = vpop.f32.mrf.mxu0
        %v1181 = vadd.f32 0.0, %v1180
        %v1182 = vpop.f32.mrf.mxu0
        %v1183 = vpop.f32.mrf.mxu0
        %v1184 = vadd.f32 0.0, %v1183
        %v1185 = vpop.f32.mrf.mxu0
        %1186 = vdwg.mxu0
        %v1187 = vadd.f32 %v787, %v1061
        %v1188 = vadd.f32 %v791, %v1064
        %v1189 = vadd.f32 %v797, %v1069
        %v1190 = vadd.f32 %v801, %v1072
        %v1191 = vadd.f32 %v807, %v1077
        %v1192 = vadd.f32 %v811, %v1080
        %v1193 = vadd.f32 %v817, %v1085
        %v1194 = vadd.f32 %v821, %v1088
        %v1195 = vadd.f32 %v827, %v1093
        %v1196 = vadd.f32 %v831, %v1096
        %v1197 = vadd.f32 %v837, %v1101
        %v1198 = vadd.f32 %v841, %v1104
        %v1199 = vadd.f32 %v847, %v1109
        %v1200 = vadd.f32 %v851, %v1112
        %v1201 = vadd.f32 %v857, %v1117
        %v1202 = vadd.f32 %v861, %v1120
        %v1203 = vlaneseq
        %v1204 = vshrl.u32 %v1203, 7
        %v1205 = vsub.s32 0, %v1204
        %v1206 = vrot.slane %v615, %v1205
        %v1207 = vadd.f32 %v1187, %v1206
        %v1208 = vadd.f32 %v1188, %v1206
        %v1209 = vadd.f32 %v1189, %v1206
        %v1210 = vadd.f32 %v1190, %v1206
        %v1211 = vadd.f32 %v1191, %v1206
        %v1212 = vadd.f32 %v1192, %v1206
        %v1213 = vadd.f32 %v1193, %v1206
        %v1214 = vadd.f32 %v1194, %v1206
        %v1215 = vadd.f32 %v1195, %v1206
        %v1216 = vadd.f32 %v1196, %v1206
        %v1217 = vadd.f32 %v1197, %v1206
        %v1218 = vadd.f32 %v1198, %v1206
        %v1219 = vadd.f32 %v1199, %v1206
        %v1220 = vadd.f32 %v1200, %v1206
        %v1221 = vadd.f32 %v1201, %v1206
        %v1222 = vadd.f32 %v1202, %v1206
        %v1223 = vadd.f32 %v789, %v1125
        %v1224 = vadd.f32 %v793, %v1128
        %v1225 = vadd.f32 %v799, %v1133
        %v1226 = vadd.f32 %v803, %v1136
        %v1227 = vadd.f32 %v809, %v1141
        %v1228 = vadd.f32 %v813, %v1144
        %v1229 = vadd.f32 %v819, %v1149
        %v1230 = vadd.f32 %v823, %v1152
        %v1231 = vadd.f32 %v829, %v1157
        %v1232 = vadd.f32 %v833, %v1160
        %v1233 = vadd.f32 %v839, %v1165
        %v1234 = vadd.f32 %v843, %v1168
        %v1235 = vadd.f32 %v849, %v1173
        %v1236 = vadd.f32 %v853, %v1176
        %v1237 = vadd.f32 %v859, %v1181
        %v1238 = vadd.f32 %v863, %v1184
        %v1239 = vlaneseq
        %v1240 = vshrl.u32 %v1239, 7
        %v1241 = vsub.s32 1, %v1240
        %v1242 = vrot.slane %v615, %v1241
        %v1243 = vadd.f32 %v1223, %v1242
        %v1244 = vadd.f32 %v1224, %v1242
        %v1245 = vadd.f32 %v1225, %v1242
        %v1246 = vadd.f32 %v1226, %v1242
        %v1247 = vadd.f32 %v1227, %v1242
        %v1248 = vadd.f32 %v1228, %v1242
        %v1249 = vadd.f32 %v1229, %v1242
        %v1250 = vadd.f32 %v1230, %v1242
        %v1251 = vadd.f32 %v1231, %v1242
        %v1252 = vadd.f32 %v1232, %v1242
        %v1253 = vadd.f32 %v1233, %v1242
        %v1254 = vadd.f32 %v1234, %v1242
        %v1255 = vadd.f32 %v1235, %v1242
        %v1256 = vadd.f32 %v1236, %v1242
        %v1257 = vadd.f32 %v1237, %v1242
        %v1258 = vadd.f32 %v1238, %v1242
        %vm1259 = vcmp.ge.f32.partialorder %v1207, 0.0
        %vm1260 = vcmp.ge.f32.partialorder %v1208, 0.0
        %vm1261 = vcmp.ge.f32.partialorder %v1209, 0.0
        %vm1262 = vcmp.ge.f32.partialorder %v1210, 0.0
        %vm1263 = vcmp.ge.f32.partialorder %v1211, 0.0
        %vm1264 = vcmp.ge.f32.partialorder %v1212, 0.0
        %vm1265 = vcmp.ge.f32.partialorder %v1213, 0.0
        %vm1266 = vcmp.ge.f32.partialorder %v1214, 0.0
        %vm1267 = vcmp.ge.f32.partialorder %v1215, 0.0
        %vm1268 = vcmp.ge.f32.partialorder %v1216, 0.0
        %vm1269 = vcmp.ge.f32.partialorder %v1217, 0.0
        %vm1270 = vcmp.ge.f32.partialorder %v1218, 0.0
        %vm1271 = vcmp.ge.f32.partialorder %v1219, 0.0
        %vm1272 = vcmp.ge.f32.partialorder %v1220, 0.0
        %vm1273 = vcmp.ge.f32.partialorder %v1221, 0.0
        %vm1274 = vcmp.ge.f32.partialorder %v1222, 0.0
        %v1275 = vmul.f32 %v1207, 0.2
        %v1276 = vmul.f32 %v1208, 0.2
        %v1277 = vmul.f32 %v1209, 0.2
        %v1278 = vmul.f32 %v1210, 0.2
        %v1279 = vmul.f32 %v1211, 0.2
        %v1280 = vmul.f32 %v1212, 0.2
        %v1281 = vmul.f32 %v1213, 0.2
        %v1282 = vmul.f32 %v1214, 0.2
        %v1283 = vmul.f32 %v1215, 0.2
        %v1284 = vmul.f32 %v1216, 0.2
        %v1285 = vmul.f32 %v1217, 0.2
        %v1286 = vmul.f32 %v1218, 0.2
        %v1287 = vmul.f32 %v1219, 0.2
        %v1288 = vmul.f32 %v1220, 0.2
        %v1289 = vmul.f32 %v1221, 0.2
        %v1290 = vmul.f32 %v1222, 0.2
        %v1291 = vsel %vm1259, %v1207, %v1275
        %v1292 = vsel %vm1260, %v1208, %v1276
        %v1293 = vsel %vm1261, %v1209, %v1277
        %v1294 = vsel %vm1262, %v1210, %v1278
        %v1295 = vsel %vm1263, %v1211, %v1279
        %v1296 = vsel %vm1264, %v1212, %v1280
        %v1297 = vsel %vm1265, %v1213, %v1281
        %v1298 = vsel %vm1266, %v1214, %v1282
        %v1299 = vsel %vm1267, %v1215, %v1283
        %v1300 = vsel %vm1268, %v1216, %v1284
        %v1301 = vsel %vm1269, %v1217, %v1285
        %v1302 = vsel %vm1270, %v1218, %v1286
        %v1303 = vsel %vm1271, %v1219, %v1287
        %v1304 = vsel %vm1272, %v1220, %v1288
        %v1305 = vsel %vm1273, %v1221, %v1289
        %v1306 = vsel %vm1274, %v1222, %v1290
        %1307 = vadd.xlane.f32.xlu0 %v1291
        %v1308 = vpop.xlane.xlu0 %1307
        %1309 = vadd.xlane.f32.xlu0 %v1292
        %v1310 = vpop.xlane.xlu0 %1309
        %1311 = vadd.xlane.f32.xlu0 %v1293
        %v1312 = vpop.xlane.xlu0 %1311
        %1313 = vadd.xlane.f32.xlu0 %v1294
        %v1314 = vpop.xlane.xlu0 %1313
        %1315 = vadd.xlane.f32.xlu0 %v1295
        %v1316 = vpop.xlane.xlu0 %1315
        %1317 = vadd.xlane.f32.xlu0 %v1296
        %v1318 = vpop.xlane.xlu0 %1317
        %1319 = vadd.xlane.f32.xlu0 %v1297
        %v1320 = vpop.xlane.xlu0 %1319
        %1321 = vadd.xlane.f32.xlu0 %v1298
        %v1322 = vpop.xlane.xlu0 %1321
        %1323 = vadd.xlane.f32.xlu0 %v1299
        %v1324 = vpop.xlane.xlu0 %1323
        %1325 = vadd.xlane.f32.xlu0 %v1300
        %v1326 = vpop.xlane.xlu0 %1325
        %1327 = vadd.xlane.f32.xlu0 %v1301
        %v1328 = vpop.xlane.xlu0 %1327
        %1329 = vadd.xlane.f32.xlu0 %v1302
        %v1330 = vpop.xlane.xlu0 %1329
        %1331 = vadd.xlane.f32.xlu0 %v1303
        %v1332 = vpop.xlane.xlu0 %1331
        %1333 = vadd.xlane.f32.xlu0 %v1304
        %v1334 = vpop.xlane.xlu0 %1333
        %1335 = vadd.xlane.f32.xlu0 %v1305
        %v1336 = vpop.xlane.xlu0 %1335
        %1337 = vadd.xlane.f32.xlu0 %v1306
        %v1338 = vpop.xlane.xlu0 %1337
        %v1339 = vrcp.pop 128.0
        %v1340 = vmul.f32 %v1308, %v1339
        %v1341 = vmul.f32 %v1310, %v1339
        %v1342 = vmul.f32 %v1312, %v1339
        %v1343 = vmul.f32 %v1314, %v1339
        %v1344 = vmul.f32 %v1316, %v1339
        %v1345 = vmul.f32 %v1318, %v1339
        %v1346 = vmul.f32 %v1320, %v1339
        %v1347 = vmul.f32 %v1322, %v1339
        %v1348 = vmul.f32 %v1324, %v1339
        %v1349 = vmul.f32 %v1326, %v1339
        %v1350 = vmul.f32 %v1328, %v1339
        %v1351 = vmul.f32 %v1330, %v1339
        %v1352 = vmul.f32 %v1332, %v1339
        %v1353 = vmul.f32 %v1334, %v1339
        %v1354 = vmul.f32 %v1336, %v1339
        %v1355 = vmul.f32 %v1338, %v1339
        %v1356 = vsub.f32 %v1291, %v1340
        %v1357 = vsub.f32 %v1292, %v1341
        %v1358 = vsub.f32 %v1293, %v1342
        %v1359 = vsub.f32 %v1294, %v1343
        %v1360 = vsub.f32 %v1295, %v1344
        %v1361 = vsub.f32 %v1296, %v1345
        %v1362 = vsub.f32 %v1297, %v1346
        %v1363 = vsub.f32 %v1298, %v1347
        %v1364 = vsub.f32 %v1299, %v1348
        %v1365 = vsub.f32 %v1300, %v1349
        %v1366 = vsub.f32 %v1301, %v1350
        %v1367 = vsub.f32 %v1302, %v1351
        %v1368 = vsub.f32 %v1303, %v1352
        %v1369 = vsub.f32 %v1304, %v1353
        %v1370 = vsub.f32 %v1305, %v1354
        %v1371 = vsub.f32 %v1306, %v1355
        %v1372 = vmul.f32 %v1356, %v1356
        %v1373 = vmul.f32 %v1357, %v1357
        %v1374 = vmul.f32 %v1358, %v1358
        %v1375 = vmul.f32 %v1359, %v1359
        %v1376 = vmul.f32 %v1360, %v1360
        %v1377 = vmul.f32 %v1361, %v1361
        %v1378 = vmul.f32 %v1362, %v1362
        %v1379 = vmul.f32 %v1363, %v1363
        %v1380 = vmul.f32 %v1364, %v1364
        %v1381 = vmul.f32 %v1365, %v1365
        %v1382 = vmul.f32 %v1366, %v1366
        %v1383 = vmul.f32 %v1367, %v1367
        %v1384 = vmul.f32 %v1368, %v1368
        %v1385 = vmul.f32 %v1369, %v1369
        %v1386 = vmul.f32 %v1370, %v1370
        %v1387 = vmul.f32 %v1371, %v1371
        %1388 = vadd.xlane.f32.xlu0 %v1372
        %v1389 = vpop.xlane.xlu0 %1388
        %1390 = vadd.xlane.f32.xlu0 %v1373
        %v1391 = vpop.xlane.xlu0 %1390
        %1392 = vadd.xlane.f32.xlu0 %v1374
        %v1393 = vpop.xlane.xlu0 %1392
        %1394 = vadd.xlane.f32.xlu0 %v1375
        %v1395 = vpop.xlane.xlu0 %1394
        %1396 = vadd.xlane.f32.xlu0 %v1376
        %v1397 = vpop.xlane.xlu0 %1396
        %1398 = vadd.xlane.f32.xlu0 %v1377
        %v1399 = vpop.xlane.xlu0 %1398
        %1400 = vadd.xlane.f32.xlu0 %v1378
        %v1401 = vpop.xlane.xlu0 %1400
        %1402 = vadd.xlane.f32.xlu0 %v1379
        %v1403 = vpop.xlane.xlu0 %1402
        %1404 = vadd.xlane.f32.xlu0 %v1380
        %v1405 = vpop.xlane.xlu0 %1404
        %1406 = vadd.xlane.f32.xlu0 %v1381
        %v1407 = vpop.xlane.xlu0 %1406
        %1408 = vadd.xlane.f32.xlu0 %v1382
        %v1409 = vpop.xlane.xlu0 %1408
        %1410 = vadd.xlane.f32.xlu0 %v1383
        %v1411 = vpop.xlane.xlu0 %1410
        %1412 = vadd.xlane.f32.xlu0 %v1384
        %v1413 = vpop.xlane.xlu0 %1412
        %1414 = vadd.xlane.f32.xlu0 %v1385
        %v1415 = vpop.xlane.xlu0 %1414
        %1416 = vadd.xlane.f32.xlu0 %v1386
        %v1417 = vpop.xlane.xlu0 %1416
        %1418 = vadd.xlane.f32.xlu0 %v1387
        %v1419 = vpop.xlane.xlu0 %1418
        %v1420 = vmul.f32 %v1389, %v1339
        %v1421 = vmul.f32 %v1391, %v1339
        %v1422 = vmul.f32 %v1393, %v1339
        %v1423 = vmul.f32 %v1395, %v1339
        %v1424 = vmul.f32 %v1397, %v1339
        %v1425 = vmul.f32 %v1399, %v1339
        %v1426 = vmul.f32 %v1401, %v1339
        %v1427 = vmul.f32 %v1403, %v1339
        %v1428 = vmul.f32 %v1405, %v1339
        %v1429 = vmul.f32 %v1407, %v1339
        %v1430 = vmul.f32 %v1409, %v1339
        %v1431 = vmul.f32 %v1411, %v1339
        %v1432 = vmul.f32 %v1413, %v1339
        %v1433 = vmul.f32 %v1415, %v1339
        %v1434 = vmul.f32 %v1417, %v1339
        %v1435 = vmul.f32 %v1419, %v1339
        %v1436 = vadd.f32 %v1420, 1e-05
        %v1437 = vadd.f32 %v1421, 1e-05
        %v1438 = vadd.f32 %v1422, 1e-05
        %v1439 = vadd.f32 %v1423, 1e-05
        %v1440 = vadd.f32 %v1424, 1e-05
        %v1441 = vadd.f32 %v1425, 1e-05
        %v1442 = vadd.f32 %v1426, 1e-05
        %v1443 = vadd.f32 %v1427, 1e-05
        %v1444 = vadd.f32 %v1428, 1e-05
        %v1445 = vadd.f32 %v1429, 1e-05
        %v1446 = vadd.f32 %v1430, 1e-05
        %v1447 = vadd.f32 %v1431, 1e-05
        %v1448 = vadd.f32 %v1432, 1e-05
        %v1449 = vadd.f32 %v1433, 1e-05
        %v1450 = vadd.f32 %v1434, 1e-05
        %v1451 = vadd.f32 %v1435, 1e-05
        %v1452 = vrsqrt.pop %v1436
        %v1453 = vrsqrt.pop %v1437
        %v1454 = vrsqrt.pop %v1438
        %v1455 = vrsqrt.pop %v1439
        %v1456 = vrsqrt.pop %v1440
        %v1457 = vrsqrt.pop %v1441
        %v1458 = vrsqrt.pop %v1442
        %v1459 = vrsqrt.pop %v1443
        %v1460 = vrsqrt.pop %v1444
        %v1461 = vrsqrt.pop %v1445
        %v1462 = vrsqrt.pop %v1446
        %v1463 = vrsqrt.pop %v1447
        %v1464 = vrsqrt.pop %v1448
        %v1465 = vrsqrt.pop %v1449
        %v1466 = vrsqrt.pop %v1450
        %v1467 = vrsqrt.pop %v1451
        %v1468 = vmul.f32 %v1356, %v1452
        %v1469 = vmul.f32 %v1357, %v1453
        %v1470 = vmul.f32 %v1358, %v1454
        %v1471 = vmul.f32 %v1359, %v1455
        %v1472 = vmul.f32 %v1360, %v1456
        %v1473 = vmul.f32 %v1361, %v1457
        %v1474 = vmul.f32 %v1362, %v1458
        %v1475 = vmul.f32 %v1363, %v1459
        %v1476 = vmul.f32 %v1364, %v1460
        %v1477 = vmul.f32 %v1365, %v1461
        %v1478 = vmul.f32 %v1366, %v1462
        %v1479 = vmul.f32 %v1367, %v1463
        %v1480 = vmul.f32 %v1368, %v1464
        %v1481 = vmul.f32 %v1369, %v1465
        %v1482 = vmul.f32 %v1370, %v1466
        %v1483 = vmul.f32 %v1371, %v1467
        %v1484 = vlaneseq
        %v1485 = vshrl.u32 %v1484, 7
        %v1486 = vsub.s32 2, %v1485
        %v1487 = vrot.slane %v615, %v1486
        %v1488 = vmul.f32 %v1468, %v1487
        %v1489 = vmul.f32 %v1469, %v1487
        %v1490 = vmul.f32 %v1470, %v1487
        %v1491 = vmul.f32 %v1471, %v1487
        %v1492 = vmul.f32 %v1472, %v1487
        %v1493 = vmul.f32 %v1473, %v1487
        %v1494 = vmul.f32 %v1474, %v1487
        %v1495 = vmul.f32 %v1475, %v1487
        %v1496 = vmul.f32 %v1476, %v1487
        %v1497 = vmul.f32 %v1477, %v1487
        %v1498 = vmul.f32 %v1478, %v1487
        %v1499 = vmul.f32 %v1479, %v1487
        %v1500 = vmul.f32 %v1480, %v1487
        %v1501 = vmul.f32 %v1481, %v1487
        %v1502 = vmul.f32 %v1482, %v1487
        %v1503 = vmul.f32 %v1483, %v1487
        %v1504 = vlaneseq
        %v1505 = vshrl.u32 %v1504, 7
        %v1506 = vsub.s32 3, %v1505
        %v1507 = vrot.slane %v615, %v1506
        %v1508 = vadd.f32 %v1488, %v1507
        %v1509 = vadd.f32 %v1489, %v1507
        %v1510 = vadd.f32 %v1490, %v1507
        %v1511 = vadd.f32 %v1491, %v1507
        %v1512 = vadd.f32 %v1492, %v1507
        %v1513 = vadd.f32 %v1493, %v1507
        %v1514 = vadd.f32 %v1494, %v1507
        %v1515 = vadd.f32 %v1495, %v1507
        %v1516 = vadd.f32 %v1496, %v1507
        %v1517 = vadd.f32 %v1497, %v1507
        %v1518 = vadd.f32 %v1498, %v1507
        %v1519 = vadd.f32 %v1499, %v1507
        %v1520 = vadd.f32 %v1500, %v1507
        %v1521 = vadd.f32 %v1501, %v1507
        %v1522 = vadd.f32 %v1502, %v1507
        %v1523 = vadd.f32 %v1503, %v1507
        %v1524 = vadd.f32 %v1508, %v519
        %v1525 = vadd.f32 %v1509, %v520
        %v1526 = vadd.f32 %v1510, %v521
        %v1527 = vadd.f32 %v1511, %v522
        %v1528 = vadd.f32 %v1512, %v523
        %v1529 = vadd.f32 %v1513, %v524
        %v1530 = vadd.f32 %v1514, %v525
        %v1531 = vadd.f32 %v1515, %v526
        %v1532 = vadd.f32 %v1516, %v527
        %v1533 = vadd.f32 %v1517, %v528
        %v1534 = vadd.f32 %v1518, %v529
        %v1535 = vadd.f32 %v1519, %v530
        %v1536 = vadd.f32 %v1520, %v531
        %v1537 = vadd.f32 %v1521, %v532
        %v1538 = vadd.f32 %v1522, %v533
        %v1539 = vadd.f32 %v1523, %v534
        %vm1540 = vcmp.ge.f32.partialorder %v1243, 0.0
        %vm1541 = vcmp.ge.f32.partialorder %v1244, 0.0
        %vm1542 = vcmp.ge.f32.partialorder %v1245, 0.0
        %vm1543 = vcmp.ge.f32.partialorder %v1246, 0.0
        %vm1544 = vcmp.ge.f32.partialorder %v1247, 0.0
        %vm1545 = vcmp.ge.f32.partialorder %v1248, 0.0
        %vm1546 = vcmp.ge.f32.partialorder %v1249, 0.0
        %vm1547 = vcmp.ge.f32.partialorder %v1250, 0.0
        %vm1548 = vcmp.ge.f32.partialorder %v1251, 0.0
        %vm1549 = vcmp.ge.f32.partialorder %v1252, 0.0
        %vm1550 = vcmp.ge.f32.partialorder %v1253, 0.0
        %vm1551 = vcmp.ge.f32.partialorder %v1254, 0.0
        %vm1552 = vcmp.ge.f32.partialorder %v1255, 0.0
        %vm1553 = vcmp.ge.f32.partialorder %v1256, 0.0
        %vm1554 = vcmp.ge.f32.partialorder %v1257, 0.0
        %vm1555 = vcmp.ge.f32.partialorder %v1258, 0.0
        %v1556 = vmul.f32 %v1243, 0.2
        %v1557 = vmul.f32 %v1244, 0.2
        %v1558 = vmul.f32 %v1245, 0.2
        %v1559 = vmul.f32 %v1246, 0.2
        %v1560 = vmul.f32 %v1247, 0.2
        %v1561 = vmul.f32 %v1248, 0.2
        %v1562 = vmul.f32 %v1249, 0.2
        %v1563 = vmul.f32 %v1250, 0.2
        %v1564 = vmul.f32 %v1251, 0.2
        %v1565 = vmul.f32 %v1252, 0.2
        %v1566 = vmul.f32 %v1253, 0.2
        %v1567 = vmul.f32 %v1254, 0.2
        %v1568 = vmul.f32 %v1255, 0.2
        %v1569 = vmul.f32 %v1256, 0.2
        %v1570 = vmul.f32 %v1257, 0.2
        %v1571 = vmul.f32 %v1258, 0.2
        %v1572 = vsel %vm1540, %v1243, %v1556
        %v1573 = vsel %vm1541, %v1244, %v1557
        %v1574 = vsel %vm1542, %v1245, %v1558
        %v1575 = vsel %vm1543, %v1246, %v1559
        %v1576 = vsel %vm1544, %v1247, %v1560
        %v1577 = vsel %vm1545, %v1248, %v1561
        %v1578 = vsel %vm1546, %v1249, %v1562
        %v1579 = vsel %vm1547, %v1250, %v1563
        %v1580 = vsel %vm1548, %v1251, %v1564
        %v1581 = vsel %vm1549, %v1252, %v1565
        %v1582 = vsel %vm1550, %v1253, %v1566
        %v1583 = vsel %vm1551, %v1254, %v1567
        %v1584 = vsel %vm1552, %v1255, %v1568
        %v1585 = vsel %vm1553, %v1256, %v1569
        %v1586 = vsel %vm1554, %v1257, %v1570
        %v1587 = vsel %vm1555, %v1258, %v1571
        %1588 = vadd.xlane.f32.xlu0 %v1572
        %v1589 = vpop.xlane.xlu0 %1588
        %1590 = vadd.xlane.f32.xlu0 %v1573
        %v1591 = vpop.xlane.xlu0 %1590
        %1592 = vadd.xlane.f32.xlu0 %v1574
        %v1593 = vpop.xlane.xlu0 %1592
        %1594 = vadd.xlane.f32.xlu0 %v1575
        %v1595 = vpop.xlane.xlu0 %1594
        %1596 = vadd.xlane.f32.xlu0 %v1576
        %v1597 = vpop.xlane.xlu0 %1596
        %1598 = vadd.xlane.f32.xlu0 %v1577
        %v1599 = vpop.xlane.xlu0 %1598
        %1600 = vadd.xlane.f32.xlu0 %v1578
        %v1601 = vpop.xlane.xlu0 %1600
        %1602 = vadd.xlane.f32.xlu0 %v1579
        %v1603 = vpop.xlane.xlu0 %1602
        %1604 = vadd.xlane.f32.xlu0 %v1580
        %v1605 = vpop.xlane.xlu0 %1604
        %1606 = vadd.xlane.f32.xlu0 %v1581
        %v1607 = vpop.xlane.xlu0 %1606
        %1608 = vadd.xlane.f32.xlu0 %v1582
        %v1609 = vpop.xlane.xlu0 %1608
        %1610 = vadd.xlane.f32.xlu0 %v1583
        %v1611 = vpop.xlane.xlu0 %1610
        %1612 = vadd.xlane.f32.xlu0 %v1584
        %v1613 = vpop.xlane.xlu0 %1612
        %1614 = vadd.xlane.f32.xlu0 %v1585
        %v1615 = vpop.xlane.xlu0 %1614
        %1616 = vadd.xlane.f32.xlu0 %v1586
        %v1617 = vpop.xlane.xlu0 %1616
        %1618 = vadd.xlane.f32.xlu0 %v1587
        %v1619 = vpop.xlane.xlu0 %1618
        %v1620 = vmul.f32 %v1589, %v1339
        %v1621 = vmul.f32 %v1591, %v1339
        %v1622 = vmul.f32 %v1593, %v1339
        %v1623 = vmul.f32 %v1595, %v1339
        %v1624 = vmul.f32 %v1597, %v1339
        %v1625 = vmul.f32 %v1599, %v1339
        %v1626 = vmul.f32 %v1601, %v1339
        %v1627 = vmul.f32 %v1603, %v1339
        %v1628 = vmul.f32 %v1605, %v1339
        %v1629 = vmul.f32 %v1607, %v1339
        %v1630 = vmul.f32 %v1609, %v1339
        %v1631 = vmul.f32 %v1611, %v1339
        %v1632 = vmul.f32 %v1613, %v1339
        %v1633 = vmul.f32 %v1615, %v1339
        %v1634 = vmul.f32 %v1617, %v1339
        %v1635 = vmul.f32 %v1619, %v1339
        %v1636 = vsub.f32 %v1572, %v1620
        %v1637 = vsub.f32 %v1573, %v1621
        %v1638 = vsub.f32 %v1574, %v1622
        %v1639 = vsub.f32 %v1575, %v1623
        %v1640 = vsub.f32 %v1576, %v1624
        %v1641 = vsub.f32 %v1577, %v1625
        %v1642 = vsub.f32 %v1578, %v1626
        %v1643 = vsub.f32 %v1579, %v1627
        %v1644 = vsub.f32 %v1580, %v1628
        %v1645 = vsub.f32 %v1581, %v1629
        %v1646 = vsub.f32 %v1582, %v1630
        %v1647 = vsub.f32 %v1583, %v1631
        %v1648 = vsub.f32 %v1584, %v1632
        %v1649 = vsub.f32 %v1585, %v1633
        %v1650 = vsub.f32 %v1586, %v1634
        %v1651 = vsub.f32 %v1587, %v1635
        %v1652 = vmul.f32 %v1636, %v1636
        %v1653 = vmul.f32 %v1637, %v1637
        %v1654 = vmul.f32 %v1638, %v1638
        %v1655 = vmul.f32 %v1639, %v1639
        %v1656 = vmul.f32 %v1640, %v1640
        %v1657 = vmul.f32 %v1641, %v1641
        %v1658 = vmul.f32 %v1642, %v1642
        %v1659 = vmul.f32 %v1643, %v1643
        %v1660 = vmul.f32 %v1644, %v1644
        %v1661 = vmul.f32 %v1645, %v1645
        %v1662 = vmul.f32 %v1646, %v1646
        %v1663 = vmul.f32 %v1647, %v1647
        %v1664 = vmul.f32 %v1648, %v1648
        %v1665 = vmul.f32 %v1649, %v1649
        %v1666 = vmul.f32 %v1650, %v1650
        %v1667 = vmul.f32 %v1651, %v1651
        %1668 = vadd.xlane.f32.xlu0 %v1652
        %v1669 = vpop.xlane.xlu0 %1668
        %1670 = vadd.xlane.f32.xlu0 %v1653
        %v1671 = vpop.xlane.xlu0 %1670
        %1672 = vadd.xlane.f32.xlu0 %v1654
        %v1673 = vpop.xlane.xlu0 %1672
        %1674 = vadd.xlane.f32.xlu0 %v1655
        %v1675 = vpop.xlane.xlu0 %1674
        %1676 = vadd.xlane.f32.xlu0 %v1656
        %v1677 = vpop.xlane.xlu0 %1676
        %1678 = vadd.xlane.f32.xlu0 %v1657
        %v1679 = vpop.xlane.xlu0 %1678
        %1680 = vadd.xlane.f32.xlu0 %v1658
        %v1681 = vpop.xlane.xlu0 %1680
        %1682 = vadd.xlane.f32.xlu0 %v1659
        %v1683 = vpop.xlane.xlu0 %1682
        %1684 = vadd.xlane.f32.xlu0 %v1660
        %v1685 = vpop.xlane.xlu0 %1684
        %1686 = vadd.xlane.f32.xlu0 %v1661
        %v1687 = vpop.xlane.xlu0 %1686
        %1688 = vadd.xlane.f32.xlu0 %v1662
        %v1689 = vpop.xlane.xlu0 %1688
        %1690 = vadd.xlane.f32.xlu0 %v1663
        %v1691 = vpop.xlane.xlu0 %1690
        %1692 = vadd.xlane.f32.xlu0 %v1664
        %v1693 = vpop.xlane.xlu0 %1692
        %1694 = vadd.xlane.f32.xlu0 %v1665
        %v1695 = vpop.xlane.xlu0 %1694
        %1696 = vadd.xlane.f32.xlu0 %v1666
        %v1697 = vpop.xlane.xlu0 %1696
        %1698 = vadd.xlane.f32.xlu0 %v1667
        %v1699 = vpop.xlane.xlu0 %1698
        %v1700 = vmul.f32 %v1669, %v1339
        %v1701 = vmul.f32 %v1671, %v1339
        %v1702 = vmul.f32 %v1673, %v1339
        %v1703 = vmul.f32 %v1675, %v1339
        %v1704 = vmul.f32 %v1677, %v1339
        %v1705 = vmul.f32 %v1679, %v1339
        %v1706 = vmul.f32 %v1681, %v1339
        %v1707 = vmul.f32 %v1683, %v1339
        %v1708 = vmul.f32 %v1685, %v1339
        %v1709 = vmul.f32 %v1687, %v1339
        %v1710 = vmul.f32 %v1689, %v1339
        %v1711 = vmul.f32 %v1691, %v1339
        %v1712 = vmul.f32 %v1693, %v1339
        %v1713 = vmul.f32 %v1695, %v1339
        %v1714 = vmul.f32 %v1697, %v1339
        %v1715 = vmul.f32 %v1699, %v1339
        %v1716 = vadd.f32 %v1700, 1e-05
        %v1717 = vadd.f32 %v1701, 1e-05
        %v1718 = vadd.f32 %v1702, 1e-05
        %v1719 = vadd.f32 %v1703, 1e-05
        %v1720 = vadd.f32 %v1704, 1e-05
        %v1721 = vadd.f32 %v1705, 1e-05
        %v1722 = vadd.f32 %v1706, 1e-05
        %v1723 = vadd.f32 %v1707, 1e-05
        %v1724 = vadd.f32 %v1708, 1e-05
        %v1725 = vadd.f32 %v1709, 1e-05
        %v1726 = vadd.f32 %v1710, 1e-05
        %v1727 = vadd.f32 %v1711, 1e-05
        %v1728 = vadd.f32 %v1712, 1e-05
        %v1729 = vadd.f32 %v1713, 1e-05
        %v1730 = vadd.f32 %v1714, 1e-05
        %v1731 = vadd.f32 %v1715, 1e-05
        %v1732 = vrsqrt.pop %v1716
        %v1733 = vrsqrt.pop %v1717
        %v1734 = vrsqrt.pop %v1718
        %v1735 = vrsqrt.pop %v1719
        %v1736 = vrsqrt.pop %v1720
        %v1737 = vrsqrt.pop %v1721
        %v1738 = vrsqrt.pop %v1722
        %v1739 = vrsqrt.pop %v1723
        %v1740 = vrsqrt.pop %v1724
        %v1741 = vrsqrt.pop %v1725
        %v1742 = vrsqrt.pop %v1726
        %v1743 = vrsqrt.pop %v1727
        %v1744 = vrsqrt.pop %v1728
        %v1745 = vrsqrt.pop %v1729
        %v1746 = vrsqrt.pop %v1730
        %v1747 = vrsqrt.pop %v1731
        %v1748 = vmul.f32 %v1636, %v1732
        %v1749 = vmul.f32 %v1637, %v1733
        %v1750 = vmul.f32 %v1638, %v1734
        %v1751 = vmul.f32 %v1639, %v1735
        %v1752 = vmul.f32 %v1640, %v1736
        %v1753 = vmul.f32 %v1641, %v1737
        %v1754 = vmul.f32 %v1642, %v1738
        %v1755 = vmul.f32 %v1643, %v1739
        %v1756 = vmul.f32 %v1644, %v1740
        %v1757 = vmul.f32 %v1645, %v1741
        %v1758 = vmul.f32 %v1646, %v1742
        %v1759 = vmul.f32 %v1647, %v1743
        %v1760 = vmul.f32 %v1648, %v1744
        %v1761 = vmul.f32 %v1649, %v1745
        %v1762 = vmul.f32 %v1650, %v1746
        %v1763 = vmul.f32 %v1651, %v1747
        %v1764 = vlaneseq
        %v1765 = vshrl.u32 %v1764, 7
        %v1766 = vsub.s32 4, %v1765
        %v1767 = vrot.slane %v615, %v1766
        %v1768 = vmul.f32 %v1748, %v1767
        %v1769 = vmul.f32 %v1749, %v1767
        %v1770 = vmul.f32 %v1750, %v1767
        %v1771 = vmul.f32 %v1751, %v1767
        %v1772 = vmul.f32 %v1752, %v1767
        %v1773 = vmul.f32 %v1753, %v1767
        %v1774 = vmul.f32 %v1754, %v1767
        %v1775 = vmul.f32 %v1755, %v1767
        %v1776 = vmul.f32 %v1756, %v1767
        %v1777 = vmul.f32 %v1757, %v1767
        %v1778 = vmul.f32 %v1758, %v1767
        %v1779 = vmul.f32 %v1759, %v1767
        %v1780 = vmul.f32 %v1760, %v1767
        %v1781 = vmul.f32 %v1761, %v1767
        %v1782 = vmul.f32 %v1762, %v1767
        %v1783 = vmul.f32 %v1763, %v1767
        %v1784 = vlaneseq
        %v1785 = vshrl.u32 %v1784, 7
        %v1786 = vsub.s32 5, %v1785
        %v1787 = vrot.slane %v615, %v1786
        %v1788 = vadd.f32 %v1768, %v1787
        %v1789 = vadd.f32 %v1769, %v1787
        %v1790 = vadd.f32 %v1770, %v1787
        %v1791 = vadd.f32 %v1771, %v1787
        %v1792 = vadd.f32 %v1772, %v1787
        %v1793 = vadd.f32 %v1773, %v1787
        %v1794 = vadd.f32 %v1774, %v1787
        %v1795 = vadd.f32 %v1775, %v1787
        %v1796 = vadd.f32 %v1776, %v1787
        %v1797 = vadd.f32 %v1777, %v1787
        %v1798 = vadd.f32 %v1778, %v1787
        %v1799 = vadd.f32 %v1779, %v1787
        %v1800 = vadd.f32 %v1780, %v1787
        %v1801 = vadd.f32 %v1781, %v1787
        %v1802 = vadd.f32 %v1782, %v1787
        %v1803 = vadd.f32 %v1783, %v1787
        %v1804 = vadd.f32 %v1788, %v535
        %v1805 = vadd.f32 %v1789, %v536
        %v1806 = vadd.f32 %v1790, %v537
        %v1807 = vadd.f32 %v1791, %v538
        %v1808 = vadd.f32 %v1792, %v539
        %v1809 = vadd.f32 %v1793, %v540
        %v1810 = vadd.f32 %v1794, %v541
        %v1811 = vadd.f32 %v1795, %v542
        %v1812 = vadd.f32 %v1796, %v543
        %v1813 = vadd.f32 %v1797, %v544
        %v1814 = vadd.f32 %v1798, %v545
        %v1815 = vadd.f32 %v1799, %v546
        %v1816 = vadd.f32 %v1800, %v547
        %v1817 = vadd.f32 %v1801, %v548
        %v1818 = vadd.f32 %v1802, %v549
        %v1819 = vadd.f32 %v1803, %v550
        %v1820 = vpack.c.bf16 %v903, %v900
        %v1821 = vpack.c.bf16 %v911, %v908
        %v1822 = vpack.c.bf16 %v919, %v916
        %v1823 = vpack.c.bf16 %v927, %v924
        %v1824 = vpack.c.bf16 %v935, %v932
        %v1825 = vpack.c.bf16 %v943, %v940
        %v1826 = vpack.c.bf16 %v951, %v948
        %v1827 = vpack.c.bf16 %v959, %v956
        %v1828 = vmul.f32 %v900, %v519
        %v1829 = vmul.f32 %v903, %v520
        %v1830 = vmul.f32 %v908, %v521
        %v1831 = vmul.f32 %v911, %v522
        %v1832 = vmul.f32 %v916, %v523
        %v1833 = vmul.f32 %v919, %v524
        %v1834 = vmul.f32 %v924, %v525
        %v1835 = vmul.f32 %v927, %v526
        %v1836 = vmul.f32 %v932, %v527
        %v1837 = vmul.f32 %v935, %v528
        %v1838 = vmul.f32 %v940, %v529
        %v1839 = vmul.f32 %v943, %v530
        %v1840 = vmul.f32 %v948, %v531
        %v1841 = vmul.f32 %v951, %v532
        %v1842 = vmul.f32 %v956, %v533
        %v1843 = vmul.f32 %v959, %v534
        %vm1844 = vcmp.eq.f32.partialorder %v551, 0.0
        %vm1845 = vcmp.eq.f32.partialorder %v552, 0.0
        %vm1846 = vcmp.eq.f32.partialorder %v553, 0.0
        %vm1847 = vcmp.eq.f32.partialorder %v554, 0.0
        %vm1848 = vcmp.eq.f32.partialorder %v555, 0.0
        %vm1849 = vcmp.eq.f32.partialorder %v556, 0.0
        %vm1850 = vcmp.eq.f32.partialorder %v557, 0.0
        %vm1851 = vcmp.eq.f32.partialorder %v558, 0.0
        %vm1852 = vcmp.eq.f32.partialorder %v559, 0.0
        %vm1853 = vcmp.eq.f32.partialorder %v560, 0.0
        %vm1854 = vcmp.eq.f32.partialorder %v561, 0.0
        %vm1855 = vcmp.eq.f32.partialorder %v562, 0.0
        %vm1856 = vcmp.eq.f32.partialorder %v563, 0.0
        %vm1857 = vcmp.eq.f32.partialorder %v564, 0.0
        %vm1858 = vcmp.eq.f32.partialorder %v565, 0.0
        %vm1859 = vcmp.eq.f32.partialorder %v566, 0.0
        %v1860 = vsel %vm1844, -1e+30, 0.0
        %v1861 = vsel %vm1845, -1e+30, 0.0
        %v1862 = vsel %vm1846, -1e+30, 0.0
        %v1863 = vsel %vm1847, -1e+30, 0.0
        %v1864 = vsel %vm1848, -1e+30, 0.0
        %v1865 = vsel %vm1849, -1e+30, 0.0
        %v1866 = vsel %vm1850, -1e+30, 0.0
        %v1867 = vsel %vm1851, -1e+30, 0.0
        %v1868 = vsel %vm1852, -1e+30, 0.0
        %v1869 = vsel %vm1853, -1e+30, 0.0
        %v1870 = vsel %vm1854, -1e+30, 0.0
        %v1871 = vsel %vm1855, -1e+30, 0.0
        %v1872 = vsel %vm1856, -1e+30, 0.0
        %v1873 = vsel %vm1857, -1e+30, 0.0
        %v1874 = vsel %vm1858, -1e+30, 0.0
        %v1875 = vsel %vm1859, -1e+30, 0.0
        %vm1876 = vcmask 261120
        %v1877 = vsel %vm1876, %v1828, 0.0
        %1878 = vadd.xlane.f32.xlu0 %v1877
        %v1879 = vpop.xlane.xlu0 %1878
        %v1880 = vsel %vm1876, %v1829, 0.0
        %1881 = vadd.xlane.f32.xlu0 %v1880
        %v1882 = vpop.xlane.xlu0 %1881
        %v1883 = vsel %vm1876, %v1830, 0.0
        %1884 = vadd.xlane.f32.xlu0 %v1883
        %v1885 = vpop.xlane.xlu0 %1884
        %v1886 = vsel %vm1876, %v1831, 0.0
        %1887 = vadd.xlane.f32.xlu0 %v1886
        %v1888 = vpop.xlane.xlu0 %1887
        %v1889 = vsel %vm1876, %v1832, 0.0
        %1890 = vadd.xlane.f32.xlu0 %v1889
        %v1891 = vpop.xlane.xlu0 %1890
        %v1892 = vsel %vm1876, %v1833, 0.0
        %1893 = vadd.xlane.f32.xlu0 %v1892
        %v1894 = vpop.xlane.xlu0 %1893
        %v1895 = vsel %vm1876, %v1834, 0.0
        %1896 = vadd.xlane.f32.xlu0 %v1895
        %v1897 = vpop.xlane.xlu0 %1896
        %v1898 = vsel %vm1876, %v1835, 0.0
        %1899 = vadd.xlane.f32.xlu0 %v1898
        %v1900 = vpop.xlane.xlu0 %1899
        %v1901 = vsel %vm1876, %v1836, 0.0
        %1902 = vadd.xlane.f32.xlu0 %v1901
        %v1903 = vpop.xlane.xlu0 %1902
        %v1904 = vsel %vm1876, %v1837, 0.0
        %1905 = vadd.xlane.f32.xlu0 %v1904
        %v1906 = vpop.xlane.xlu0 %1905
        %v1907 = vsel %vm1876, %v1838, 0.0
        %1908 = vadd.xlane.f32.xlu0 %v1907
        %v1909 = vpop.xlane.xlu0 %1908
        %v1910 = vsel %vm1876, %v1839, 0.0
        %1911 = vadd.xlane.f32.xlu0 %v1910
        %v1912 = vpop.xlane.xlu0 %1911
        %v1913 = vsel %vm1876, %v1840, 0.0
        %1914 = vadd.xlane.f32.xlu0 %v1913
        %v1915 = vpop.xlane.xlu0 %1914
        %v1916 = vsel %vm1876, %v1841, 0.0
        %1917 = vadd.xlane.f32.xlu0 %v1916
        %v1918 = vpop.xlane.xlu0 %1917
        %v1919 = vsel %vm1876, %v1842, 0.0
        %1920 = vadd.xlane.f32.xlu0 %v1919
        %v1921 = vpop.xlane.xlu0 %1920
        %v1922 = vsel %vm1876, %v1843, 0.0
        %1923 = vadd.xlane.f32.xlu0 %v1922
        %v1924 = vpop.xlane.xlu0 %1923
        %v1926 = vsel %vm1876, %v1820, 0
        %v1929 = vsel %vm1876, %v1821, 0
        %v1932 = vsel %vm1876, %v1822, 0
        %v1935 = vsel %vm1876, %v1823, 0
        %v1938 = vsel %vm1876, %v1824, 0
        %v1941 = vsel %vm1876, %v1825, 0
        %v1944 = vsel %vm1876, %v1826, 0
        %v1947 = vsel %vm1876, %v1827, 0
        %v1950 = vsel %vm1876, %v970, 0
        %v1953 = vsel %vm1876, %v971, 0
        %v1956 = vsel %vm1876, %v972, 0
        %v1959 = vsel %vm1876, %v973, 0
        %v1962 = vsel %vm1876, %v974, 0
        %v1965 = vsel %vm1876, %v975, 0
        %v1968 = vsel %vm1876, %v976, 0
        %v1971 = vsel %vm1876, %v977, 0
        %1973 = vmatprep.subr.bf16.mxu0 0
        %1974 = vmatpush1.bf16.xpose.msra.mxu0 %v1971
        %1975 = vmatprep.subr.bf16.mxu0 0
        %1976 = vmatpush1.bf16.xpose.msra.mxu0 %v1968
        %1977 = vmatprep.subr.bf16.mxu0 0
        %1978 = vmatpush1.bf16.xpose.msra.mxu0 %v1965
        %1979 = vmatprep.subr.bf16.mxu0 0
        %1980 = vmatpush1.bf16.xpose.msra.mxu0 %v1962
        %1981 = vmatprep.subr.bf16.mxu0 0
        %1982 = vmatpush1.bf16.xpose.msra.mxu0 %v1959
        %1983 = vmatprep.subr.bf16.mxu0 0
        %1984 = vmatpush1.bf16.xpose.msra.mxu0 %v1956
        %1985 = vmatprep.subr.bf16.mxu0 0
        %1986 = vmatpush1.bf16.xpose.msra.mxu0 %v1953
        %1987 = vmatprep.subr.bf16.mxu0 0
        %1988 = vmatpush1.bf16.xpose.msra.mxu0 %v1950
        %1989 = vmatprep.subr.bf16.mxu0 0
        %1990 = vmatpush2.bf16.xpose.msra.mxu0 0
        %1991 = vmatprep.subr.bf16.mxu0 0
        %1992 = vmatpush2.bf16.xpose.msra.mxu0 0
        %1993 = vmatprep.subr.bf16.mxu0 0
        %1994 = vmatpush2.bf16.xpose.msra.mxu0 0
        %1995 = vmatprep.subr.bf16.mxu0 0
        %1996 = vmatpush2.bf16.xpose.msra.mxu0 0
        %1997 = vmatprep.subr.bf16.mxu0 0
        %1998 = vmatpush2.bf16.xpose.msra.mxu0 0
        %1999 = vmatprep.subr.bf16.mxu0 0
        %2000 = vmatpush2.bf16.xpose.msra.mxu0 0
        %2001 = vmatprep.subr.bf16.mxu0 0
        %2002 = vmatpush2.bf16.xpose.msra.mxu0 0
        %2003 = vmatprep.subr.bf16.mxu0 0
        %2004 = vmatpush2.bf16.xpose.msra.mxu0 0
        %2005 = vmatprep.mubr.bf16.mxu0 0
        %2006 = vmatmul.mubr.bf16.gmra.mxu0 %v1926
        %v2007 = vpop.f32.mrf.mxu0
        %v2008 = vadd.f32 0.0, %v2007
        %v2009 = vpop.f32.mrf.mxu0
        %v2010 = vpop.f32.mrf.mxu0
        %v2011 = vadd.f32 0.0, %v2010
        %v2012 = vpop.f32.mrf.mxu0
        %2013 = vmatprep.mubr.bf16.mxu0 0
        %2014 = vmatmul.mubr.bf16.gmra.mxu0 %v1929
        %v2015 = vpop.f32.mrf.mxu0
        %v2016 = vadd.f32 0.0, %v2015
        %v2017 = vpop.f32.mrf.mxu0
        %v2018 = vpop.f32.mrf.mxu0
        %v2019 = vadd.f32 0.0, %v2018
        %v2020 = vpop.f32.mrf.mxu0
        %2021 = vmatprep.mubr.bf16.mxu0 0
        %2022 = vmatmul.mubr.bf16.gmra.mxu0 %v1932
        %v2023 = vpop.f32.mrf.mxu0
        %v2024 = vadd.f32 0.0, %v2023
        %v2025 = vpop.f32.mrf.mxu0
        %v2026 = vpop.f32.mrf.mxu0
        %v2027 = vadd.f32 0.0, %v2026
        %v2028 = vpop.f32.mrf.mxu0
        %2029 = vmatprep.mubr.bf16.mxu0 0
        %2030 = vmatmul.mubr.bf16.gmra.mxu0 %v1935
        %v2031 = vpop.f32.mrf.mxu0
        %v2032 = vadd.f32 0.0, %v2031
        %v2033 = vpop.f32.mrf.mxu0
        %v2034 = vpop.f32.mrf.mxu0
        %v2035 = vadd.f32 0.0, %v2034
        %v2036 = vpop.f32.mrf.mxu0
        %2037 = vmatprep.mubr.bf16.mxu0 0
        %2038 = vmatmul.mubr.bf16.gmra.mxu0 %v1938
        %v2039 = vpop.f32.mrf.mxu0
        %v2040 = vadd.f32 0.0, %v2039
        %v2041 = vpop.f32.mrf.mxu0
        %v2042 = vpop.f32.mrf.mxu0
        %v2043 = vadd.f32 0.0, %v2042
        %v2044 = vpop.f32.mrf.mxu0
        %2045 = vmatprep.mubr.bf16.mxu0 0
        %2046 = vmatmul.mubr.bf16.gmra.mxu0 %v1941
        %v2047 = vpop.f32.mrf.mxu0
        %v2048 = vadd.f32 0.0, %v2047
        %v2049 = vpop.f32.mrf.mxu0
        %v2050 = vpop.f32.mrf.mxu0
        %v2051 = vadd.f32 0.0, %v2050
        %v2052 = vpop.f32.mrf.mxu0
        %2053 = vmatprep.mubr.bf16.mxu0 0
        %2054 = vmatmul.mubr.bf16.gmra.mxu0 %v1944
        %v2055 = vpop.f32.mrf.mxu0
        %v2056 = vadd.f32 0.0, %v2055
        %v2057 = vpop.f32.mrf.mxu0
        %v2058 = vpop.f32.mrf.mxu0
        %v2059 = vadd.f32 0.0, %v2058
        %v2060 = vpop.f32.mrf.mxu0
        %2061 = vmatprep.mubr.bf16.mxu0 0
        %2062 = vmatmul.mubr.bf16.gmra.mxu0 %v1947
        %v2063 = vpop.f32.mrf.mxu0
        %v2064 = vadd.f32 0.0, %v2063
        %v2065 = vpop.f32.mrf.mxu0
        %v2066 = vpop.f32.mrf.mxu0
        %v2067 = vadd.f32 0.0, %v2066
        %v2068 = vpop.f32.mrf.mxu0
        %2069 = vdwg.mxu0
        %v2070 = vadd.f32 %v1879, %v2008
        %v2071 = vadd.f32 %v1882, %v2011
        %v2072 = vadd.f32 %v1885, %v2016
        %v2073 = vadd.f32 %v1888, %v2019
        %v2074 = vadd.f32 %v1891, %v2024
        %v2075 = vadd.f32 %v1894, %v2027
        %v2076 = vadd.f32 %v1897, %v2032
        %v2077 = vadd.f32 %v1900, %v2035
        %v2078 = vadd.f32 %v1903, %v2040
        %v2079 = vadd.f32 %v1906, %v2043
        %v2080 = vadd.f32 %v1909, %v2048
        %v2081 = vadd.f32 %v1912, %v2051
        %v2082 = vadd.f32 %v1915, %v2056
        %v2083 = vadd.f32 %v1918, %v2059
        %v2084 = vadd.f32 %v1921, %v2064
        %v2085 = vadd.f32 %v1924, %v2067
        %v2086 = vadd.f32 %v2070, %v1860
        %v2087 = vadd.f32 %v2071, %v1861
        %v2088 = vadd.f32 %v2072, %v1862
        %v2089 = vadd.f32 %v2073, %v1863
        %v2090 = vadd.f32 %v2074, %v1864
        %v2091 = vadd.f32 %v2075, %v1865
        %v2092 = vadd.f32 %v2076, %v1866
        %v2093 = vadd.f32 %v2077, %v1867
        %v2094 = vadd.f32 %v2078, %v1868
        %v2095 = vadd.f32 %v2079, %v1869
        %v2096 = vadd.f32 %v2080, %v1870
        %v2097 = vadd.f32 %v2081, %v1871
        %v2098 = vadd.f32 %v2082, %v1872
        %v2099 = vadd.f32 %v2083, %v1873
        %v2100 = vadd.f32 %v2084, %v1874
        %v2101 = vadd.f32 %v2085, %v1875
        %v2102 = vmul.f32 %v2086, 0.17677669
        %v2103 = vmul.f32 %v2087, 0.17677669
        %v2104 = vmul.f32 %v2088, 0.17677669
        %v2105 = vmul.f32 %v2089, 0.17677669
        %v2106 = vmul.f32 %v2090, 0.17677669
        %v2107 = vmul.f32 %v2091, 0.17677669
        %v2108 = vmul.f32 %v2092, 0.17677669
        %v2109 = vmul.f32 %v2093, 0.17677669
        %v2110 = vmul.f32 %v2094, 0.17677669
        %v2111 = vmul.f32 %v2095, 0.17677669
        %v2112 = vmul.f32 %v2096, 0.17677669
        %v2113 = vmul.f32 %v2097, 0.17677669
        %v2114 = vmul.f32 %v2098, 0.17677669
        %v2115 = vmul.f32 %v2099, 0.17677669
        %v2116 = vmul.f32 %v2100, 0.17677669
        %v2117 = vmul.f32 %v2101, 0.17677669
        %2118 = vmax.xlane.f32.xlu0 %v2102
        %v2119 = vpop.xlane.xlu0 %2118
        %2120 = vmax.xlane.f32.xlu0 %v2103
        %v2121 = vpop.xlane.xlu0 %2120
        %2122 = vmax.xlane.f32.xlu0 %v2104
        %v2123 = vpop.xlane.xlu0 %2122
        %2124 = vmax.xlane.f32.xlu0 %v2105
        %v2125 = vpop.xlane.xlu0 %2124
        %2126 = vmax.xlane.f32.xlu0 %v2106
        %v2127 = vpop.xlane.xlu0 %2126
        %2128 = vmax.xlane.f32.xlu0 %v2107
        %v2129 = vpop.xlane.xlu0 %2128
        %2130 = vmax.xlane.f32.xlu0 %v2108
        %v2131 = vpop.xlane.xlu0 %2130
        %2132 = vmax.xlane.f32.xlu0 %v2109
        %v2133 = vpop.xlane.xlu0 %2132
        %2134 = vmax.xlane.f32.xlu0 %v2110
        %v2135 = vpop.xlane.xlu0 %2134
        %2136 = vmax.xlane.f32.xlu0 %v2111
        %v2137 = vpop.xlane.xlu0 %2136
        %2138 = vmax.xlane.f32.xlu0 %v2112
        %v2139 = vpop.xlane.xlu0 %2138
        %2140 = vmax.xlane.f32.xlu0 %v2113
        %v2141 = vpop.xlane.xlu0 %2140
        %2142 = vmax.xlane.f32.xlu0 %v2114
        %v2143 = vpop.xlane.xlu0 %2142
        %2144 = vmax.xlane.f32.xlu0 %v2115
        %v2145 = vpop.xlane.xlu0 %2144
        %2146 = vmax.xlane.f32.xlu0 %v2116
        %v2147 = vpop.xlane.xlu0 %2146
        %2148 = vmax.xlane.f32.xlu0 %v2117
        %v2149 = vpop.xlane.xlu0 %2148
        %v2150 = vsub.f32 %v2102, %v2119
        %v2151 = vsub.f32 %v2103, %v2121
        %v2152 = vsub.f32 %v2104, %v2123
        %v2153 = vsub.f32 %v2105, %v2125
        %v2154 = vsub.f32 %v2106, %v2127
        %v2155 = vsub.f32 %v2107, %v2129
        %v2156 = vsub.f32 %v2108, %v2131
        %v2157 = vsub.f32 %v2109, %v2133
        %v2158 = vsub.f32 %v2110, %v2135
        %v2159 = vsub.f32 %v2111, %v2137
        %v2160 = vsub.f32 %v2112, %v2139
        %v2161 = vsub.f32 %v2113, %v2141
        %v2162 = vsub.f32 %v2114, %v2143
        %v2163 = vsub.f32 %v2115, %v2145
        %v2164 = vsub.f32 %v2116, %v2147
        %v2165 = vsub.f32 %v2117, %v2149
        %v2166 = vmul.f32 %v2150, 1.442695
        %v2167 = vpow.pop %v2166
        %v2168 = vmul.f32 %v2151, 1.442695
        %v2169 = vpow.pop %v2168
        %v2170 = vmul.f32 %v2152, 1.442695
        %v2171 = vpow.pop %v2170
        %v2172 = vmul.f32 %v2153, 1.442695
        %v2173 = vpow.pop %v2172
        %v2174 = vmul.f32 %v2154, 1.442695
        %v2175 = vpow.pop %v2174
        %v2176 = vmul.f32 %v2155, 1.442695
        %v2177 = vpow.pop %v2176
        %v2178 = vmul.f32 %v2156, 1.442695
        %v2179 = vpow.pop %v2178
        %v2180 = vmul.f32 %v2157, 1.442695
        %v2181 = vpow.pop %v2180
        %v2182 = vmul.f32 %v2158, 1.442695
        %v2183 = vpow.pop %v2182
        %v2184 = vmul.f32 %v2159, 1.442695
        %v2185 = vpow.pop %v2184
        %v2186 = vmul.f32 %v2160, 1.442695
        %v2187 = vpow.pop %v2186
        %v2188 = vmul.f32 %v2161, 1.442695
        %v2189 = vpow.pop %v2188
        %v2190 = vmul.f32 %v2162, 1.442695
        %v2191 = vpow.pop %v2190
        %v2192 = vmul.f32 %v2163, 1.442695
        %v2193 = vpow.pop %v2192
        %v2194 = vmul.f32 %v2164, 1.442695
        %v2195 = vpow.pop %v2194
        %v2196 = vmul.f32 %v2165, 1.442695
        %v2197 = vpow.pop %v2196
        %2198 = vadd.xlane.f32.xlu0 %v2167
        %v2199 = vpop.xlane.xlu0 %2198
        %2200 = vadd.xlane.f32.xlu0 %v2169
        %v2201 = vpop.xlane.xlu0 %2200
        %2202 = vadd.xlane.f32.xlu0 %v2171
        %v2203 = vpop.xlane.xlu0 %2202
        %2204 = vadd.xlane.f32.xlu0 %v2173
        %v2205 = vpop.xlane.xlu0 %2204
        %2206 = vadd.xlane.f32.xlu0 %v2175
        %v2207 = vpop.xlane.xlu0 %2206
        %2208 = vadd.xlane.f32.xlu0 %v2177
        %v2209 = vpop.xlane.xlu0 %2208
        %2210 = vadd.xlane.f32.xlu0 %v2179
        %v2211 = vpop.xlane.xlu0 %2210
        %2212 = vadd.xlane.f32.xlu0 %v2181
        %v2213 = vpop.xlane.xlu0 %2212
        %2214 = vadd.xlane.f32.xlu0 %v2183
        %v2215 = vpop.xlane.xlu0 %2214
        %2216 = vadd.xlane.f32.xlu0 %v2185
        %v2217 = vpop.xlane.xlu0 %2216
        %2218 = vadd.xlane.f32.xlu0 %v2187
        %v2219 = vpop.xlane.xlu0 %2218
        %2220 = vadd.xlane.f32.xlu0 %v2189
        %v2221 = vpop.xlane.xlu0 %2220
        %2222 = vadd.xlane.f32.xlu0 %v2191
        %v2223 = vpop.xlane.xlu0 %2222
        %2224 = vadd.xlane.f32.xlu0 %v2193
        %v2225 = vpop.xlane.xlu0 %2224
        %2226 = vadd.xlane.f32.xlu0 %v2195
        %v2227 = vpop.xlane.xlu0 %2226
        %2228 = vadd.xlane.f32.xlu0 %v2197
        %v2229 = vpop.xlane.xlu0 %2228
        %v2230 = vrcp.pop %v2199
        %v2231 = vmul.f32 1.0, %v2230
        %v2232 = vrcp.pop %v2201
        %v2233 = vmul.f32 1.0, %v2232
        %v2234 = vrcp.pop %v2203
        %v2235 = vmul.f32 1.0, %v2234
        %v2236 = vrcp.pop %v2205
        %v2237 = vmul.f32 1.0, %v2236
        %v2238 = vrcp.pop %v2207
        %v2239 = vmul.f32 1.0, %v2238
        %v2240 = vrcp.pop %v2209
        %v2241 = vmul.f32 1.0, %v2240
        %v2242 = vrcp.pop %v2211
        %v2243 = vmul.f32 1.0, %v2242
        %v2244 = vrcp.pop %v2213
        %v2245 = vmul.f32 1.0, %v2244
        %v2246 = vrcp.pop %v2215
        %v2247 = vmul.f32 1.0, %v2246
        %v2248 = vrcp.pop %v2217
        %v2249 = vmul.f32 1.0, %v2248
        %v2250 = vrcp.pop %v2219
        %v2251 = vmul.f32 1.0, %v2250
        %v2252 = vrcp.pop %v2221
        %v2253 = vmul.f32 1.0, %v2252
        %v2254 = vrcp.pop %v2223
        %v2255 = vmul.f32 1.0, %v2254
        %v2256 = vrcp.pop %v2225
        %v2257 = vmul.f32 1.0, %v2256
        %v2258 = vrcp.pop %v2227
        %v2259 = vmul.f32 1.0, %v2258
        %v2260 = vrcp.pop %v2229
        %v2261 = vmul.f32 1.0, %v2260
        %v2262 = vpack.c.bf16 %v2169, %v2167
        %v2263 = vpack.c.bf16 %v2173, %v2171
        %v2264 = vpack.c.bf16 %v2177, %v2175
        %v2265 = vpack.c.bf16 %v2181, %v2179
        %v2266 = vpack.c.bf16 %v2185, %v2183
        %v2267 = vpack.c.bf16 %v2189, %v2187
        %v2268 = vpack.c.bf16 %v2193, %v2191
        %v2269 = vpack.c.bf16 %v2197, %v2195
        %2270 = vmatprep.subr.bf16.mxu0 0
        %2271 = vmatpush1.bf16.msra.mxu0 %v977
        %2272 = vmatprep.subr.bf16.mxu0 0
        %2273 = vmatpush1.bf16.msra.mxu0 %v976
        %2274 = vmatprep.subr.bf16.mxu0 0
        %2275 = vmatpush1.bf16.msra.mxu0 %v975
        %2276 = vmatprep.subr.bf16.mxu0 0
        %2277 = vmatpush1.bf16.msra.mxu0 %v974
        %2278 = vmatprep.subr.bf16.mxu0 0
        %2279 = vmatpush1.bf16.msra.mxu0 %v973
        %2280 = vmatprep.subr.bf16.mxu0 0
        %2281 = vmatpush1.bf16.msra.mxu0 %v972
        %2282 = vmatprep.subr.bf16.mxu0 0
        %2283 = vmatpush1.bf16.msra.mxu0 %v971
        %2284 = vmatprep.subr.bf16.mxu0 0
        %2285 = vmatpush1.bf16.msra.mxu0 %v970
        %2286 = vmatprep.subr.bf16.mxu0 0
        %2287 = vmatpush2.bf16.msra.mxu0 0
        %2288 = vmatprep.subr.bf16.mxu0 0
        %2289 = vmatpush2.bf16.msra.mxu0 0
        %2290 = vmatprep.subr.bf16.mxu0 0
        %2291 = vmatpush2.bf16.msra.mxu0 0
        %2292 = vmatprep.subr.bf16.mxu0 0
        %2293 = vmatpush2.bf16.msra.mxu0 0
        %2294 = vmatprep.subr.bf16.mxu0 0
        %2295 = vmatpush2.bf16.msra.mxu0 0
        %2296 = vmatprep.subr.bf16.mxu0 0
        %2297 = vmatpush2.bf16.msra.mxu0 0
        %2298 = vmatprep.subr.bf16.mxu0 0
        %2299 = vmatpush2.bf16.msra.mxu0 0
        %2300 = vmatprep.subr.bf16.mxu0 0
        %2301 = vmatpush2.bf16.msra.mxu0 0
        %2302 = vmatprep.mubr.bf16.mxu0 0
        %2303 = vmatmul.mubr.bf16.gmra.mxu0 %v2262
        %v2304 = vpop.f32.mrf.mxu0
        %v2305 = vadd.f32 0.0, %v2304
        %v2306 = vpop.f32.mrf.mxu0
        %v2307 = vpop.f32.mrf.mxu0
        %v2308 = vadd.f32 0.0, %v2307
        %v2309 = vpop.f32.mrf.mxu0
        %2310 = vmatprep.mubr.bf16.mxu0 0
        %2311 = vmatmul.mubr.bf16.gmra.mxu0 %v2263
        %v2312 = vpop.f32.mrf.mxu0
        %v2313 = vadd.f32 0.0, %v2312
        %v2314 = vpop.f32.mrf.mxu0
        %v2315 = vpop.f32.mrf.mxu0
        %v2316 = vadd.f32 0.0, %v2315
        %v2317 = vpop.f32.mrf.mxu0
        %2318 = vmatprep.mubr.bf16.mxu0 0
        %2319 = vmatmul.mubr.bf16.gmra.mxu0 %v2264
        %v2320 = vpop.f32.mrf.mxu0
        %v2321 = vadd.f32 0.0, %v2320
        %v2322 = vpop.f32.mrf.mxu0
        %v2323 = vpop.f32.mrf.mxu0
        %v2324 = vadd.f32 0.0, %v2323
        %v2325 = vpop.f32.mrf.mxu0
        %2326 = vmatprep.mubr.bf16.mxu0 0
        %2327 = vmatmul.mubr.bf16.gmra.mxu0 %v2265
        %v2328 = vpop.f32.mrf.mxu0
        %v2329 = vadd.f32 0.0, %v2328
        %v2330 = vpop.f32.mrf.mxu0
        %v2331 = vpop.f32.mrf.mxu0
        %v2332 = vadd.f32 0.0, %v2331
        %v2333 = vpop.f32.mrf.mxu0
        %2334 = vmatprep.mubr.bf16.mxu0 0
        %2335 = vmatmul.mubr.bf16.gmra.mxu0 %v2266
        %v2336 = vpop.f32.mrf.mxu0
        %v2337 = vadd.f32 0.0, %v2336
        %v2338 = vpop.f32.mrf.mxu0
        %v2339 = vpop.f32.mrf.mxu0
        %v2340 = vadd.f32 0.0, %v2339
        %v2341 = vpop.f32.mrf.mxu0
        %2342 = vmatprep.mubr.bf16.mxu0 0
        %2343 = vmatmul.mubr.bf16.gmra.mxu0 %v2267
        %v2344 = vpop.f32.mrf.mxu0
        %v2345 = vadd.f32 0.0, %v2344
        %v2346 = vpop.f32.mrf.mxu0
        %v2347 = vpop.f32.mrf.mxu0
        %v2348 = vadd.f32 0.0, %v2347
        %v2349 = vpop.f32.mrf.mxu0
        %2350 = vmatprep.mubr.bf16.mxu0 0
        %2351 = vmatmul.mubr.bf16.gmra.mxu0 %v2268
        %v2352 = vpop.f32.mrf.mxu0
        %v2353 = vadd.f32 0.0, %v2352
        %v2354 = vpop.f32.mrf.mxu0
        %v2355 = vpop.f32.mrf.mxu0
        %v2356 = vadd.f32 0.0, %v2355
        %v2357 = vpop.f32.mrf.mxu0
        %2358 = vmatprep.mubr.bf16.mxu0 0
        %2359 = vmatmul.mubr.bf16.gmra.mxu0 %v2269
        %v2360 = vpop.f32.mrf.mxu0
        %v2361 = vadd.f32 0.0, %v2360
        %v2362 = vpop.f32.mrf.mxu0
        %v2363 = vpop.f32.mrf.mxu0
        %v2364 = vadd.f32 0.0, %v2363
        %v2365 = vpop.f32.mrf.mxu0
        %2366 = vdwg.mxu0
        %v2367 = vmul.f32 %v2305, %v2231
        %v2368 = vmul.f32 %v2308, %v2233
        %v2369 = vmul.f32 %v2313, %v2235
        %v2370 = vmul.f32 %v2316, %v2237
        %v2371 = vmul.f32 %v2321, %v2239
        %v2372 = vmul.f32 %v2324, %v2241
        %v2373 = vmul.f32 %v2329, %v2243
        %v2374 = vmul.f32 %v2332, %v2245
        %v2375 = vmul.f32 %v2337, %v2247
        %v2376 = vmul.f32 %v2340, %v2249
        %v2377 = vmul.f32 %v2345, %v2251
        %v2378 = vmul.f32 %v2348, %v2253
        %v2379 = vmul.f32 %v2353, %v2255
        %v2380 = vmul.f32 %v2356, %v2257
        %v2381 = vmul.f32 %v2361, %v2259
        %v2382 = vmul.f32 %v2364, %v2261
        %2399 = vrot.lane.b32.xlu0 %v1828, 96
        %v2400 = vpop.permute.xlu0 %2399
        %2401 = vrot.lane.b32.xlu0 %v1829, 96
        %v2402 = vpop.permute.xlu0 %2401
        %2403 = vrot.lane.b32.xlu0 %v1830, 96
        %v2404 = vpop.permute.xlu0 %2403
        %2405 = vrot.lane.b32.xlu0 %v1831, 96
        %v2406 = vpop.permute.xlu0 %2405
        %2407 = vrot.lane.b32.xlu0 %v1832, 96
        %v2408 = vpop.permute.xlu0 %2407
        %2409 = vrot.lane.b32.xlu0 %v1833, 96
        %v2410 = vpop.permute.xlu0 %2409
        %2411 = vrot.lane.b32.xlu0 %v1834, 96
        %v2412 = vpop.permute.xlu0 %2411
        %2413 = vrot.lane.b32.xlu0 %v1835, 96
        %v2414 = vpop.permute.xlu0 %2413
        %2415 = vrot.lane.b32.xlu0 %v1836, 96
        %v2416 = vpop.permute.xlu0 %2415
        %2417 = vrot.lane.b32.xlu0 %v1837, 96
        %v2418 = vpop.permute.xlu0 %2417
        %2419 = vrot.lane.b32.xlu0 %v1838, 96
        %v2420 = vpop.permute.xlu0 %2419
        %2421 = vrot.lane.b32.xlu0 %v1839, 96
        %v2422 = vpop.permute.xlu0 %2421
        %2423 = vrot.lane.b32.xlu0 %v1840, 96
        %v2424 = vpop.permute.xlu0 %2423
        %2425 = vrot.lane.b32.xlu0 %v1841, 96
        %v2426 = vpop.permute.xlu0 %2425
        %2427 = vrot.lane.b32.xlu0 %v1842, 96
        %v2428 = vpop.permute.xlu0 %2427
        %2429 = vrot.lane.b32.xlu0 %v1843, 96
        %v2430 = vpop.permute.xlu0 %2429
        %v2447 = vsel %vm1876, %v2400, 0.0
        %2448 = vadd.xlane.f32.xlu0 %v2447
        %v2449 = vpop.xlane.xlu0 %2448
        %v2450 = vsel %vm1876, %v2402, 0.0
        %2451 = vadd.xlane.f32.xlu0 %v2450
        %v2452 = vpop.xlane.xlu0 %2451
        %v2453 = vsel %vm1876, %v2404, 0.0
        %2454 = vadd.xlane.f32.xlu0 %v2453
        %v2455 = vpop.xlane.xlu0 %2454
        %v2456 = vsel %vm1876, %v2406, 0.0
        %2457 = vadd.xlane.f32.xlu0 %v2456
        %v2458 = vpop.xlane.xlu0 %2457
        %v2459 = vsel %vm1876, %v2408, 0.0
        %2460 = vadd.xlane.f32.xlu0 %v2459
        %v2461 = vpop.xlane.xlu0 %2460
        %v2462 = vsel %vm1876, %v2410, 0.0
        %2463 = vadd.xlane.f32.xlu0 %v2462
        %v2464 = vpop.xlane.xlu0 %2463
        %v2465 = vsel %vm1876, %v2412, 0.0
        %2466 = vadd.xlane.f32.xlu0 %v2465
        %v2467 = vpop.xlane.xlu0 %2466
        %v2468 = vsel %vm1876, %v2414, 0.0
        %2469 = vadd.xlane.f32.xlu0 %v2468
        %v2470 = vpop.xlane.xlu0 %2469
        %v2471 = vsel %vm1876, %v2416, 0.0
        %2472 = vadd.xlane.f32.xlu0 %v2471
        %v2473 = vpop.xlane.xlu0 %2472
        %v2474 = vsel %vm1876, %v2418, 0.0
        %2475 = vadd.xlane.f32.xlu0 %v2474
        %v2476 = vpop.xlane.xlu0 %2475
        %v2477 = vsel %vm1876, %v2420, 0.0
        %2478 = vadd.xlane.f32.xlu0 %v2477
        %v2479 = vpop.xlane.xlu0 %2478
        %v2480 = vsel %vm1876, %v2422, 0.0
        %2481 = vadd.xlane.f32.xlu0 %v2480
        %v2482 = vpop.xlane.xlu0 %2481
        %v2483 = vsel %vm1876, %v2424, 0.0
        %2484 = vadd.xlane.f32.xlu0 %v2483
        %v2485 = vpop.xlane.xlu0 %2484
        %v2486 = vsel %vm1876, %v2426, 0.0
        %2487 = vadd.xlane.f32.xlu0 %v2486
        %v2488 = vpop.xlane.xlu0 %2487
        %v2489 = vsel %vm1876, %v2428, 0.0
        %2490 = vadd.xlane.f32.xlu0 %v2489
        %v2491 = vpop.xlane.xlu0 %2490
        %v2492 = vsel %vm1876, %v2430, 0.0
        %2493 = vadd.xlane.f32.xlu0 %v2492
        %v2494 = vpop.xlane.xlu0 %2493
        %2503 = vrot.lane.b32.xlu0 %v1820, 96
        %v2504 = vpop.permute.xlu0 %2503
        %2505 = vrot.lane.b32.xlu0 %v1821, 96
        %v2506 = vpop.permute.xlu0 %2505
        %2507 = vrot.lane.b32.xlu0 %v1822, 96
        %v2508 = vpop.permute.xlu0 %2507
        %2509 = vrot.lane.b32.xlu0 %v1823, 96
        %v2510 = vpop.permute.xlu0 %2509
        %2511 = vrot.lane.b32.xlu0 %v1824, 96
        %v2512 = vpop.permute.xlu0 %2511
        %2513 = vrot.lane.b32.xlu0 %v1825, 96
        %v2514 = vpop.permute.xlu0 %2513
        %2515 = vrot.lane.b32.xlu0 %v1826, 96
        %v2516 = vpop.permute.xlu0 %2515
        %2517 = vrot.lane.b32.xlu0 %v1827, 96
        %v2518 = vpop.permute.xlu0 %2517
        %2527 = vrot.lane.b32.xlu0 %v970, 96
        %v2528 = vpop.permute.xlu0 %2527
        %2529 = vrot.lane.b32.xlu0 %v971, 96
        %v2530 = vpop.permute.xlu0 %2529
        %2531 = vrot.lane.b32.xlu0 %v972, 96
        %v2532 = vpop.permute.xlu0 %2531
        %2533 = vrot.lane.b32.xlu0 %v973, 96
        %v2534 = vpop.permute.xlu0 %2533
        %2535 = vrot.lane.b32.xlu0 %v974, 96
        %v2536 = vpop.permute.xlu0 %2535
        %2537 = vrot.lane.b32.xlu0 %v975, 96
        %v2538 = vpop.permute.xlu0 %2537
        %2539 = vrot.lane.b32.xlu0 %v976, 96
        %v2540 = vpop.permute.xlu0 %2539
        %2541 = vrot.lane.b32.xlu0 %v977, 96
        %v2542 = vpop.permute.xlu0 %2541
        %v2544 = vsel %vm1876, %v2504, 0
        %v2547 = vsel %vm1876, %v2506, 0
        %v2550 = vsel %vm1876, %v2508, 0
        %v2553 = vsel %vm1876, %v2510, 0
        %v2556 = vsel %vm1876, %v2512, 0
        %v2559 = vsel %vm1876, %v2514, 0
        %v2562 = vsel %vm1876, %v2516, 0
        %v2565 = vsel %vm1876, %v2518, 0
        %v2568 = vsel %vm1876, %v2528, 0
        %v2571 = vsel %vm1876, %v2530, 0
        %v2574 = vsel %vm1876, %v2532, 0
        %v2577 = vsel %vm1876, %v2534, 0
        %v2580 = vsel %vm1876, %v2536, 0
        %v2583 = vsel %vm1876, %v2538, 0
        %v2586 = vsel %vm1876, %v2540, 0
        %v2589 = vsel %vm1876, %v2542, 0
        %2591 = vmatprep.subr.bf16.mxu0 0
        %2592 = vmatpush1.bf16.xpose.msra.mxu0 %v2589
        %2593 = vmatprep.subr.bf16.mxu0 0
        %2594 = vmatpush1.bf16.xpose.msra.mxu0 %v2586
        %2595 = vmatprep.subr.bf16.mxu0 0
        %2596 = vmatpush1.bf16.xpose.msra.mxu0 %v2583
        %2597 = vmatprep.subr.bf16.mxu0 0
        %2598 = vmatpush1.bf16.xpose.msra.mxu0 %v2580
        %2599 = vmatprep.subr.bf16.mxu0 0
        %2600 = vmatpush1.bf16.xpose.msra.mxu0 %v2577
        %2601 = vmatprep.subr.bf16.mxu0 0
        %2602 = vmatpush1.bf16.xpose.msra.mxu0 %v2574
        %2603 = vmatprep.subr.bf16.mxu0 0
        %2604 = vmatpush1.bf16.xpose.msra.mxu0 %v2571
        %2605 = vmatprep.subr.bf16.mxu0 0
        %2606 = vmatpush1.bf16.xpose.msra.mxu0 %v2568
        %2607 = vmatprep.subr.bf16.mxu0 0
        %2608 = vmatpush2.bf16.xpose.msra.mxu0 0
        %2609 = vmatprep.subr.bf16.mxu0 0
        %2610 = vmatpush2.bf16.xpose.msra.mxu0 0
        %2611 = vmatprep.subr.bf16.mxu0 0
        %2612 = vmatpush2.bf16.xpose.msra.mxu0 0
        %2613 = vmatprep.subr.bf16.mxu0 0
        %2614 = vmatpush2.bf16.xpose.msra.mxu0 0
        %2615 = vmatprep.subr.bf16.mxu0 0
        %2616 = vmatpush2.bf16.xpose.msra.mxu0 0
        %2617 = vmatprep.subr.bf16.mxu0 0
        %2618 = vmatpush2.bf16.xpose.msra.mxu0 0
        %2619 = vmatprep.subr.bf16.mxu0 0
        %2620 = vmatpush2.bf16.xpose.msra.mxu0 0
        %2621 = vmatprep.subr.bf16.mxu0 0
        %2622 = vmatpush2.bf16.xpose.msra.mxu0 0
        %2623 = vmatprep.mubr.bf16.mxu0 0
        %2624 = vmatmul.mubr.bf16.gmra.mxu0 %v2544
        %v2625 = vpop.f32.mrf.mxu0
        %v2626 = vadd.f32 0.0, %v2625
        %v2627 = vpop.f32.mrf.mxu0
        %v2628 = vpop.f32.mrf.mxu0
        %v2629 = vadd.f32 0.0, %v2628
        %v2630 = vpop.f32.mrf.mxu0
        %2631 = vmatprep.mubr.bf16.mxu0 0
        %2632 = vmatmul.mubr.bf16.gmra.mxu0 %v2547
        %v2633 = vpop.f32.mrf.mxu0
        %v2634 = vadd.f32 0.0, %v2633
        %v2635 = vpop.f32.mrf.mxu0
        %v2636 = vpop.f32.mrf.mxu0
        %v2637 = vadd.f32 0.0, %v2636
        %v2638 = vpop.f32.mrf.mxu0
        %2639 = vmatprep.mubr.bf16.mxu0 0
        %2640 = vmatmul.mubr.bf16.gmra.mxu0 %v2550
        %v2641 = vpop.f32.mrf.mxu0
        %v2642 = vadd.f32 0.0, %v2641
        %v2643 = vpop.f32.mrf.mxu0
        %v2644 = vpop.f32.mrf.mxu0
        %v2645 = vadd.f32 0.0, %v2644
        %v2646 = vpop.f32.mrf.mxu0
        %2647 = vmatprep.mubr.bf16.mxu0 0
        %2648 = vmatmul.mubr.bf16.gmra.mxu0 %v2553
        %v2649 = vpop.f32.mrf.mxu0
        %v2650 = vadd.f32 0.0, %v2649
        %v2651 = vpop.f32.mrf.mxu0
        %v2652 = vpop.f32.mrf.mxu0
        %v2653 = vadd.f32 0.0, %v2652
        %v2654 = vpop.f32.mrf.mxu0
        %2655 = vmatprep.mubr.bf16.mxu0 0
        %2656 = vmatmul.mubr.bf16.gmra.mxu0 %v2556
        %v2657 = vpop.f32.mrf.mxu0
        %v2658 = vadd.f32 0.0, %v2657
        %v2659 = vpop.f32.mrf.mxu0
        %v2660 = vpop.f32.mrf.mxu0
        %v2661 = vadd.f32 0.0, %v2660
        %v2662 = vpop.f32.mrf.mxu0
        %2663 = vmatprep.mubr.bf16.mxu0 0
        %2664 = vmatmul.mubr.bf16.gmra.mxu0 %v2559
        %v2665 = vpop.f32.mrf.mxu0
        %v2666 = vadd.f32 0.0, %v2665
        %v2667 = vpop.f32.mrf.mxu0
        %v2668 = vpop.f32.mrf.mxu0
        %v2669 = vadd.f32 0.0, %v2668
        %v2670 = vpop.f32.mrf.mxu0
        %2671 = vmatprep.mubr.bf16.mxu0 0
        %2672 = vmatmul.mubr.bf16.gmra.mxu0 %v2562
        %v2673 = vpop.f32.mrf.mxu0
        %v2674 = vadd.f32 0.0, %v2673
        %v2675 = vpop.f32.mrf.mxu0
        %v2676 = vpop.f32.mrf.mxu0
        %v2677 = vadd.f32 0.0, %v2676
        %v2678 = vpop.f32.mrf.mxu0
        %2679 = vmatprep.mubr.bf16.mxu0 0
        %2680 = vmatmul.mubr.bf16.gmra.mxu0 %v2565
        %v2681 = vpop.f32.mrf.mxu0
        %v2682 = vadd.f32 0.0, %v2681
        %v2683 = vpop.f32.mrf.mxu0
        %v2684 = vpop.f32.mrf.mxu0
        %v2685 = vadd.f32 0.0, %v2684
        %v2686 = vpop.f32.mrf.mxu0
        %2687 = vdwg.mxu0
        %v2688 = vadd.f32 %v2449, %v2626
        %v2689 = vadd.f32 %v2452, %v2629
        %v2690 = vadd.f32 %v2455, %v2634
        %v2691 = vadd.f32 %v2458, %v2637
        %v2692 = vadd.f32 %v2461, %v2642
        %v2693 = vadd.f32 %v2464, %v2645
        %v2694 = vadd.f32 %v2467, %v2650
        %v2695 = vadd.f32 %v2470, %v2653
        %v2696 = vadd.f32 %v2473, %v2658
        %v2697 = vadd.f32 %v2476, %v2661
        %v2698 = vadd.f32 %v2479, %v2666
        %v2699 = vadd.f32 %v2482, %v2669
        %v2700 = vadd.f32 %v2485, %v2674
        %v2701 = vadd.f32 %v2488, %v2677
        %v2702 = vadd.f32 %v2491, %v2682
        %v2703 = vadd.f32 %v2494, %v2685
        %v2704 = vadd.f32 %v2688, %v1860
        %v2705 = vadd.f32 %v2689, %v1861
        %v2706 = vadd.f32 %v2690, %v1862
        %v2707 = vadd.f32 %v2691, %v1863
        %v2708 = vadd.f32 %v2692, %v1864
        %v2709 = vadd.f32 %v2693, %v1865
        %v2710 = vadd.f32 %v2694, %v1866
        %v2711 = vadd.f32 %v2695, %v1867
        %v2712 = vadd.f32 %v2696, %v1868
        %v2713 = vadd.f32 %v2697, %v1869
        %v2714 = vadd.f32 %v2698, %v1870
        %v2715 = vadd.f32 %v2699, %v1871
        %v2716 = vadd.f32 %v2700, %v1872
        %v2717 = vadd.f32 %v2701, %v1873
        %v2718 = vadd.f32 %v2702, %v1874
        %v2719 = vadd.f32 %v2703, %v1875
        %v2720 = vmul.f32 %v2704, 0.17677669
        %v2721 = vmul.f32 %v2705, 0.17677669
        %v2722 = vmul.f32 %v2706, 0.17677669
        %v2723 = vmul.f32 %v2707, 0.17677669
        %v2724 = vmul.f32 %v2708, 0.17677669
        %v2725 = vmul.f32 %v2709, 0.17677669
        %v2726 = vmul.f32 %v2710, 0.17677669
        %v2727 = vmul.f32 %v2711, 0.17677669
        %v2728 = vmul.f32 %v2712, 0.17677669
        %v2729 = vmul.f32 %v2713, 0.17677669
        %v2730 = vmul.f32 %v2714, 0.17677669
        %v2731 = vmul.f32 %v2715, 0.17677669
        %v2732 = vmul.f32 %v2716, 0.17677669
        %v2733 = vmul.f32 %v2717, 0.17677669
        %v2734 = vmul.f32 %v2718, 0.17677669
        %v2735 = vmul.f32 %v2719, 0.17677669
        %2736 = vmax.xlane.f32.xlu0 %v2720
        %v2737 = vpop.xlane.xlu0 %2736
        %2738 = vmax.xlane.f32.xlu0 %v2721
        %v2739 = vpop.xlane.xlu0 %2738
        %2740 = vmax.xlane.f32.xlu0 %v2722
        %v2741 = vpop.xlane.xlu0 %2740
        %2742 = vmax.xlane.f32.xlu0 %v2723
        %v2743 = vpop.xlane.xlu0 %2742
        %2744 = vmax.xlane.f32.xlu0 %v2724
        %v2745 = vpop.xlane.xlu0 %2744
        %2746 = vmax.xlane.f32.xlu0 %v2725
        %v2747 = vpop.xlane.xlu0 %2746
        %2748 = vmax.xlane.f32.xlu0 %v2726
        %v2749 = vpop.xlane.xlu0 %2748
        %2750 = vmax.xlane.f32.xlu0 %v2727
        %v2751 = vpop.xlane.xlu0 %2750
        %2752 = vmax.xlane.f32.xlu0 %v2728
        %v2753 = vpop.xlane.xlu0 %2752
        %2754 = vmax.xlane.f32.xlu0 %v2729
        %v2755 = vpop.xlane.xlu0 %2754
        %2756 = vmax.xlane.f32.xlu0 %v2730
        %v2757 = vpop.xlane.xlu0 %2756
        %2758 = vmax.xlane.f32.xlu0 %v2731
        %v2759 = vpop.xlane.xlu0 %2758
        %2760 = vmax.xlane.f32.xlu0 %v2732
        %v2761 = vpop.xlane.xlu0 %2760
        %2762 = vmax.xlane.f32.xlu0 %v2733
        %v2763 = vpop.xlane.xlu0 %2762
        %2764 = vmax.xlane.f32.xlu0 %v2734
        %v2765 = vpop.xlane.xlu0 %2764
        %2766 = vmax.xlane.f32.xlu0 %v2735
        %v2767 = vpop.xlane.xlu0 %2766
        %v2768 = vsub.f32 %v2720, %v2737
        %v2769 = vsub.f32 %v2721, %v2739
        %v2770 = vsub.f32 %v2722, %v2741
        %v2771 = vsub.f32 %v2723, %v2743
        %v2772 = vsub.f32 %v2724, %v2745
        %v2773 = vsub.f32 %v2725, %v2747
        %v2774 = vsub.f32 %v2726, %v2749
        %v2775 = vsub.f32 %v2727, %v2751
        %v2776 = vsub.f32 %v2728, %v2753
        %v2777 = vsub.f32 %v2729, %v2755
        %v2778 = vsub.f32 %v2730, %v2757
        %v2779 = vsub.f32 %v2731, %v2759
        %v2780 = vsub.f32 %v2732, %v2761
        %v2781 = vsub.f32 %v2733, %v2763
        %v2782 = vsub.f32 %v2734, %v2765
        %v2783 = vsub.f32 %v2735, %v2767
        %v2784 = vmul.f32 %v2768, 1.442695
        %v2785 = vpow.pop %v2784
        %v2786 = vmul.f32 %v2769, 1.442695
        %v2787 = vpow.pop %v2786
        %v2788 = vmul.f32 %v2770, 1.442695
        %v2789 = vpow.pop %v2788
        %v2790 = vmul.f32 %v2771, 1.442695
        %v2791 = vpow.pop %v2790
        %v2792 = vmul.f32 %v2772, 1.442695
        %v2793 = vpow.pop %v2792
        %v2794 = vmul.f32 %v2773, 1.442695
        %v2795 = vpow.pop %v2794
        %v2796 = vmul.f32 %v2774, 1.442695
        %v2797 = vpow.pop %v2796
        %v2798 = vmul.f32 %v2775, 1.442695
        %v2799 = vpow.pop %v2798
        %v2800 = vmul.f32 %v2776, 1.442695
        %v2801 = vpow.pop %v2800
        %v2802 = vmul.f32 %v2777, 1.442695
        %v2803 = vpow.pop %v2802
        %v2804 = vmul.f32 %v2778, 1.442695
        %v2805 = vpow.pop %v2804
        %v2806 = vmul.f32 %v2779, 1.442695
        %v2807 = vpow.pop %v2806
        %v2808 = vmul.f32 %v2780, 1.442695
        %v2809 = vpow.pop %v2808
        %v2810 = vmul.f32 %v2781, 1.442695
        %v2811 = vpow.pop %v2810
        %v2812 = vmul.f32 %v2782, 1.442695
        %v2813 = vpow.pop %v2812
        %v2814 = vmul.f32 %v2783, 1.442695
        %v2815 = vpow.pop %v2814
        %2816 = vadd.xlane.f32.xlu0 %v2785
        %v2817 = vpop.xlane.xlu0 %2816
        %2818 = vadd.xlane.f32.xlu0 %v2787
        %v2819 = vpop.xlane.xlu0 %2818
        %2820 = vadd.xlane.f32.xlu0 %v2789
        %v2821 = vpop.xlane.xlu0 %2820
        %2822 = vadd.xlane.f32.xlu0 %v2791
        %v2823 = vpop.xlane.xlu0 %2822
        %2824 = vadd.xlane.f32.xlu0 %v2793
        %v2825 = vpop.xlane.xlu0 %2824
        %2826 = vadd.xlane.f32.xlu0 %v2795
        %v2827 = vpop.xlane.xlu0 %2826
        %2828 = vadd.xlane.f32.xlu0 %v2797
        %v2829 = vpop.xlane.xlu0 %2828
        %2830 = vadd.xlane.f32.xlu0 %v2799
        %v2831 = vpop.xlane.xlu0 %2830
        %2832 = vadd.xlane.f32.xlu0 %v2801
        %v2833 = vpop.xlane.xlu0 %2832
        %2834 = vadd.xlane.f32.xlu0 %v2803
        %v2835 = vpop.xlane.xlu0 %2834
        %2836 = vadd.xlane.f32.xlu0 %v2805
        %v2837 = vpop.xlane.xlu0 %2836
        %2838 = vadd.xlane.f32.xlu0 %v2807
        %v2839 = vpop.xlane.xlu0 %2838
        %2840 = vadd.xlane.f32.xlu0 %v2809
        %v2841 = vpop.xlane.xlu0 %2840
        %2842 = vadd.xlane.f32.xlu0 %v2811
        %v2843 = vpop.xlane.xlu0 %2842
        %2844 = vadd.xlane.f32.xlu0 %v2813
        %v2845 = vpop.xlane.xlu0 %2844
        %2846 = vadd.xlane.f32.xlu0 %v2815
        %v2847 = vpop.xlane.xlu0 %2846
        %v2848 = vrcp.pop %v2817
        %v2849 = vmul.f32 1.0, %v2848
        %v2850 = vrcp.pop %v2819
        %v2851 = vmul.f32 1.0, %v2850
        %v2852 = vrcp.pop %v2821
        %v2853 = vmul.f32 1.0, %v2852
        %v2854 = vrcp.pop %v2823
        %v2855 = vmul.f32 1.0, %v2854
        %v2856 = vrcp.pop %v2825
        %v2857 = vmul.f32 1.0, %v2856
        %v2858 = vrcp.pop %v2827
        %v2859 = vmul.f32 1.0, %v2858
        %v2860 = vrcp.pop %v2829
        %v2861 = vmul.f32 1.0, %v2860
        %v2862 = vrcp.pop %v2831
        %v2863 = vmul.f32 1.0, %v2862
        %v2864 = vrcp.pop %v2833
        %v2865 = vmul.f32 1.0, %v2864
        %v2866 = vrcp.pop %v2835
        %v2867 = vmul.f32 1.0, %v2866
        %v2868 = vrcp.pop %v2837
        %v2869 = vmul.f32 1.0, %v2868
        %v2870 = vrcp.pop %v2839
        %v2871 = vmul.f32 1.0, %v2870
        %v2872 = vrcp.pop %v2841
        %v2873 = vmul.f32 1.0, %v2872
        %v2874 = vrcp.pop %v2843
        %v2875 = vmul.f32 1.0, %v2874
        %v2876 = vrcp.pop %v2845
        %v2877 = vmul.f32 1.0, %v2876
        %v2878 = vrcp.pop %v2847
        %v2879 = vmul.f32 1.0, %v2878
        %v2880 = vpack.c.bf16 %v2787, %v2785
        %v2881 = vpack.c.bf16 %v2791, %v2789
        %v2882 = vpack.c.bf16 %v2795, %v2793
        %v2883 = vpack.c.bf16 %v2799, %v2797
        %v2884 = vpack.c.bf16 %v2803, %v2801
        %v2885 = vpack.c.bf16 %v2807, %v2805
        %v2886 = vpack.c.bf16 %v2811, %v2809
        %v2887 = vpack.c.bf16 %v2815, %v2813
        %2896 = vmatprep.subr.bf16.mxu0 0
        %2897 = vmatpush1.bf16.msra.mxu0 %v2542
        %2898 = vmatprep.subr.bf16.mxu0 0
        %2899 = vmatpush1.bf16.msra.mxu0 %v2540
        %2900 = vmatprep.subr.bf16.mxu0 0
        %2901 = vmatpush1.bf16.msra.mxu0 %v2538
        %2902 = vmatprep.subr.bf16.mxu0 0
        %2903 = vmatpush1.bf16.msra.mxu0 %v2536
        %2904 = vmatprep.subr.bf16.mxu0 0
        %2905 = vmatpush1.bf16.msra.mxu0 %v2534
        %2906 = vmatprep.subr.bf16.mxu0 0
        %2907 = vmatpush1.bf16.msra.mxu0 %v2532
        %2908 = vmatprep.subr.bf16.mxu0 0
        %2909 = vmatpush1.bf16.msra.mxu0 %v2530
        %2910 = vmatprep.subr.bf16.mxu0 0
        %2911 = vmatpush1.bf16.msra.mxu0 %v2528
        %2912 = vmatprep.subr.bf16.mxu0 0
        %2913 = vmatpush2.bf16.msra.mxu0 0
        %2914 = vmatprep.subr.bf16.mxu0 0
        %2915 = vmatpush2.bf16.msra.mxu0 0
        %2916 = vmatprep.subr.bf16.mxu0 0
        %2917 = vmatpush2.bf16.msra.mxu0 0
        %2918 = vmatprep.subr.bf16.mxu0 0
        %2919 = vmatpush2.bf16.msra.mxu0 0
        %2920 = vmatprep.subr.bf16.mxu0 0
        %2921 = vmatpush2.bf16.msra.mxu0 0
        %2922 = vmatprep.subr.bf16.mxu0 0
        %2923 = vmatpush2.bf16.msra.mxu0 0
        %2924 = vmatprep.subr.bf16.mxu0 0
        %2925 = vmatpush2.bf16.msra.mxu0 0
        %2926 = vmatprep.subr.bf16.mxu0 0
        %2927 = vmatpush2.bf16.msra.mxu0 0
        %2928 = vmatprep.mubr.bf16.mxu0 0
        %2929 = vmatmul.mubr.bf16.gmra.mxu0 %v2880
        %v2930 = vpop.f32.mrf.mxu0
        %v2931 = vadd.f32 0.0, %v2930
        %v2932 = vpop.f32.mrf.mxu0
        %v2933 = vpop.f32.mrf.mxu0
        %v2934 = vadd.f32 0.0, %v2933
        %v2935 = vpop.f32.mrf.mxu0
        %2936 = vmatprep.mubr.bf16.mxu0 0
        %2937 = vmatmul.mubr.bf16.gmra.mxu0 %v2881
        %v2938 = vpop.f32.mrf.mxu0
        %v2939 = vadd.f32 0.0, %v2938
        %v2940 = vpop.f32.mrf.mxu0
        %v2941 = vpop.f32.mrf.mxu0
        %v2942 = vadd.f32 0.0, %v2941
        %v2943 = vpop.f32.mrf.mxu0
        %2944 = vmatprep.mubr.bf16.mxu0 0
        %2945 = vmatmul.mubr.bf16.gmra.mxu0 %v2882
        %v2946 = vpop.f32.mrf.mxu0
        %v2947 = vadd.f32 0.0, %v2946
        %v2948 = vpop.f32.mrf.mxu0
        %v2949 = vpop.f32.mrf.mxu0
        %v2950 = vadd.f32 0.0, %v2949
        %v2951 = vpop.f32.mrf.mxu0
        %2952 = vmatprep.mubr.bf16.mxu0 0
        %2953 = vmatmul.mubr.bf16.gmra.mxu0 %v2883
        %v2954 = vpop.f32.mrf.mxu0
        %v2955 = vadd.f32 0.0, %v2954
        %v2956 = vpop.f32.mrf.mxu0
        %v2957 = vpop.f32.mrf.mxu0
        %v2958 = vadd.f32 0.0, %v2957
        %v2959 = vpop.f32.mrf.mxu0
        %2960 = vmatprep.mubr.bf16.mxu0 0
        %2961 = vmatmul.mubr.bf16.gmra.mxu0 %v2884
        %v2962 = vpop.f32.mrf.mxu0
        %v2963 = vadd.f32 0.0, %v2962
        %v2964 = vpop.f32.mrf.mxu0
        %v2965 = vpop.f32.mrf.mxu0
        %v2966 = vadd.f32 0.0, %v2965
        %v2967 = vpop.f32.mrf.mxu0
        %2968 = vmatprep.mubr.bf16.mxu0 0
        %2969 = vmatmul.mubr.bf16.gmra.mxu0 %v2885
        %v2970 = vpop.f32.mrf.mxu0
        %v2971 = vadd.f32 0.0, %v2970
        %v2972 = vpop.f32.mrf.mxu0
        %v2973 = vpop.f32.mrf.mxu0
        %v2974 = vadd.f32 0.0, %v2973
        %v2975 = vpop.f32.mrf.mxu0
        %2976 = vmatprep.mubr.bf16.mxu0 0
        %2977 = vmatmul.mubr.bf16.gmra.mxu0 %v2886
        %v2978 = vpop.f32.mrf.mxu0
        %v2979 = vadd.f32 0.0, %v2978
        %v2980 = vpop.f32.mrf.mxu0
        %v2981 = vpop.f32.mrf.mxu0
        %v2982 = vadd.f32 0.0, %v2981
        %v2983 = vpop.f32.mrf.mxu0
        %2984 = vmatprep.mubr.bf16.mxu0 0
        %2985 = vmatmul.mubr.bf16.gmra.mxu0 %v2887
        %v2986 = vpop.f32.mrf.mxu0
        %v2987 = vadd.f32 0.0, %v2986
        %v2988 = vpop.f32.mrf.mxu0
        %v2989 = vpop.f32.mrf.mxu0
        %v2990 = vadd.f32 0.0, %v2989
        %v2991 = vpop.f32.mrf.mxu0
        %2992 = vdwg.mxu0
        %v2993 = vmul.f32 %v2931, %v2849
        %v2994 = vmul.f32 %v2934, %v2851
        %v2995 = vmul.f32 %v2939, %v2853
        %v2996 = vmul.f32 %v2942, %v2855
        %v2997 = vmul.f32 %v2947, %v2857
        %v2998 = vmul.f32 %v2950, %v2859
        %v2999 = vmul.f32 %v2955, %v2861
        %v3000 = vmul.f32 %v2958, %v2863
        %v3001 = vmul.f32 %v2963, %v2865
        %v3002 = vmul.f32 %v2966, %v2867
        %v3003 = vmul.f32 %v2971, %v2869
        %v3004 = vmul.f32 %v2974, %v2871
        %v3005 = vmul.f32 %v2979, %v2873
        %v3006 = vmul.f32 %v2982, %v2875
        %v3007 = vmul.f32 %v2987, %v2877
        %v3008 = vmul.f32 %v2990, %v2879
        %3009 = vrot.lane.b32.xlu0 %v1828, 64
        %v3010 = vpop.permute.xlu0 %3009
        %3011 = vrot.lane.b32.xlu0 %v1829, 64
        %v3012 = vpop.permute.xlu0 %3011
        %3013 = vrot.lane.b32.xlu0 %v1830, 64
        %v3014 = vpop.permute.xlu0 %3013
        %3015 = vrot.lane.b32.xlu0 %v1831, 64
        %v3016 = vpop.permute.xlu0 %3015
        %3017 = vrot.lane.b32.xlu0 %v1832, 64
        %v3018 = vpop.permute.xlu0 %3017
        %3019 = vrot.lane.b32.xlu0 %v1833, 64
        %v3020 = vpop.permute.xlu0 %3019
        %3021 = vrot.lane.b32.xlu0 %v1834, 64
        %v3022 = vpop.permute.xlu0 %3021
        %3023 = vrot.lane.b32.xlu0 %v1835, 64
        %v3024 = vpop.permute.xlu0 %3023
        %3025 = vrot.lane.b32.xlu0 %v1836, 64
        %v3026 = vpop.permute.xlu0 %3025
        %3027 = vrot.lane.b32.xlu0 %v1837, 64
        %v3028 = vpop.permute.xlu0 %3027
        %3029 = vrot.lane.b32.xlu0 %v1838, 64
        %v3030 = vpop.permute.xlu0 %3029
        %3031 = vrot.lane.b32.xlu0 %v1839, 64
        %v3032 = vpop.permute.xlu0 %3031
        %3033 = vrot.lane.b32.xlu0 %v1840, 64
        %v3034 = vpop.permute.xlu0 %3033
        %3035 = vrot.lane.b32.xlu0 %v1841, 64
        %v3036 = vpop.permute.xlu0 %3035
        %3037 = vrot.lane.b32.xlu0 %v1842, 64
        %v3038 = vpop.permute.xlu0 %3037
        %3039 = vrot.lane.b32.xlu0 %v1843, 64
        %v3040 = vpop.permute.xlu0 %3039
        %v3057 = vsel %vm1876, %v3010, 0.0
        %3058 = vadd.xlane.f32.xlu0 %v3057
        %v3059 = vpop.xlane.xlu0 %3058
        %v3060 = vsel %vm1876, %v3012, 0.0
        %3061 = vadd.xlane.f32.xlu0 %v3060
        %v3062 = vpop.xlane.xlu0 %3061
        %v3063 = vsel %vm1876, %v3014, 0.0
        %3064 = vadd.xlane.f32.xlu0 %v3063
        %v3065 = vpop.xlane.xlu0 %3064
        %v3066 = vsel %vm1876, %v3016, 0.0
        %3067 = vadd.xlane.f32.xlu0 %v3066
        %v3068 = vpop.xlane.xlu0 %3067
        %v3069 = vsel %vm1876, %v3018, 0.0
        %3070 = vadd.xlane.f32.xlu0 %v3069
        %v3071 = vpop.xlane.xlu0 %3070
        %v3072 = vsel %vm1876, %v3020, 0.0
        %3073 = vadd.xlane.f32.xlu0 %v3072
        %v3074 = vpop.xlane.xlu0 %3073
        %v3075 = vsel %vm1876, %v3022, 0.0
        %3076 = vadd.xlane.f32.xlu0 %v3075
        %v3077 = vpop.xlane.xlu0 %3076
        %v3078 = vsel %vm1876, %v3024, 0.0
        %3079 = vadd.xlane.f32.xlu0 %v3078
        %v3080 = vpop.xlane.xlu0 %3079
        %v3081 = vsel %vm1876, %v3026, 0.0
        %3082 = vadd.xlane.f32.xlu0 %v3081
        %v3083 = vpop.xlane.xlu0 %3082
        %v3084 = vsel %vm1876, %v3028, 0.0
        %3085 = vadd.xlane.f32.xlu0 %v3084
        %v3086 = vpop.xlane.xlu0 %3085
        %v3087 = vsel %vm1876, %v3030, 0.0
        %3088 = vadd.xlane.f32.xlu0 %v3087
        %v3089 = vpop.xlane.xlu0 %3088
        %v3090 = vsel %vm1876, %v3032, 0.0
        %3091 = vadd.xlane.f32.xlu0 %v3090
        %v3092 = vpop.xlane.xlu0 %3091
        %v3093 = vsel %vm1876, %v3034, 0.0
        %3094 = vadd.xlane.f32.xlu0 %v3093
        %v3095 = vpop.xlane.xlu0 %3094
        %v3096 = vsel %vm1876, %v3036, 0.0
        %3097 = vadd.xlane.f32.xlu0 %v3096
        %v3098 = vpop.xlane.xlu0 %3097
        %v3099 = vsel %vm1876, %v3038, 0.0
        %3100 = vadd.xlane.f32.xlu0 %v3099
        %v3101 = vpop.xlane.xlu0 %3100
        %v3102 = vsel %vm1876, %v3040, 0.0
        %3103 = vadd.xlane.f32.xlu0 %v3102
        %v3104 = vpop.xlane.xlu0 %3103
        %3105 = vrot.lane.b32.xlu0 %v1820, 64
        %v3106 = vpop.permute.xlu0 %3105
        %3107 = vrot.lane.b32.xlu0 %v1821, 64
        %v3108 = vpop.permute.xlu0 %3107
        %3109 = vrot.lane.b32.xlu0 %v1822, 64
        %v3110 = vpop.permute.xlu0 %3109
        %3111 = vrot.lane.b32.xlu0 %v1823, 64
        %v3112 = vpop.permute.xlu0 %3111
        %3113 = vrot.lane.b32.xlu0 %v1824, 64
        %v3114 = vpop.permute.xlu0 %3113
        %3115 = vrot.lane.b32.xlu0 %v1825, 64
        %v3116 = vpop.permute.xlu0 %3115
        %3117 = vrot.lane.b32.xlu0 %v1826, 64
        %v3118 = vpop.permute.xlu0 %3117
        %3119 = vrot.lane.b32.xlu0 %v1827, 64
        %v3120 = vpop.permute.xlu0 %3119
        %3121 = vrot.lane.b32.xlu0 %v970, 64
        %v3122 = vpop.permute.xlu0 %3121
        %3123 = vrot.lane.b32.xlu0 %v971, 64
        %v3124 = vpop.permute.xlu0 %3123
        %3125 = vrot.lane.b32.xlu0 %v972, 64
        %v3126 = vpop.permute.xlu0 %3125
        %3127 = vrot.lane.b32.xlu0 %v973, 64
        %v3128 = vpop.permute.xlu0 %3127
        %3129 = vrot.lane.b32.xlu0 %v974, 64
        %v3130 = vpop.permute.xlu0 %3129
        %3131 = vrot.lane.b32.xlu0 %v975, 64
        %v3132 = vpop.permute.xlu0 %3131
        %3133 = vrot.lane.b32.xlu0 %v976, 64
        %v3134 = vpop.permute.xlu0 %3133
        %3135 = vrot.lane.b32.xlu0 %v977, 64
        %v3136 = vpop.permute.xlu0 %3135
        %v3138 = vsel %vm1876, %v3106, 0
        %v3141 = vsel %vm1876, %v3108, 0
        %v3144 = vsel %vm1876, %v3110, 0
        %v3147 = vsel %vm1876, %v3112, 0
        %v3150 = vsel %vm1876, %v3114, 0
        %v3153 = vsel %vm1876, %v3116, 0
        %v3156 = vsel %vm1876, %v3118, 0
        %v3159 = vsel %vm1876, %v3120, 0
        %v3162 = vsel %vm1876, %v3122, 0
        %v3165 = vsel %vm1876, %v3124, 0
        %v3168 = vsel %vm1876, %v3126, 0
        %v3171 = vsel %vm1876, %v3128, 0
        %v3174 = vsel %vm1876, %v3130, 0
        %v3177 = vsel %vm1876, %v3132, 0
        %v3180 = vsel %vm1876, %v3134, 0
        %v3183 = vsel %vm1876, %v3136, 0
        %3185 = vmatprep.subr.bf16.mxu0 0
        %3186 = vmatpush1.bf16.xpose.msra.mxu0 %v3183
        %3187 = vmatprep.subr.bf16.mxu0 0
        %3188 = vmatpush1.bf16.xpose.msra.mxu0 %v3180
        %3189 = vmatprep.subr.bf16.mxu0 0
        %3190 = vmatpush1.bf16.xpose.msra.mxu0 %v3177
        %3191 = vmatprep.subr.bf16.mxu0 0
        %3192 = vmatpush1.bf16.xpose.msra.mxu0 %v3174
        %3193 = vmatprep.subr.bf16.mxu0 0
        %3194 = vmatpush1.bf16.xpose.msra.mxu0 %v3171
        %3195 = vmatprep.subr.bf16.mxu0 0
        %3196 = vmatpush1.bf16.xpose.msra.mxu0 %v3168
        %3197 = vmatprep.subr.bf16.mxu0 0
        %3198 = vmatpush1.bf16.xpose.msra.mxu0 %v3165
        %3199 = vmatprep.subr.bf16.mxu0 0
        %3200 = vmatpush1.bf16.xpose.msra.mxu0 %v3162
        %3201 = vmatprep.subr.bf16.mxu0 0
        %3202 = vmatpush2.bf16.xpose.msra.mxu0 0
        %3203 = vmatprep.subr.bf16.mxu0 0
        %3204 = vmatpush2.bf16.xpose.msra.mxu0 0
        %3205 = vmatprep.subr.bf16.mxu0 0
        %3206 = vmatpush2.bf16.xpose.msra.mxu0 0
        %3207 = vmatprep.subr.bf16.mxu0 0
        %3208 = vmatpush2.bf16.xpose.msra.mxu0 0
        %3209 = vmatprep.subr.bf16.mxu0 0
        %3210 = vmatpush2.bf16.xpose.msra.mxu0 0
        %3211 = vmatprep.subr.bf16.mxu0 0
        %3212 = vmatpush2.bf16.xpose.msra.mxu0 0
        %3213 = vmatprep.subr.bf16.mxu0 0
        %3214 = vmatpush2.bf16.xpose.msra.mxu0 0
        %3215 = vmatprep.subr.bf16.mxu0 0
        %3216 = vmatpush2.bf16.xpose.msra.mxu0 0
        %3217 = vmatprep.mubr.bf16.mxu0 0
        %3218 = vmatmul.mubr.bf16.gmra.mxu0 %v3138
        %v3219 = vpop.f32.mrf.mxu0
        %v3220 = vadd.f32 0.0, %v3219
        %v3221 = vpop.f32.mrf.mxu0
        %v3222 = vpop.f32.mrf.mxu0
        %v3223 = vadd.f32 0.0, %v3222
        %v3224 = vpop.f32.mrf.mxu0
        %3225 = vmatprep.mubr.bf16.mxu0 0
        %3226 = vmatmul.mubr.bf16.gmra.mxu0 %v3141
        %v3227 = vpop.f32.mrf.mxu0
        %v3228 = vadd.f32 0.0, %v3227
        %v3229 = vpop.f32.mrf.mxu0
        %v3230 = vpop.f32.mrf.mxu0
        %v3231 = vadd.f32 0.0, %v3230
        %v3232 = vpop.f32.mrf.mxu0
        %3233 = vmatprep.mubr.bf16.mxu0 0
        %3234 = vmatmul.mubr.bf16.gmra.mxu0 %v3144
        %v3235 = vpop.f32.mrf.mxu0
        %v3236 = vadd.f32 0.0, %v3235
        %v3237 = vpop.f32.mrf.mxu0
        %v3238 = vpop.f32.mrf.mxu0
        %v3239 = vadd.f32 0.0, %v3238
        %v3240 = vpop.f32.mrf.mxu0
        %3241 = vmatprep.mubr.bf16.mxu0 0
        %3242 = vmatmul.mubr.bf16.gmra.mxu0 %v3147
        %v3243 = vpop.f32.mrf.mxu0
        %v3244 = vadd.f32 0.0, %v3243
        %v3245 = vpop.f32.mrf.mxu0
        %v3246 = vpop.f32.mrf.mxu0
        %v3247 = vadd.f32 0.0, %v3246
        %v3248 = vpop.f32.mrf.mxu0
        %3249 = vmatprep.mubr.bf16.mxu0 0
        %3250 = vmatmul.mubr.bf16.gmra.mxu0 %v3150
        %v3251 = vpop.f32.mrf.mxu0
        %v3252 = vadd.f32 0.0, %v3251
        %v3253 = vpop.f32.mrf.mxu0
        %v3254 = vpop.f32.mrf.mxu0
        %v3255 = vadd.f32 0.0, %v3254
        %v3256 = vpop.f32.mrf.mxu0
        %3257 = vmatprep.mubr.bf16.mxu0 0
        %3258 = vmatmul.mubr.bf16.gmra.mxu0 %v3153
        %v3259 = vpop.f32.mrf.mxu0
        %v3260 = vadd.f32 0.0, %v3259
        %v3261 = vpop.f32.mrf.mxu0
        %v3262 = vpop.f32.mrf.mxu0
        %v3263 = vadd.f32 0.0, %v3262
        %v3264 = vpop.f32.mrf.mxu0
        %3265 = vmatprep.mubr.bf16.mxu0 0
        %3266 = vmatmul.mubr.bf16.gmra.mxu0 %v3156
        %v3267 = vpop.f32.mrf.mxu0
        %v3268 = vadd.f32 0.0, %v3267
        %v3269 = vpop.f32.mrf.mxu0
        %v3270 = vpop.f32.mrf.mxu0
        %v3271 = vadd.f32 0.0, %v3270
        %v3272 = vpop.f32.mrf.mxu0
        %3273 = vmatprep.mubr.bf16.mxu0 0
        %3274 = vmatmul.mubr.bf16.gmra.mxu0 %v3159
        %v3275 = vpop.f32.mrf.mxu0
        %v3276 = vadd.f32 0.0, %v3275
        %v3277 = vpop.f32.mrf.mxu0
        %v3278 = vpop.f32.mrf.mxu0
        %v3279 = vadd.f32 0.0, %v3278
        %v3280 = vpop.f32.mrf.mxu0
        %3281 = vdwg.mxu0
        %v3282 = vadd.f32 %v3059, %v3220
        %v3283 = vadd.f32 %v3062, %v3223
        %v3284 = vadd.f32 %v3065, %v3228
        %v3285 = vadd.f32 %v3068, %v3231
        %v3286 = vadd.f32 %v3071, %v3236
        %v3287 = vadd.f32 %v3074, %v3239
        %v3288 = vadd.f32 %v3077, %v3244
        %v3289 = vadd.f32 %v3080, %v3247
        %v3290 = vadd.f32 %v3083, %v3252
        %v3291 = vadd.f32 %v3086, %v3255
        %v3292 = vadd.f32 %v3089, %v3260
        %v3293 = vadd.f32 %v3092, %v3263
        %v3294 = vadd.f32 %v3095, %v3268
        %v3295 = vadd.f32 %v3098, %v3271
        %v3296 = vadd.f32 %v3101, %v3276
        %v3297 = vadd.f32 %v3104, %v3279
        %v3298 = vadd.f32 %v3282, %v1860
        %v3299 = vadd.f32 %v3283, %v1861
        %v3300 = vadd.f32 %v3284, %v1862
        %v3301 = vadd.f32 %v3285, %v1863
        %v3302 = vadd.f32 %v3286, %v1864
        %v3303 = vadd.f32 %v3287, %v1865
        %v3304 = vadd.f32 %v3288, %v1866
        %v3305 = vadd.f32 %v3289, %v1867
        %v3306 = vadd.f32 %v3290, %v1868
        %v3307 = vadd.f32 %v3291, %v1869
        %v3308 = vadd.f32 %v3292, %v1870
        %v3309 = vadd.f32 %v3293, %v1871
        %v3310 = vadd.f32 %v3294, %v1872
        %v3311 = vadd.f32 %v3295, %v1873
        %v3312 = vadd.f32 %v3296, %v1874
        %v3313 = vadd.f32 %v3297, %v1875
        %v3314 = vmul.f32 %v3298, 0.17677669
        %v3315 = vmul.f32 %v3299, 0.17677669
        %v3316 = vmul.f32 %v3300, 0.17677669
        %v3317 = vmul.f32 %v3301, 0.17677669
        %v3318 = vmul.f32 %v3302, 0.17677669
        %v3319 = vmul.f32 %v3303, 0.17677669
        %v3320 = vmul.f32 %v3304, 0.17677669
        %v3321 = vmul.f32 %v3305, 0.17677669
        %v3322 = vmul.f32 %v3306, 0.17677669
        %v3323 = vmul.f32 %v3307, 0.17677669
        %v3324 = vmul.f32 %v3308, 0.17677669
        %v3325 = vmul.f32 %v3309, 0.17677669
        %v3326 = vmul.f32 %v3310, 0.17677669
        %v3327 = vmul.f32 %v3311, 0.17677669
        %v3328 = vmul.f32 %v3312, 0.17677669
        %v3329 = vmul.f32 %v3313, 0.17677669
        %3330 = vmax.xlane.f32.xlu0 %v3314
        %v3331 = vpop.xlane.xlu0 %3330
        %3332 = vmax.xlane.f32.xlu0 %v3315
        %v3333 = vpop.xlane.xlu0 %3332
        %3334 = vmax.xlane.f32.xlu0 %v3316
        %v3335 = vpop.xlane.xlu0 %3334
        %3336 = vmax.xlane.f32.xlu0 %v3317
        %v3337 = vpop.xlane.xlu0 %3336
        %3338 = vmax.xlane.f32.xlu0 %v3318
        %v3339 = vpop.xlane.xlu0 %3338
        %3340 = vmax.xlane.f32.xlu0 %v3319
        %v3341 = vpop.xlane.xlu0 %3340
        %3342 = vmax.xlane.f32.xlu0 %v3320
        %v3343 = vpop.xlane.xlu0 %3342
        %3344 = vmax.xlane.f32.xlu0 %v3321
        %v3345 = vpop.xlane.xlu0 %3344
        %3346 = vmax.xlane.f32.xlu0 %v3322
        %v3347 = vpop.xlane.xlu0 %3346
        %3348 = vmax.xlane.f32.xlu0 %v3323
        %v3349 = vpop.xlane.xlu0 %3348
        %3350 = vmax.xlane.f32.xlu0 %v3324
        %v3351 = vpop.xlane.xlu0 %3350
        %3352 = vmax.xlane.f32.xlu0 %v3325
        %v3353 = vpop.xlane.xlu0 %3352
        %3354 = vmax.xlane.f32.xlu0 %v3326
        %v3355 = vpop.xlane.xlu0 %3354
        %3356 = vmax.xlane.f32.xlu0 %v3327
        %v3357 = vpop.xlane.xlu0 %3356
        %3358 = vmax.xlane.f32.xlu0 %v3328
        %v3359 = vpop.xlane.xlu0 %3358
        %3360 = vmax.xlane.f32.xlu0 %v3329
        %v3361 = vpop.xlane.xlu0 %3360
        %v3362 = vsub.f32 %v3314, %v3331
        %v3363 = vsub.f32 %v3315, %v3333
        %v3364 = vsub.f32 %v3316, %v3335
        %v3365 = vsub.f32 %v3317, %v3337
        %v3366 = vsub.f32 %v3318, %v3339
        %v3367 = vsub.f32 %v3319, %v3341
        %v3368 = vsub.f32 %v3320, %v3343
        %v3369 = vsub.f32 %v3321, %v3345
        %v3370 = vsub.f32 %v3322, %v3347
        %v3371 = vsub.f32 %v3323, %v3349
        %v3372 = vsub.f32 %v3324, %v3351
        %v3373 = vsub.f32 %v3325, %v3353
        %v3374 = vsub.f32 %v3326, %v3355
        %v3375 = vsub.f32 %v3327, %v3357
        %v3376 = vsub.f32 %v3328, %v3359
        %v3377 = vsub.f32 %v3329, %v3361
        %v3378 = vmul.f32 %v3362, 1.442695
        %v3379 = vpow.pop %v3378
        %v3380 = vmul.f32 %v3363, 1.442695
        %v3381 = vpow.pop %v3380
        %v3382 = vmul.f32 %v3364, 1.442695
        %v3383 = vpow.pop %v3382
        %v3384 = vmul.f32 %v3365, 1.442695
        %v3385 = vpow.pop %v3384
        %v3386 = vmul.f32 %v3366, 1.442695
        %v3387 = vpow.pop %v3386
        %v3388 = vmul.f32 %v3367, 1.442695
        %v3389 = vpow.pop %v3388
        %v3390 = vmul.f32 %v3368, 1.442695
        %v3391 = vpow.pop %v3390
        %v3392 = vmul.f32 %v3369, 1.442695
        %v3393 = vpow.pop %v3392
        %v3394 = vmul.f32 %v3370, 1.442695
        %v3395 = vpow.pop %v3394
        %v3396 = vmul.f32 %v3371, 1.442695
        %v3397 = vpow.pop %v3396
        %v3398 = vmul.f32 %v3372, 1.442695
        %v3399 = vpow.pop %v3398
        %v3400 = vmul.f32 %v3373, 1.442695
        %v3401 = vpow.pop %v3400
        %v3402 = vmul.f32 %v3374, 1.442695
        %v3403 = vpow.pop %v3402
        %v3404 = vmul.f32 %v3375, 1.442695
        %v3405 = vpow.pop %v3404
        %v3406 = vmul.f32 %v3376, 1.442695
        %v3407 = vpow.pop %v3406
        %v3408 = vmul.f32 %v3377, 1.442695
        %v3409 = vpow.pop %v3408
        %3410 = vadd.xlane.f32.xlu0 %v3379
        %v3411 = vpop.xlane.xlu0 %3410
        %3412 = vadd.xlane.f32.xlu0 %v3381
        %v3413 = vpop.xlane.xlu0 %3412
        %3414 = vadd.xlane.f32.xlu0 %v3383
        %v3415 = vpop.xlane.xlu0 %3414
        %3416 = vadd.xlane.f32.xlu0 %v3385
        %v3417 = vpop.xlane.xlu0 %3416
        %3418 = vadd.xlane.f32.xlu0 %v3387
        %v3419 = vpop.xlane.xlu0 %3418
        %3420 = vadd.xlane.f32.xlu0 %v3389
        %v3421 = vpop.xlane.xlu0 %3420
        %3422 = vadd.xlane.f32.xlu0 %v3391
        %v3423 = vpop.xlane.xlu0 %3422
        %3424 = vadd.xlane.f32.xlu0 %v3393
        %v3425 = vpop.xlane.xlu0 %3424
        %3426 = vadd.xlane.f32.xlu0 %v3395
        %v3427 = vpop.xlane.xlu0 %3426
        %3428 = vadd.xlane.f32.xlu0 %v3397
        %v3429 = vpop.xlane.xlu0 %3428
        %3430 = vadd.xlane.f32.xlu0 %v3399
        %v3431 = vpop.xlane.xlu0 %3430
        %3432 = vadd.xlane.f32.xlu0 %v3401
        %v3433 = vpop.xlane.xlu0 %3432
        %3434 = vadd.xlane.f32.xlu0 %v3403
        %v3435 = vpop.xlane.xlu0 %3434
        %3436 = vadd.xlane.f32.xlu0 %v3405
        %v3437 = vpop.xlane.xlu0 %3436
        %3438 = vadd.xlane.f32.xlu0 %v3407
        %v3439 = vpop.xlane.xlu0 %3438
        %3440 = vadd.xlane.f32.xlu0 %v3409
        %v3441 = vpop.xlane.xlu0 %3440
        %v3442 = vrcp.pop %v3411
        %v3443 = vmul.f32 1.0, %v3442
        %v3444 = vrcp.pop %v3413
        %v3445 = vmul.f32 1.0, %v3444
        %v3446 = vrcp.pop %v3415
        %v3447 = vmul.f32 1.0, %v3446
        %v3448 = vrcp.pop %v3417
        %v3449 = vmul.f32 1.0, %v3448
        %v3450 = vrcp.pop %v3419
        %v3451 = vmul.f32 1.0, %v3450
        %v3452 = vrcp.pop %v3421
        %v3453 = vmul.f32 1.0, %v3452
        %v3454 = vrcp.pop %v3423
        %v3455 = vmul.f32 1.0, %v3454
        %v3456 = vrcp.pop %v3425
        %v3457 = vmul.f32 1.0, %v3456
        %v3458 = vrcp.pop %v3427
        %v3459 = vmul.f32 1.0, %v3458
        %v3460 = vrcp.pop %v3429
        %v3461 = vmul.f32 1.0, %v3460
        %v3462 = vrcp.pop %v3431
        %v3463 = vmul.f32 1.0, %v3462
        %v3464 = vrcp.pop %v3433
        %v3465 = vmul.f32 1.0, %v3464
        %v3466 = vrcp.pop %v3435
        %v3467 = vmul.f32 1.0, %v3466
        %v3468 = vrcp.pop %v3437
        %v3469 = vmul.f32 1.0, %v3468
        %v3470 = vrcp.pop %v3439
        %v3471 = vmul.f32 1.0, %v3470
        %v3472 = vrcp.pop %v3441
        %v3473 = vmul.f32 1.0, %v3472
        %v3474 = vpack.c.bf16 %v3381, %v3379
        %v3475 = vpack.c.bf16 %v3385, %v3383
        %v3476 = vpack.c.bf16 %v3389, %v3387
        %v3477 = vpack.c.bf16 %v3393, %v3391
        %v3478 = vpack.c.bf16 %v3397, %v3395
        %v3479 = vpack.c.bf16 %v3401, %v3399
        %v3480 = vpack.c.bf16 %v3405, %v3403
        %v3481 = vpack.c.bf16 %v3409, %v3407
        %3490 = vmatprep.subr.bf16.mxu0 0
        %3491 = vmatpush1.bf16.msra.mxu0 %v3136
        %3492 = vmatprep.subr.bf16.mxu0 0
        %3493 = vmatpush1.bf16.msra.mxu0 %v3134
        %3494 = vmatprep.subr.bf16.mxu0 0
        %3495 = vmatpush1.bf16.msra.mxu0 %v3132
        %3496 = vmatprep.subr.bf16.mxu0 0
        %3497 = vmatpush1.bf16.msra.mxu0 %v3130
        %3498 = vmatprep.subr.bf16.mxu0 0
        %3499 = vmatpush1.bf16.msra.mxu0 %v3128
        %3500 = vmatprep.subr.bf16.mxu0 0
        %3501 = vmatpush1.bf16.msra.mxu0 %v3126
        %3502 = vmatprep.subr.bf16.mxu0 0
        %3503 = vmatpush1.bf16.msra.mxu0 %v3124
        %3504 = vmatprep.subr.bf16.mxu0 0
        %3505 = vmatpush1.bf16.msra.mxu0 %v3122
        %3506 = vmatprep.subr.bf16.mxu0 0
        %3507 = vmatpush2.bf16.msra.mxu0 0
        %3508 = vmatprep.subr.bf16.mxu0 0
        %3509 = vmatpush2.bf16.msra.mxu0 0
        %3510 = vmatprep.subr.bf16.mxu0 0
        %3511 = vmatpush2.bf16.msra.mxu0 0
        %3512 = vmatprep.subr.bf16.mxu0 0
        %3513 = vmatpush2.bf16.msra.mxu0 0
        %3514 = vmatprep.subr.bf16.mxu0 0
        %3515 = vmatpush2.bf16.msra.mxu0 0
        %3516 = vmatprep.subr.bf16.mxu0 0
        %3517 = vmatpush2.bf16.msra.mxu0 0
        %3518 = vmatprep.subr.bf16.mxu0 0
        %3519 = vmatpush2.bf16.msra.mxu0 0
        %3520 = vmatprep.subr.bf16.mxu0 0
        %3521 = vmatpush2.bf16.msra.mxu0 0
        %3522 = vmatprep.mubr.bf16.mxu0 0
        %3523 = vmatmul.mubr.bf16.gmra.mxu0 %v3474
        %v3524 = vpop.f32.mrf.mxu0
        %v3525 = vadd.f32 0.0, %v3524
        %v3526 = vpop.f32.mrf.mxu0
        %v3527 = vpop.f32.mrf.mxu0
        %v3528 = vadd.f32 0.0, %v3527
        %v3529 = vpop.f32.mrf.mxu0
        %3530 = vmatprep.mubr.bf16.mxu0 0
        %3531 = vmatmul.mubr.bf16.gmra.mxu0 %v3475
        %v3532 = vpop.f32.mrf.mxu0
        %v3533 = vadd.f32 0.0, %v3532
        %v3534 = vpop.f32.mrf.mxu0
        %v3535 = vpop.f32.mrf.mxu0
        %v3536 = vadd.f32 0.0, %v3535
        %v3537 = vpop.f32.mrf.mxu0
        %3538 = vmatprep.mubr.bf16.mxu0 0
        %3539 = vmatmul.mubr.bf16.gmra.mxu0 %v3476
        %v3540 = vpop.f32.mrf.mxu0
        %v3541 = vadd.f32 0.0, %v3540
        %v3542 = vpop.f32.mrf.mxu0
        %v3543 = vpop.f32.mrf.mxu0
        %v3544 = vadd.f32 0.0, %v3543
        %v3545 = vpop.f32.mrf.mxu0
        %3546 = vmatprep.mubr.bf16.mxu0 0
        %3547 = vmatmul.mubr.bf16.gmra.mxu0 %v3477
        %v3548 = vpop.f32.mrf.mxu0
        %v3549 = vadd.f32 0.0, %v3548
        %v3550 = vpop.f32.mrf.mxu0
        %v3551 = vpop.f32.mrf.mxu0
        %v3552 = vadd.f32 0.0, %v3551
        %v3553 = vpop.f32.mrf.mxu0
        %3554 = vmatprep.mubr.bf16.mxu0 0
        %3555 = vmatmul.mubr.bf16.gmra.mxu0 %v3478
        %v3556 = vpop.f32.mrf.mxu0
        %v3557 = vadd.f32 0.0, %v3556
        %v3558 = vpop.f32.mrf.mxu0
        %v3559 = vpop.f32.mrf.mxu0
        %v3560 = vadd.f32 0.0, %v3559
        %v3561 = vpop.f32.mrf.mxu0
        %3562 = vmatprep.mubr.bf16.mxu0 0
        %3563 = vmatmul.mubr.bf16.gmra.mxu0 %v3479
        %v3564 = vpop.f32.mrf.mxu0
        %v3565 = vadd.f32 0.0, %v3564
        %v3566 = vpop.f32.mrf.mxu0
        %v3567 = vpop.f32.mrf.mxu0
        %v3568 = vadd.f32 0.0, %v3567
        %v3569 = vpop.f32.mrf.mxu0
        %3570 = vmatprep.mubr.bf16.mxu0 0
        %3571 = vmatmul.mubr.bf16.gmra.mxu0 %v3480
        %v3572 = vpop.f32.mrf.mxu0
        %v3573 = vadd.f32 0.0, %v3572
        %v3574 = vpop.f32.mrf.mxu0
        %v3575 = vpop.f32.mrf.mxu0
        %v3576 = vadd.f32 0.0, %v3575
        %v3577 = vpop.f32.mrf.mxu0
        %3578 = vmatprep.mubr.bf16.mxu0 0
        %3579 = vmatmul.mubr.bf16.gmra.mxu0 %v3481
        %v3580 = vpop.f32.mrf.mxu0
        %v3581 = vadd.f32 0.0, %v3580
        %v3582 = vpop.f32.mrf.mxu0
        %v3583 = vpop.f32.mrf.mxu0
        %v3584 = vadd.f32 0.0, %v3583
        %v3585 = vpop.f32.mrf.mxu0
        %3586 = vdwg.mxu0
        %v3587 = vmul.f32 %v3525, %v3443
        %v3588 = vmul.f32 %v3528, %v3445
        %v3589 = vmul.f32 %v3533, %v3447
        %v3590 = vmul.f32 %v3536, %v3449
        %v3591 = vmul.f32 %v3541, %v3451
        %v3592 = vmul.f32 %v3544, %v3453
        %v3593 = vmul.f32 %v3549, %v3455
        %v3594 = vmul.f32 %v3552, %v3457
        %v3595 = vmul.f32 %v3557, %v3459
        %v3596 = vmul.f32 %v3560, %v3461
        %v3597 = vmul.f32 %v3565, %v3463
        %v3598 = vmul.f32 %v3568, %v3465
        %v3599 = vmul.f32 %v3573, %v3467
        %v3600 = vmul.f32 %v3576, %v3469
        %v3601 = vmul.f32 %v3581, %v3471
        %v3602 = vmul.f32 %v3584, %v3473
        %3603 = vrot.lane.b32.xlu0 %v1828, 32
        %v3604 = vpop.permute.xlu0 %3603
        %3605 = vrot.lane.b32.xlu0 %v1829, 32
        %v3606 = vpop.permute.xlu0 %3605
        %3607 = vrot.lane.b32.xlu0 %v1830, 32
        %v3608 = vpop.permute.xlu0 %3607
        %3609 = vrot.lane.b32.xlu0 %v1831, 32
        %v3610 = vpop.permute.xlu0 %3609
        %3611 = vrot.lane.b32.xlu0 %v1832, 32
        %v3612 = vpop.permute.xlu0 %3611
        %3613 = vrot.lane.b32.xlu0 %v1833, 32
        %v3614 = vpop.permute.xlu0 %3613
        %3615 = vrot.lane.b32.xlu0 %v1834, 32
        %v3616 = vpop.permute.xlu0 %3615
        %3617 = vrot.lane.b32.xlu0 %v1835, 32
        %v3618 = vpop.permute.xlu0 %3617
        %3619 = vrot.lane.b32.xlu0 %v1836, 32
        %v3620 = vpop.permute.xlu0 %3619
        %3621 = vrot.lane.b32.xlu0 %v1837, 32
        %v3622 = vpop.permute.xlu0 %3621
        %3623 = vrot.lane.b32.xlu0 %v1838, 32
        %v3624 = vpop.permute.xlu0 %3623
        %3625 = vrot.lane.b32.xlu0 %v1839, 32
        %v3626 = vpop.permute.xlu0 %3625
        %3627 = vrot.lane.b32.xlu0 %v1840, 32
        %v3628 = vpop.permute.xlu0 %3627
        %3629 = vrot.lane.b32.xlu0 %v1841, 32
        %v3630 = vpop.permute.xlu0 %3629
        %3631 = vrot.lane.b32.xlu0 %v1842, 32
        %v3632 = vpop.permute.xlu0 %3631
        %3633 = vrot.lane.b32.xlu0 %v1843, 32
        %v3634 = vpop.permute.xlu0 %3633
        %v3651 = vsel %vm1876, %v3604, 0.0
        %3652 = vadd.xlane.f32.xlu0 %v3651
        %v3653 = vpop.xlane.xlu0 %3652
        %v3654 = vsel %vm1876, %v3606, 0.0
        %3655 = vadd.xlane.f32.xlu0 %v3654
        %v3656 = vpop.xlane.xlu0 %3655
        %v3657 = vsel %vm1876, %v3608, 0.0
        %3658 = vadd.xlane.f32.xlu0 %v3657
        %v3659 = vpop.xlane.xlu0 %3658
        %v3660 = vsel %vm1876, %v3610, 0.0
        %3661 = vadd.xlane.f32.xlu0 %v3660
        %v3662 = vpop.xlane.xlu0 %3661
        %v3663 = vsel %vm1876, %v3612, 0.0
        %3664 = vadd.xlane.f32.xlu0 %v3663
        %v3665 = vpop.xlane.xlu0 %3664
        %v3666 = vsel %vm1876, %v3614, 0.0
        %3667 = vadd.xlane.f32.xlu0 %v3666
        %v3668 = vpop.xlane.xlu0 %3667
        %v3669 = vsel %vm1876, %v3616, 0.0
        %3670 = vadd.xlane.f32.xlu0 %v3669
        %v3671 = vpop.xlane.xlu0 %3670
        %v3672 = vsel %vm1876, %v3618, 0.0
        %3673 = vadd.xlane.f32.xlu0 %v3672
        %v3674 = vpop.xlane.xlu0 %3673
        %v3675 = vsel %vm1876, %v3620, 0.0
        %3676 = vadd.xlane.f32.xlu0 %v3675
        %v3677 = vpop.xlane.xlu0 %3676
        %v3678 = vsel %vm1876, %v3622, 0.0
        %3679 = vadd.xlane.f32.xlu0 %v3678
        %v3680 = vpop.xlane.xlu0 %3679
        %v3681 = vsel %vm1876, %v3624, 0.0
        %3682 = vadd.xlane.f32.xlu0 %v3681
        %v3683 = vpop.xlane.xlu0 %3682
        %v3684 = vsel %vm1876, %v3626, 0.0
        %3685 = vadd.xlane.f32.xlu0 %v3684
        %v3686 = vpop.xlane.xlu0 %3685
        %v3687 = vsel %vm1876, %v3628, 0.0
        %3688 = vadd.xlane.f32.xlu0 %v3687
        %v3689 = vpop.xlane.xlu0 %3688
        %v3690 = vsel %vm1876, %v3630, 0.0
        %3691 = vadd.xlane.f32.xlu0 %v3690
        %v3692 = vpop.xlane.xlu0 %3691
        %v3693 = vsel %vm1876, %v3632, 0.0
        %3694 = vadd.xlane.f32.xlu0 %v3693
        %v3695 = vpop.xlane.xlu0 %3694
        %v3696 = vsel %vm1876, %v3634, 0.0
        %3697 = vadd.xlane.f32.xlu0 %v3696
        %v3698 = vpop.xlane.xlu0 %3697
        %3699 = vrot.lane.b32.xlu0 %v1820, 32
        %v3700 = vpop.permute.xlu0 %3699
        %3701 = vrot.lane.b32.xlu0 %v1821, 32
        %v3702 = vpop.permute.xlu0 %3701
        %3703 = vrot.lane.b32.xlu0 %v1822, 32
        %v3704 = vpop.permute.xlu0 %3703
        %3705 = vrot.lane.b32.xlu0 %v1823, 32
        %v3706 = vpop.permute.xlu0 %3705
        %3707 = vrot.lane.b32.xlu0 %v1824, 32
        %v3708 = vpop.permute.xlu0 %3707
        %3709 = vrot.lane.b32.xlu0 %v1825, 32
        %v3710 = vpop.permute.xlu0 %3709
        %3711 = vrot.lane.b32.xlu0 %v1826, 32
        %v3712 = vpop.permute.xlu0 %3711
        %3713 = vrot.lane.b32.xlu0 %v1827, 32
        %v3714 = vpop.permute.xlu0 %3713
        %3715 = vrot.lane.b32.xlu0 %v970, 32
        %v3716 = vpop.permute.xlu0 %3715
        %3717 = vrot.lane.b32.xlu0 %v971, 32
        %v3718 = vpop.permute.xlu0 %3717
        %3719 = vrot.lane.b32.xlu0 %v972, 32
        %v3720 = vpop.permute.xlu0 %3719
        %3721 = vrot.lane.b32.xlu0 %v973, 32
        %v3722 = vpop.permute.xlu0 %3721
        %3723 = vrot.lane.b32.xlu0 %v974, 32
        %v3724 = vpop.permute.xlu0 %3723
        %3725 = vrot.lane.b32.xlu0 %v975, 32
        %v3726 = vpop.permute.xlu0 %3725
        %3727 = vrot.lane.b32.xlu0 %v976, 32
        %v3728 = vpop.permute.xlu0 %3727
        %3729 = vrot.lane.b32.xlu0 %v977, 32
        %v3730 = vpop.permute.xlu0 %3729
        %v3732 = vsel %vm1876, %v3700, 0
        %v3735 = vsel %vm1876, %v3702, 0
        %v3738 = vsel %vm1876, %v3704, 0
        %v3741 = vsel %vm1876, %v3706, 0
        %v3744 = vsel %vm1876, %v3708, 0
        %v3747 = vsel %vm1876, %v3710, 0
        %v3750 = vsel %vm1876, %v3712, 0
        %v3753 = vsel %vm1876, %v3714, 0
        %v3756 = vsel %vm1876, %v3716, 0
        %v3759 = vsel %vm1876, %v3718, 0
        %v3762 = vsel %vm1876, %v3720, 0
        %v3765 = vsel %vm1876, %v3722, 0
        %v3768 = vsel %vm1876, %v3724, 0
        %v3771 = vsel %vm1876, %v3726, 0
        %v3774 = vsel %vm1876, %v3728, 0
        %v3777 = vsel %vm1876, %v3730, 0
        %3779 = vmatprep.subr.bf16.mxu0 0
        %3780 = vmatpush1.bf16.xpose.msra.mxu0 %v3777
        %3781 = vmatprep.subr.bf16.mxu0 0
        %3782 = vmatpush1.bf16.xpose.msra.mxu0 %v3774
        %3783 = vmatprep.subr.bf16.mxu0 0
        %3784 = vmatpush1.bf16.xpose.msra.mxu0 %v3771
        %3785 = vmatprep.subr.bf16.mxu0 0
        %3786 = vmatpush1.bf16.xpose.msra.mxu0 %v3768
        %3787 = vmatprep.subr.bf16.mxu0 0
        %3788 = vmatpush1.bf16.xpose.msra.mxu0 %v3765
        %3789 = vmatprep.subr.bf16.mxu0 0
        %3790 = vmatpush1.bf16.xpose.msra.mxu0 %v3762
        %3791 = vmatprep.subr.bf16.mxu0 0
        %3792 = vmatpush1.bf16.xpose.msra.mxu0 %v3759
        %3793 = vmatprep.subr.bf16.mxu0 0
        %3794 = vmatpush1.bf16.xpose.msra.mxu0 %v3756
        %3795 = vmatprep.subr.bf16.mxu0 0
        %3796 = vmatpush2.bf16.xpose.msra.mxu0 0
        %3797 = vmatprep.subr.bf16.mxu0 0
        %3798 = vmatpush2.bf16.xpose.msra.mxu0 0
        %3799 = vmatprep.subr.bf16.mxu0 0
        %3800 = vmatpush2.bf16.xpose.msra.mxu0 0
        %3801 = vmatprep.subr.bf16.mxu0 0
        %3802 = vmatpush2.bf16.xpose.msra.mxu0 0
        %3803 = vmatprep.subr.bf16.mxu0 0
        %3804 = vmatpush2.bf16.xpose.msra.mxu0 0
        %3805 = vmatprep.subr.bf16.mxu0 0
        %3806 = vmatpush2.bf16.xpose.msra.mxu0 0
        %3807 = vmatprep.subr.bf16.mxu0 0
        %3808 = vmatpush2.bf16.xpose.msra.mxu0 0
        %3809 = vmatprep.subr.bf16.mxu0 0
        %3810 = vmatpush2.bf16.xpose.msra.mxu0 0
        %3811 = vmatprep.mubr.bf16.mxu0 0
        %3812 = vmatmul.mubr.bf16.gmra.mxu0 %v3732
        %v3813 = vpop.f32.mrf.mxu0
        %v3814 = vadd.f32 0.0, %v3813
        %v3815 = vpop.f32.mrf.mxu0
        %v3816 = vpop.f32.mrf.mxu0
        %v3817 = vadd.f32 0.0, %v3816
        %v3818 = vpop.f32.mrf.mxu0
        %3819 = vmatprep.mubr.bf16.mxu0 0
        %3820 = vmatmul.mubr.bf16.gmra.mxu0 %v3735
        %v3821 = vpop.f32.mrf.mxu0
        %v3822 = vadd.f32 0.0, %v3821
        %v3823 = vpop.f32.mrf.mxu0
        %v3824 = vpop.f32.mrf.mxu0
        %v3825 = vadd.f32 0.0, %v3824
        %v3826 = vpop.f32.mrf.mxu0
        %3827 = vmatprep.mubr.bf16.mxu0 0
        %3828 = vmatmul.mubr.bf16.gmra.mxu0 %v3738
        %v3829 = vpop.f32.mrf.mxu0
        %v3830 = vadd.f32 0.0, %v3829
        %v3831 = vpop.f32.mrf.mxu0
        %v3832 = vpop.f32.mrf.mxu0
        %v3833 = vadd.f32 0.0, %v3832
        %v3834 = vpop.f32.mrf.mxu0
        %3835 = vmatprep.mubr.bf16.mxu0 0
        %3836 = vmatmul.mubr.bf16.gmra.mxu0 %v3741
        %v3837 = vpop.f32.mrf.mxu0
        %v3838 = vadd.f32 0.0, %v3837
        %v3839 = vpop.f32.mrf.mxu0
        %v3840 = vpop.f32.mrf.mxu0
        %v3841 = vadd.f32 0.0, %v3840
        %v3842 = vpop.f32.mrf.mxu0
        %3843 = vmatprep.mubr.bf16.mxu0 0
        %3844 = vmatmul.mubr.bf16.gmra.mxu0 %v3744
        %v3845 = vpop.f32.mrf.mxu0
        %v3846 = vadd.f32 0.0, %v3845
        %v3847 = vpop.f32.mrf.mxu0
        %v3848 = vpop.f32.mrf.mxu0
        %v3849 = vadd.f32 0.0, %v3848
        %v3850 = vpop.f32.mrf.mxu0
        %3851 = vmatprep.mubr.bf16.mxu0 0
        %3852 = vmatmul.mubr.bf16.gmra.mxu0 %v3747
        %v3853 = vpop.f32.mrf.mxu0
        %v3854 = vadd.f32 0.0, %v3853
        %v3855 = vpop.f32.mrf.mxu0
        %v3856 = vpop.f32.mrf.mxu0
        %v3857 = vadd.f32 0.0, %v3856
        %v3858 = vpop.f32.mrf.mxu0
        %3859 = vmatprep.mubr.bf16.mxu0 0
        %3860 = vmatmul.mubr.bf16.gmra.mxu0 %v3750
        %v3861 = vpop.f32.mrf.mxu0
        %v3862 = vadd.f32 0.0, %v3861
        %v3863 = vpop.f32.mrf.mxu0
        %v3864 = vpop.f32.mrf.mxu0
        %v3865 = vadd.f32 0.0, %v3864
        %v3866 = vpop.f32.mrf.mxu0
        %3867 = vmatprep.mubr.bf16.mxu0 0
        %3868 = vmatmul.mubr.bf16.gmra.mxu0 %v3753
        %v3869 = vpop.f32.mrf.mxu0
        %v3870 = vadd.f32 0.0, %v3869
        %v3871 = vpop.f32.mrf.mxu0
        %v3872 = vpop.f32.mrf.mxu0
        %v3873 = vadd.f32 0.0, %v3872
        %v3874 = vpop.f32.mrf.mxu0
        %3875 = vdwg.mxu0
        %v3876 = vadd.f32 %v3653, %v3814
        %v3877 = vadd.f32 %v3656, %v3817
        %v3878 = vadd.f32 %v3659, %v3822
        %v3879 = vadd.f32 %v3662, %v3825
        %v3880 = vadd.f32 %v3665, %v3830
        %v3881 = vadd.f32 %v3668, %v3833
        %v3882 = vadd.f32 %v3671, %v3838
        %v3883 = vadd.f32 %v3674, %v3841
        %v3884 = vadd.f32 %v3677, %v3846
        %v3885 = vadd.f32 %v3680, %v3849
        %v3886 = vadd.f32 %v3683, %v3854
        %v3887 = vadd.f32 %v3686, %v3857
        %v3888 = vadd.f32 %v3689, %v3862
        %v3889 = vadd.f32 %v3692, %v3865
        %v3890 = vadd.f32 %v3695, %v3870
        %v3891 = vadd.f32 %v3698, %v3873
        %v3892 = vadd.f32 %v3876, %v1860
        %v3893 = vadd.f32 %v3877, %v1861
        %v3894 = vadd.f32 %v3878, %v1862
        %v3895 = vadd.f32 %v3879, %v1863
        %v3896 = vadd.f32 %v3880, %v1864
        %v3897 = vadd.f32 %v3881, %v1865
        %v3898 = vadd.f32 %v3882, %v1866
        %v3899 = vadd.f32 %v3883, %v1867
        %v3900 = vadd.f32 %v3884, %v1868
        %v3901 = vadd.f32 %v3885, %v1869
        %v3902 = vadd.f32 %v3886, %v1870
        %v3903 = vadd.f32 %v3887, %v1871
        %v3904 = vadd.f32 %v3888, %v1872
        %v3905 = vadd.f32 %v3889, %v1873
        %v3906 = vadd.f32 %v3890, %v1874
        %v3907 = vadd.f32 %v3891, %v1875
        %v3908 = vmul.f32 %v3892, 0.17677669
        %v3909 = vmul.f32 %v3893, 0.17677669
        %v3910 = vmul.f32 %v3894, 0.17677669
        %v3911 = vmul.f32 %v3895, 0.17677669
        %v3912 = vmul.f32 %v3896, 0.17677669
        %v3913 = vmul.f32 %v3897, 0.17677669
        %v3914 = vmul.f32 %v3898, 0.17677669
        %v3915 = vmul.f32 %v3899, 0.17677669
        %v3916 = vmul.f32 %v3900, 0.17677669
        %v3917 = vmul.f32 %v3901, 0.17677669
        %v3918 = vmul.f32 %v3902, 0.17677669
        %v3919 = vmul.f32 %v3903, 0.17677669
        %v3920 = vmul.f32 %v3904, 0.17677669
        %v3921 = vmul.f32 %v3905, 0.17677669
        %v3922 = vmul.f32 %v3906, 0.17677669
        %v3923 = vmul.f32 %v3907, 0.17677669
        %3924 = vmax.xlane.f32.xlu0 %v3908
        %v3925 = vpop.xlane.xlu0 %3924
        %3926 = vmax.xlane.f32.xlu0 %v3909
        %v3927 = vpop.xlane.xlu0 %3926
        %3928 = vmax.xlane.f32.xlu0 %v3910
        %v3929 = vpop.xlane.xlu0 %3928
        %3930 = vmax.xlane.f32.xlu0 %v3911
        %v3931 = vpop.xlane.xlu0 %3930
        %3932 = vmax.xlane.f32.xlu0 %v3912
        %v3933 = vpop.xlane.xlu0 %3932
        %3934 = vmax.xlane.f32.xlu0 %v3913
        %v3935 = vpop.xlane.xlu0 %3934
        %3936 = vmax.xlane.f32.xlu0 %v3914
        %v3937 = vpop.xlane.xlu0 %3936
        %3938 = vmax.xlane.f32.xlu0 %v3915
        %v3939 = vpop.xlane.xlu0 %3938
        %3940 = vmax.xlane.f32.xlu0 %v3916
        %v3941 = vpop.xlane.xlu0 %3940
        %3942 = vmax.xlane.f32.xlu0 %v3917
        %v3943 = vpop.xlane.xlu0 %3942
        %3944 = vmax.xlane.f32.xlu0 %v3918
        %v3945 = vpop.xlane.xlu0 %3944
        %3946 = vmax.xlane.f32.xlu0 %v3919
        %v3947 = vpop.xlane.xlu0 %3946
        %3948 = vmax.xlane.f32.xlu0 %v3920
        %v3949 = vpop.xlane.xlu0 %3948
        %3950 = vmax.xlane.f32.xlu0 %v3921
        %v3951 = vpop.xlane.xlu0 %3950
        %3952 = vmax.xlane.f32.xlu0 %v3922
        %v3953 = vpop.xlane.xlu0 %3952
        %3954 = vmax.xlane.f32.xlu0 %v3923
        %v3955 = vpop.xlane.xlu0 %3954
        %v3956 = vsub.f32 %v3908, %v3925
        %v3957 = vsub.f32 %v3909, %v3927
        %v3958 = vsub.f32 %v3910, %v3929
        %v3959 = vsub.f32 %v3911, %v3931
        %v3960 = vsub.f32 %v3912, %v3933
        %v3961 = vsub.f32 %v3913, %v3935
        %v3962 = vsub.f32 %v3914, %v3937
        %v3963 = vsub.f32 %v3915, %v3939
        %v3964 = vsub.f32 %v3916, %v3941
        %v3965 = vsub.f32 %v3917, %v3943
        %v3966 = vsub.f32 %v3918, %v3945
        %v3967 = vsub.f32 %v3919, %v3947
        %v3968 = vsub.f32 %v3920, %v3949
        %v3969 = vsub.f32 %v3921, %v3951
        %v3970 = vsub.f32 %v3922, %v3953
        %v3971 = vsub.f32 %v3923, %v3955
        %v3972 = vmul.f32 %v3956, 1.442695
        %v3973 = vpow.pop %v3972
        %v3974 = vmul.f32 %v3957, 1.442695
        %v3975 = vpow.pop %v3974
        %v3976 = vmul.f32 %v3958, 1.442695
        %v3977 = vpow.pop %v3976
        %v3978 = vmul.f32 %v3959, 1.442695
        %v3979 = vpow.pop %v3978
        %v3980 = vmul.f32 %v3960, 1.442695
        %v3981 = vpow.pop %v3980
        %v3982 = vmul.f32 %v3961, 1.442695
        %v3983 = vpow.pop %v3982
        %v3984 = vmul.f32 %v3962, 1.442695
        %v3985 = vpow.pop %v3984
        %v3986 = vmul.f32 %v3963, 1.442695
        %v3987 = vpow.pop %v3986
        %v3988 = vmul.f32 %v3964, 1.442695
        %v3989 = vpow.pop %v3988
        %v3990 = vmul.f32 %v3965, 1.442695
        %v3991 = vpow.pop %v3990
        %v3992 = vmul.f32 %v3966, 1.442695
        %v3993 = vpow.pop %v3992
        %v3994 = vmul.f32 %v3967, 1.442695
        %v3995 = vpow.pop %v3994
        %v3996 = vmul.f32 %v3968, 1.442695
        %v3997 = vpow.pop %v3996
        %v3998 = vmul.f32 %v3969, 1.442695
        %v3999 = vpow.pop %v3998
        %v4000 = vmul.f32 %v3970, 1.442695
        %v4001 = vpow.pop %v4000
        %v4002 = vmul.f32 %v3971, 1.442695
        %v4003 = vpow.pop %v4002
        %4004 = vadd.xlane.f32.xlu0 %v3973
        %v4005 = vpop.xlane.xlu0 %4004
        %4006 = vadd.xlane.f32.xlu0 %v3975
        %v4007 = vpop.xlane.xlu0 %4006
        %4008 = vadd.xlane.f32.xlu0 %v3977
        %v4009 = vpop.xlane.xlu0 %4008
        %4010 = vadd.xlane.f32.xlu0 %v3979
        %v4011 = vpop.xlane.xlu0 %4010
        %4012 = vadd.xlane.f32.xlu0 %v3981
        %v4013 = vpop.xlane.xlu0 %4012
        %4014 = vadd.xlane.f32.xlu0 %v3983
        %v4015 = vpop.xlane.xlu0 %4014
        %4016 = vadd.xlane.f32.xlu0 %v3985
        %v4017 = vpop.xlane.xlu0 %4016
        %4018 = vadd.xlane.f32.xlu0 %v3987
        %v4019 = vpop.xlane.xlu0 %4018
        %4020 = vadd.xlane.f32.xlu0 %v3989
        %v4021 = vpop.xlane.xlu0 %4020
        %4022 = vadd.xlane.f32.xlu0 %v3991
        %v4023 = vpop.xlane.xlu0 %4022
        %4024 = vadd.xlane.f32.xlu0 %v3993
        %v4025 = vpop.xlane.xlu0 %4024
        %4026 = vadd.xlane.f32.xlu0 %v3995
        %v4027 = vpop.xlane.xlu0 %4026
        %4028 = vadd.xlane.f32.xlu0 %v3997
        %v4029 = vpop.xlane.xlu0 %4028
        %4030 = vadd.xlane.f32.xlu0 %v3999
        %v4031 = vpop.xlane.xlu0 %4030
        %4032 = vadd.xlane.f32.xlu0 %v4001
        %v4033 = vpop.xlane.xlu0 %4032
        %4034 = vadd.xlane.f32.xlu0 %v4003
        %v4035 = vpop.xlane.xlu0 %4034
        %v4036 = vrcp.pop %v4005
        %v4037 = vmul.f32 1.0, %v4036
        %v4038 = vrcp.pop %v4007
        %v4039 = vmul.f32 1.0, %v4038
        %v4040 = vrcp.pop %v4009
        %v4041 = vmul.f32 1.0, %v4040
        %v4042 = vrcp.pop %v4011
        %v4043 = vmul.f32 1.0, %v4042
        %v4044 = vrcp.pop %v4013
        %v4045 = vmul.f32 1.0, %v4044
        %v4046 = vrcp.pop %v4015
        %v4047 = vmul.f32 1.0, %v4046
        %v4048 = vrcp.pop %v4017
        %v4049 = vmul.f32 1.0, %v4048
        %v4050 = vrcp.pop %v4019
        %v4051 = vmul.f32 1.0, %v4050
        %v4052 = vrcp.pop %v4021
        %v4053 = vmul.f32 1.0, %v4052
        %v4054 = vrcp.pop %v4023
        %v4055 = vmul.f32 1.0, %v4054
        %v4056 = vrcp.pop %v4025
        %v4057 = vmul.f32 1.0, %v4056
        %v4058 = vrcp.pop %v4027
        %v4059 = vmul.f32 1.0, %v4058
        %v4060 = vrcp.pop %v4029
        %v4061 = vmul.f32 1.0, %v4060
        %v4062 = vrcp.pop %v4031
        %v4063 = vmul.f32 1.0, %v4062
        %v4064 = vrcp.pop %v4033
        %v4065 = vmul.f32 1.0, %v4064
        %v4066 = vrcp.pop %v4035
        %v4067 = vmul.f32 1.0, %v4066
        %v4068 = vpack.c.bf16 %v3975, %v3973
        %v4069 = vpack.c.bf16 %v3979, %v3977
        %v4070 = vpack.c.bf16 %v3983, %v3981
        %v4071 = vpack.c.bf16 %v3987, %v3985
        %v4072 = vpack.c.bf16 %v3991, %v3989
        %v4073 = vpack.c.bf16 %v3995, %v3993
        %v4074 = vpack.c.bf16 %v3999, %v3997
        %v4075 = vpack.c.bf16 %v4003, %v4001
        %4084 = vmatprep.subr.bf16.mxu0 0
        %4085 = vmatpush1.bf16.msra.mxu0 %v3730
        %4086 = vmatprep.subr.bf16.mxu0 0
        %4087 = vmatpush1.bf16.msra.mxu0 %v3728
        %4088 = vmatprep.subr.bf16.mxu0 0
        %4089 = vmatpush1.bf16.msra.mxu0 %v3726
        %4090 = vmatprep.subr.bf16.mxu0 0
        %4091 = vmatpush1.bf16.msra.mxu0 %v3724
        %4092 = vmatprep.subr.bf16.mxu0 0
        %4093 = vmatpush1.bf16.msra.mxu0 %v3722
        %4094 = vmatprep.subr.bf16.mxu0 0
        %4095 = vmatpush1.bf16.msra.mxu0 %v3720
        %4096 = vmatprep.subr.bf16.mxu0 0
        %4097 = vmatpush1.bf16.msra.mxu0 %v3718
        %4098 = vmatprep.subr.bf16.mxu0 0
        %4099 = vmatpush1.bf16.msra.mxu0 %v3716
        %4100 = vmatprep.subr.bf16.mxu0 0
        %4101 = vmatpush2.bf16.msra.mxu0 0
        %4102 = vmatprep.subr.bf16.mxu0 0
        %4103 = vmatpush2.bf16.msra.mxu0 0
        %4104 = vmatprep.subr.bf16.mxu0 0
        %4105 = vmatpush2.bf16.msra.mxu0 0
        %4106 = vmatprep.subr.bf16.mxu0 0
        %4107 = vmatpush2.bf16.msra.mxu0 0
        %4108 = vmatprep.subr.bf16.mxu0 0
        %4109 = vmatpush2.bf16.msra.mxu0 0
        %4110 = vmatprep.subr.bf16.mxu0 0
        %4111 = vmatpush2.bf16.msra.mxu0 0
        %4112 = vmatprep.subr.bf16.mxu0 0
        %4113 = vmatpush2.bf16.msra.mxu0 0
        %4114 = vmatprep.subr.bf16.mxu0 0
        %4115 = vmatpush2.bf16.msra.mxu0 0
        %4116 = vmatprep.mubr.bf16.mxu0 0
        %4117 = vmatmul.mubr.bf16.gmra.mxu0 %v4068
        %v4118 = vpop.f32.mrf.mxu0
        %v4119 = vadd.f32 0.0, %v4118
        %v4120 = vpop.f32.mrf.mxu0
        %v4121 = vpop.f32.mrf.mxu0
        %v4122 = vadd.f32 0.0, %v4121
        %v4123 = vpop.f32.mrf.mxu0
        %4124 = vmatprep.mubr.bf16.mxu0 0
        %4125 = vmatmul.mubr.bf16.gmra.mxu0 %v4069
        %v4126 = vpop.f32.mrf.mxu0
        %v4127 = vadd.f32 0.0, %v4126
        %v4128 = vpop.f32.mrf.mxu0
        %v4129 = vpop.f32.mrf.mxu0
        %v4130 = vadd.f32 0.0, %v4129
        %v4131 = vpop.f32.mrf.mxu0
        %4132 = vmatprep.mubr.bf16.mxu0 0
        %4133 = vmatmul.mubr.bf16.gmra.mxu0 %v4070
        %v4134 = vpop.f32.mrf.mxu0
        %v4135 = vadd.f32 0.0, %v4134
        %v4136 = vpop.f32.mrf.mxu0
        %v4137 = vpop.f32.mrf.mxu0
        %v4138 = vadd.f32 0.0, %v4137
        %v4139 = vpop.f32.mrf.mxu0
        %4140 = vmatprep.mubr.bf16.mxu0 0
        %4141 = vmatmul.mubr.bf16.gmra.mxu0 %v4071
        %v4142 = vpop.f32.mrf.mxu0
        %v4143 = vadd.f32 0.0, %v4142
        %v4144 = vpop.f32.mrf.mxu0
        %v4145 = vpop.f32.mrf.mxu0
        %v4146 = vadd.f32 0.0, %v4145
        %v4147 = vpop.f32.mrf.mxu0
        %4148 = vmatprep.mubr.bf16.mxu0 0
        %4149 = vmatmul.mubr.bf16.gmra.mxu0 %v4072
        %v4150 = vpop.f32.mrf.mxu0
        %v4151 = vadd.f32 0.0, %v4150
        %v4152 = vpop.f32.mrf.mxu0
        %v4153 = vpop.f32.mrf.mxu0
        %v4154 = vadd.f32 0.0, %v4153
        %v4155 = vpop.f32.mrf.mxu0
        %4156 = vmatprep.mubr.bf16.mxu0 0
        %4157 = vmatmul.mubr.bf16.gmra.mxu0 %v4073
        %v4158 = vpop.f32.mrf.mxu0
        %v4159 = vadd.f32 0.0, %v4158
        %v4160 = vpop.f32.mrf.mxu0
        %v4161 = vpop.f32.mrf.mxu0
        %v4162 = vadd.f32 0.0, %v4161
        %v4163 = vpop.f32.mrf.mxu0
        %4164 = vmatprep.mubr.bf16.mxu0 0
        %4165 = vmatmul.mubr.bf16.gmra.mxu0 %v4074
        %v4166 = vpop.f32.mrf.mxu0
        %v4167 = vadd.f32 0.0, %v4166
        %v4168 = vpop.f32.mrf.mxu0
        %v4169 = vpop.f32.mrf.mxu0
        %v4170 = vadd.f32 0.0, %v4169
        %v4171 = vpop.f32.mrf.mxu0
        %4172 = vmatprep.mubr.bf16.mxu0 0
        %4173 = vmatmul.mubr.bf16.gmra.mxu0 %v4075
        %v4174 = vpop.f32.mrf.mxu0
        %v4175 = vadd.f32 0.0, %v4174
        %v4176 = vpop.f32.mrf.mxu0
        %v4177 = vpop.f32.mrf.mxu0
        %v4178 = vadd.f32 0.0, %v4177
        %v4179 = vpop.f32.mrf.mxu0
        %4180 = vdwg.mxu0
        %v4181 = vmul.f32 %v4119, %v4037
        %v4182 = vmul.f32 %v4122, %v4039
        %v4183 = vmul.f32 %v4127, %v4041
        %v4184 = vmul.f32 %v4130, %v4043
        %v4185 = vmul.f32 %v4135, %v4045
        %v4186 = vmul.f32 %v4138, %v4047
        %v4187 = vmul.f32 %v4143, %v4049
        %v4188 = vmul.f32 %v4146, %v4051
        %v4189 = vmul.f32 %v4151, %v4053
        %v4190 = vmul.f32 %v4154, %v4055
        %v4191 = vmul.f32 %v4159, %v4057
        %v4192 = vmul.f32 %v4162, %v4059
        %v4193 = vmul.f32 %v4167, %v4061
        %v4194 = vmul.f32 %v4170, %v4063
        %v4195 = vmul.f32 %v4175, %v4065
        %v4196 = vmul.f32 %v4178, %v4067
        %4213 = vrot.lane.b32.xlu0 %v2993, 32
        %v4214 = vpop.permute.xlu0 %4213
        %4215 = vrot.lane.b32.xlu0 %v2994, 32
        %v4216 = vpop.permute.xlu0 %4215
        %4217 = vrot.lane.b32.xlu0 %v2995, 32
        %v4218 = vpop.permute.xlu0 %4217
        %4219 = vrot.lane.b32.xlu0 %v2996, 32
        %v4220 = vpop.permute.xlu0 %4219
        %4221 = vrot.lane.b32.xlu0 %v2997, 32
        %v4222 = vpop.permute.xlu0 %4221
        %4223 = vrot.lane.b32.xlu0 %v2998, 32
        %v4224 = vpop.permute.xlu0 %4223
        %4225 = vrot.lane.b32.xlu0 %v2999, 32
        %v4226 = vpop.permute.xlu0 %4225
        %4227 = vrot.lane.b32.xlu0 %v3000, 32
        %v4228 = vpop.permute.xlu0 %4227
        %4229 = vrot.lane.b32.xlu0 %v3001, 32
        %v4230 = vpop.permute.xlu0 %4229
        %4231 = vrot.lane.b32.xlu0 %v3002, 32
        %v4232 = vpop.permute.xlu0 %4231
        %4233 = vrot.lane.b32.xlu0 %v3003, 32
        %v4234 = vpop.permute.xlu0 %4233
        %4235 = vrot.lane.b32.xlu0 %v3004, 32
        %v4236 = vpop.permute.xlu0 %4235
        %4237 = vrot.lane.b32.xlu0 %v3005, 32
        %v4238 = vpop.permute.xlu0 %4237
        %4239 = vrot.lane.b32.xlu0 %v3006, 32
        %v4240 = vpop.permute.xlu0 %4239
        %4241 = vrot.lane.b32.xlu0 %v3007, 32
        %v4242 = vpop.permute.xlu0 %4241
        %4243 = vrot.lane.b32.xlu0 %v3008, 32
        %v4244 = vpop.permute.xlu0 %4243
        %4277 = vrot.lane.b32.xlu0 %v3587, 64
        %v4278 = vpop.permute.xlu0 %4277
        %4279 = vrot.lane.b32.xlu0 %v3588, 64
        %v4280 = vpop.permute.xlu0 %4279
        %4281 = vrot.lane.b32.xlu0 %v3589, 64
        %v4282 = vpop.permute.xlu0 %4281
        %4283 = vrot.lane.b32.xlu0 %v3590, 64
        %v4284 = vpop.permute.xlu0 %4283
        %4285 = vrot.lane.b32.xlu0 %v3591, 64
        %v4286 = vpop.permute.xlu0 %4285
        %4287 = vrot.lane.b32.xlu0 %v3592, 64
        %v4288 = vpop.permute.xlu0 %4287
        %4289 = vrot.lane.b32.xlu0 %v3593, 64
        %v4290 = vpop.permute.xlu0 %4289
        %4291 = vrot.lane.b32.xlu0 %v3594, 64
        %v4292 = vpop.permute.xlu0 %4291
        %4293 = vrot.lane.b32.xlu0 %v3595, 64
        %v4294 = vpop.permute.xlu0 %4293
        %4295 = vrot.lane.b32.xlu0 %v3596, 64
        %v4296 = vpop.permute.xlu0 %4295
        %4297 = vrot.lane.b32.xlu0 %v3597, 64
        %v4298 = vpop.permute.xlu0 %4297
        %4299 = vrot.lane.b32.xlu0 %v3598, 64
        %v4300 = vpop.permute.xlu0 %4299
        %4301 = vrot.lane.b32.xlu0 %v3599, 64
        %v4302 = vpop.permute.xlu0 %4301
        %4303 = vrot.lane.b32.xlu0 %v3600, 64
        %v4304 = vpop.permute.xlu0 %4303
        %4305 = vrot.lane.b32.xlu0 %v3601, 64
        %v4306 = vpop.permute.xlu0 %4305
        %4307 = vrot.lane.b32.xlu0 %v3602, 64
        %v4308 = vpop.permute.xlu0 %4307
        %4341 = vrot.lane.b32.xlu0 %v4181, 96
        %v4342 = vpop.permute.xlu0 %4341
        %4343 = vrot.lane.b32.xlu0 %v4182, 96
        %v4344 = vpop.permute.xlu0 %4343
        %4345 = vrot.lane.b32.xlu0 %v4183, 96
        %v4346 = vpop.permute.xlu0 %4345
        %4347 = vrot.lane.b32.xlu0 %v4184, 96
        %v4348 = vpop.permute.xlu0 %4347
        %4349 = vrot.lane.b32.xlu0 %v4185, 96
        %v4350 = vpop.permute.xlu0 %4349
        %4351 = vrot.lane.b32.xlu0 %v4186, 96
        %v4352 = vpop.permute.xlu0 %4351
        %4353 = vrot.lane.b32.xlu0 %v4187, 96
        %v4354 = vpop.permute.xlu0 %4353
        %4355 = vrot.lane.b32.xlu0 %v4188, 96
        %v4356 = vpop.permute.xlu0 %4355
        %4357 = vrot.lane.b32.xlu0 %v4189, 96
        %v4358 = vpop.permute.xlu0 %4357
        %4359 = vrot.lane.b32.xlu0 %v4190, 96
        %v4360 = vpop.permute.xlu0 %4359
        %4361 = vrot.lane.b32.xlu0 %v4191, 96
        %v4362 = vpop.permute.xlu0 %4361
        %4363 = vrot.lane.b32.xlu0 %v4192, 96
        %v4364 = vpop.permute.xlu0 %4363
        %4365 = vrot.lane.b32.xlu0 %v4193, 96
        %v4366 = vpop.permute.xlu0 %4365
        %4367 = vrot.lane.b32.xlu0 %v4194, 96
        %v4368 = vpop.permute.xlu0 %4367
        %4369 = vrot.lane.b32.xlu0 %v4195, 96
        %v4370 = vpop.permute.xlu0 %4369
        %4371 = vrot.lane.b32.xlu0 %v4196, 96
        %v4372 = vpop.permute.xlu0 %4371
        %v4389 = vsel %vm1876, %v2367, %v4214
        %v4390 = vsel %vm1876, %v2368, %v4216
        %v4391 = vsel %vm1876, %v2369, %v4218
        %v4392 = vsel %vm1876, %v2370, %v4220
        %v4393 = vsel %vm1876, %v2371, %v4222
        %v4394 = vsel %vm1876, %v2372, %v4224
        %v4395 = vsel %vm1876, %v2373, %v4226
        %v4396 = vsel %vm1876, %v2374, %v4228
        %v4397 = vsel %vm1876, %v2375, %v4230
        %v4398 = vsel %vm1876, %v2376, %v4232
        %v4399 = vsel %vm1876, %v2377, %v4234
        %v4400 = vsel %vm1876, %v2378, %v4236
        %v4401 = vsel %vm1876, %v2379, %v4238
        %v4402 = vsel %vm1876, %v2380, %v4240
        %v4403 = vsel %vm1876, %v2381, %v4242
        %v4404 = vsel %vm1876, %v2382, %v4244
        %vm4405 = vcmask 523264
        %v4406 = vsel %vm4405, %v4389, %v4278
        %v4407 = vsel %vm4405, %v4390, %v4280
        %v4408 = vsel %vm4405, %v4391, %v4282
        %v4409 = vsel %vm4405, %v4392, %v4284
        %v4410 = vsel %vm4405, %v4393, %v4286
        %v4411 = vsel %vm4405, %v4394, %v4288
        %v4412 = vsel %vm4405, %v4395, %v4290
        %v4413 = vsel %vm4405, %v4396, %v4292
        %v4414 = vsel %vm4405, %v4397, %v4294
        %v4415 = vsel %vm4405, %v4398, %v4296
        %v4416 = vsel %vm4405, %v4399, %v4298
        %v4417 = vsel %vm4405, %v4400, %v4300
        %v4418 = vsel %vm4405, %v4401, %v4302
        %v4419 = vsel %vm4405, %v4402, %v4304
        %v4420 = vsel %vm4405, %v4403, %v4306
        %v4421 = vsel %vm4405, %v4404, %v4308
        %vm4422 = vcmask 785408
        %v4423 = vsel %vm4422, %v4406, %v4342
        %v4424 = vsel %vm4422, %v4407, %v4344
        %v4425 = vsel %vm4422, %v4408, %v4346
        %v4426 = vsel %vm4422, %v4409, %v4348
        %v4427 = vsel %vm4422, %v4410, %v4350
        %v4428 = vsel %vm4422, %v4411, %v4352
        %v4429 = vsel %vm4422, %v4412, %v4354
        %v4430 = vsel %vm4422, %v4413, %v4356
        %v4431 = vsel %vm4422, %v4414, %v4358
        %v4432 = vsel %vm4422, %v4415, %v4360
        %v4433 = vsel %vm4422, %v4416, %v4362
        %v4434 = vsel %vm4422, %v4417, %v4364
        %v4435 = vsel %vm4422, %v4418, %v4366
        %v4436 = vsel %vm4422, %v4419, %v4368
        %v4437 = vsel %vm4422, %v4420, %v4370
        %v4438 = vsel %vm4422, %v4421, %v4372
        %v4439 = vadd.f32 %v519, %v4423
        %v4440 = vadd.f32 %v520, %v4424
        %v4441 = vadd.f32 %v521, %v4425
        %v4442 = vadd.f32 %v522, %v4426
        %v4443 = vadd.f32 %v523, %v4427
        %v4444 = vadd.f32 %v524, %v4428
        %v4445 = vadd.f32 %v525, %v4429
        %v4446 = vadd.f32 %v526, %v4430
        %v4447 = vadd.f32 %v527, %v4431
        %v4448 = vadd.f32 %v528, %v4432
        %v4449 = vadd.f32 %v529, %v4433
        %v4450 = vadd.f32 %v530, %v4434
        %v4451 = vadd.f32 %v531, %v4435
        %v4452 = vadd.f32 %v532, %v4436
        %v4453 = vadd.f32 %v533, %v4437
        %v4454 = vadd.f32 %v534, %v4438
        %vm4455 = vcmp.ge.f32.partialorder %v4439, 0.0
        %vm4456 = vcmp.ge.f32.partialorder %v4440, 0.0
        %vm4457 = vcmp.ge.f32.partialorder %v4441, 0.0
        %vm4458 = vcmp.ge.f32.partialorder %v4442, 0.0
        %vm4459 = vcmp.ge.f32.partialorder %v4443, 0.0
        %vm4460 = vcmp.ge.f32.partialorder %v4444, 0.0
        %vm4461 = vcmp.ge.f32.partialorder %v4445, 0.0
        %vm4462 = vcmp.ge.f32.partialorder %v4446, 0.0
        %vm4463 = vcmp.ge.f32.partialorder %v4447, 0.0
        %vm4464 = vcmp.ge.f32.partialorder %v4448, 0.0
        %vm4465 = vcmp.ge.f32.partialorder %v4449, 0.0
        %vm4466 = vcmp.ge.f32.partialorder %v4450, 0.0
        %vm4467 = vcmp.ge.f32.partialorder %v4451, 0.0
        %vm4468 = vcmp.ge.f32.partialorder %v4452, 0.0
        %vm4469 = vcmp.ge.f32.partialorder %v4453, 0.0
        %vm4470 = vcmp.ge.f32.partialorder %v4454, 0.0
        %v4471 = vmul.f32 %v4439, 0.2
        %v4472 = vmul.f32 %v4440, 0.2
        %v4473 = vmul.f32 %v4441, 0.2
        %v4474 = vmul.f32 %v4442, 0.2
        %v4475 = vmul.f32 %v4443, 0.2
        %v4476 = vmul.f32 %v4444, 0.2
        %v4477 = vmul.f32 %v4445, 0.2
        %v4478 = vmul.f32 %v4446, 0.2
        %v4479 = vmul.f32 %v4447, 0.2
        %v4480 = vmul.f32 %v4448, 0.2
        %v4481 = vmul.f32 %v4449, 0.2
        %v4482 = vmul.f32 %v4450, 0.2
        %v4483 = vmul.f32 %v4451, 0.2
        %v4484 = vmul.f32 %v4452, 0.2
        %v4485 = vmul.f32 %v4453, 0.2
        %v4486 = vmul.f32 %v4454, 0.2
        %v4487 = vsel %vm4455, %v4439, %v4471
        %v4488 = vsel %vm4456, %v4440, %v4472
        %v4489 = vsel %vm4457, %v4441, %v4473
        %v4490 = vsel %vm4458, %v4442, %v4474
        %v4491 = vsel %vm4459, %v4443, %v4475
        %v4492 = vsel %vm4460, %v4444, %v4476
        %v4493 = vsel %vm4461, %v4445, %v4477
        %v4494 = vsel %vm4462, %v4446, %v4478
        %v4495 = vsel %vm4463, %v4447, %v4479
        %v4496 = vsel %vm4464, %v4448, %v4480
        %v4497 = vsel %vm4465, %v4449, %v4481
        %v4498 = vsel %vm4466, %v4450, %v4482
        %v4499 = vsel %vm4467, %v4451, %v4483
        %v4500 = vsel %vm4468, %v4452, %v4484
        %v4501 = vsel %vm4469, %v4453, %v4485
        %v4502 = vsel %vm4470, %v4454, %v4486
        %4503 = vadd.xlane.f32.xlu0 %v4487
        %v4504 = vpop.xlane.xlu0 %4503
        %4505 = vadd.xlane.f32.xlu0 %v4488
        %v4506 = vpop.xlane.xlu0 %4505
        %4507 = vadd.xlane.f32.xlu0 %v4489
        %v4508 = vpop.xlane.xlu0 %4507
        %4509 = vadd.xlane.f32.xlu0 %v4490
        %v4510 = vpop.xlane.xlu0 %4509
        %4511 = vadd.xlane.f32.xlu0 %v4491
        %v4512 = vpop.xlane.xlu0 %4511
        %4513 = vadd.xlane.f32.xlu0 %v4492
        %v4514 = vpop.xlane.xlu0 %4513
        %4515 = vadd.xlane.f32.xlu0 %v4493
        %v4516 = vpop.xlane.xlu0 %4515
        %4517 = vadd.xlane.f32.xlu0 %v4494
        %v4518 = vpop.xlane.xlu0 %4517
        %4519 = vadd.xlane.f32.xlu0 %v4495
        %v4520 = vpop.xlane.xlu0 %4519
        %4521 = vadd.xlane.f32.xlu0 %v4496
        %v4522 = vpop.xlane.xlu0 %4521
        %4523 = vadd.xlane.f32.xlu0 %v4497
        %v4524 = vpop.xlane.xlu0 %4523
        %4525 = vadd.xlane.f32.xlu0 %v4498
        %v4526 = vpop.xlane.xlu0 %4525
        %4527 = vadd.xlane.f32.xlu0 %v4499
        %v4528 = vpop.xlane.xlu0 %4527
        %4529 = vadd.xlane.f32.xlu0 %v4500
        %v4530 = vpop.xlane.xlu0 %4529
        %4531 = vadd.xlane.f32.xlu0 %v4501
        %v4532 = vpop.xlane.xlu0 %4531
        %4533 = vadd.xlane.f32.xlu0 %v4502
        %v4534 = vpop.xlane.xlu0 %4533
        %v4535 = vmul.f32 %v4504, %v1339
        %v4536 = vmul.f32 %v4506, %v1339
        %v4537 = vmul.f32 %v4508, %v1339
        %v4538 = vmul.f32 %v4510, %v1339
        %v4539 = vmul.f32 %v4512, %v1339
        %v4540 = vmul.f32 %v4514, %v1339
        %v4541 = vmul.f32 %v4516, %v1339
        %v4542 = vmul.f32 %v4518, %v1339
        %v4543 = vmul.f32 %v4520, %v1339
        %v4544 = vmul.f32 %v4522, %v1339
        %v4545 = vmul.f32 %v4524, %v1339
        %v4546 = vmul.f32 %v4526, %v1339
        %v4547 = vmul.f32 %v4528, %v1339
        %v4548 = vmul.f32 %v4530, %v1339
        %v4549 = vmul.f32 %v4532, %v1339
        %v4550 = vmul.f32 %v4534, %v1339
        %v4551 = vsub.f32 %v4487, %v4535
        %v4552 = vsub.f32 %v4488, %v4536
        %v4553 = vsub.f32 %v4489, %v4537
        %v4554 = vsub.f32 %v4490, %v4538
        %v4555 = vsub.f32 %v4491, %v4539
        %v4556 = vsub.f32 %v4492, %v4540
        %v4557 = vsub.f32 %v4493, %v4541
        %v4558 = vsub.f32 %v4494, %v4542
        %v4559 = vsub.f32 %v4495, %v4543
        %v4560 = vsub.f32 %v4496, %v4544
        %v4561 = vsub.f32 %v4497, %v4545
        %v4562 = vsub.f32 %v4498, %v4546
        %v4563 = vsub.f32 %v4499, %v4547
        %v4564 = vsub.f32 %v4500, %v4548
        %v4565 = vsub.f32 %v4501, %v4549
        %v4566 = vsub.f32 %v4502, %v4550
        %v4567 = vmul.f32 %v4551, %v4551
        %v4568 = vmul.f32 %v4552, %v4552
        %v4569 = vmul.f32 %v4553, %v4553
        %v4570 = vmul.f32 %v4554, %v4554
        %v4571 = vmul.f32 %v4555, %v4555
        %v4572 = vmul.f32 %v4556, %v4556
        %v4573 = vmul.f32 %v4557, %v4557
        %v4574 = vmul.f32 %v4558, %v4558
        %v4575 = vmul.f32 %v4559, %v4559
        %v4576 = vmul.f32 %v4560, %v4560
        %v4577 = vmul.f32 %v4561, %v4561
        %v4578 = vmul.f32 %v4562, %v4562
        %v4579 = vmul.f32 %v4563, %v4563
        %v4580 = vmul.f32 %v4564, %v4564
        %v4581 = vmul.f32 %v4565, %v4565
        %v4582 = vmul.f32 %v4566, %v4566
        %4583 = vadd.xlane.f32.xlu0 %v4567
        %v4584 = vpop.xlane.xlu0 %4583
        %4585 = vadd.xlane.f32.xlu0 %v4568
        %v4586 = vpop.xlane.xlu0 %4585
        %4587 = vadd.xlane.f32.xlu0 %v4569
        %v4588 = vpop.xlane.xlu0 %4587
        %4589 = vadd.xlane.f32.xlu0 %v4570
        %v4590 = vpop.xlane.xlu0 %4589
        %4591 = vadd.xlane.f32.xlu0 %v4571
        %v4592 = vpop.xlane.xlu0 %4591
        %4593 = vadd.xlane.f32.xlu0 %v4572
        %v4594 = vpop.xlane.xlu0 %4593
        %4595 = vadd.xlane.f32.xlu0 %v4573
        %v4596 = vpop.xlane.xlu0 %4595
        %4597 = vadd.xlane.f32.xlu0 %v4574
        %v4598 = vpop.xlane.xlu0 %4597
        %4599 = vadd.xlane.f32.xlu0 %v4575
        %v4600 = vpop.xlane.xlu0 %4599
        %4601 = vadd.xlane.f32.xlu0 %v4576
        %v4602 = vpop.xlane.xlu0 %4601
        %4603 = vadd.xlane.f32.xlu0 %v4577
        %v4604 = vpop.xlane.xlu0 %4603
        %4605 = vadd.xlane.f32.xlu0 %v4578
        %v4606 = vpop.xlane.xlu0 %4605
        %4607 = vadd.xlane.f32.xlu0 %v4579
        %v4608 = vpop.xlane.xlu0 %4607
        %4609 = vadd.xlane.f32.xlu0 %v4580
        %v4610 = vpop.xlane.xlu0 %4609
        %4611 = vadd.xlane.f32.xlu0 %v4581
        %v4612 = vpop.xlane.xlu0 %4611
        %4613 = vadd.xlane.f32.xlu0 %v4582
        %v4614 = vpop.xlane.xlu0 %4613
        %v4615 = vmul.f32 %v4584, %v1339
        %v4616 = vmul.f32 %v4586, %v1339
        %v4617 = vmul.f32 %v4588, %v1339
        %v4618 = vmul.f32 %v4590, %v1339
        %v4619 = vmul.f32 %v4592, %v1339
        %v4620 = vmul.f32 %v4594, %v1339
        %v4621 = vmul.f32 %v4596, %v1339
        %v4622 = vmul.f32 %v4598, %v1339
        %v4623 = vmul.f32 %v4600, %v1339
        %v4624 = vmul.f32 %v4602, %v1339
        %v4625 = vmul.f32 %v4604, %v1339
        %v4626 = vmul.f32 %v4606, %v1339
        %v4627 = vmul.f32 %v4608, %v1339
        %v4628 = vmul.f32 %v4610, %v1339
        %v4629 = vmul.f32 %v4612, %v1339
        %v4630 = vmul.f32 %v4614, %v1339
        %v4631 = vadd.f32 %v4615, 1e-05
        %v4632 = vadd.f32 %v4616, 1e-05
        %v4633 = vadd.f32 %v4617, 1e-05
        %v4634 = vadd.f32 %v4618, 1e-05
        %v4635 = vadd.f32 %v4619, 1e-05
        %v4636 = vadd.f32 %v4620, 1e-05
        %v4637 = vadd.f32 %v4621, 1e-05
        %v4638 = vadd.f32 %v4622, 1e-05
        %v4639 = vadd.f32 %v4623, 1e-05
        %v4640 = vadd.f32 %v4624, 1e-05
        %v4641 = vadd.f32 %v4625, 1e-05
        %v4642 = vadd.f32 %v4626, 1e-05
        %v4643 = vadd.f32 %v4627, 1e-05
        %v4644 = vadd.f32 %v4628, 1e-05
        %v4645 = vadd.f32 %v4629, 1e-05
        %v4646 = vadd.f32 %v4630, 1e-05
        %v4647 = vrsqrt.pop %v4631
        %v4648 = vrsqrt.pop %v4632
        %v4649 = vrsqrt.pop %v4633
        %v4650 = vrsqrt.pop %v4634
        %v4651 = vrsqrt.pop %v4635
        %v4652 = vrsqrt.pop %v4636
        %v4653 = vrsqrt.pop %v4637
        %v4654 = vrsqrt.pop %v4638
        %v4655 = vrsqrt.pop %v4639
        %v4656 = vrsqrt.pop %v4640
        %v4657 = vrsqrt.pop %v4641
        %v4658 = vrsqrt.pop %v4642
        %v4659 = vrsqrt.pop %v4643
        %v4660 = vrsqrt.pop %v4644
        %v4661 = vrsqrt.pop %v4645
        %v4662 = vrsqrt.pop %v4646
        %v4663 = vmul.f32 %v4551, %v4647
        %v4664 = vmul.f32 %v4552, %v4648
        %v4665 = vmul.f32 %v4553, %v4649
        %v4666 = vmul.f32 %v4554, %v4650
        %v4667 = vmul.f32 %v4555, %v4651
        %v4668 = vmul.f32 %v4556, %v4652
        %v4669 = vmul.f32 %v4557, %v4653
        %v4670 = vmul.f32 %v4558, %v4654
        %v4671 = vmul.f32 %v4559, %v4655
        %v4672 = vmul.f32 %v4560, %v4656
        %v4673 = vmul.f32 %v4561, %v4657
        %v4674 = vmul.f32 %v4562, %v4658
        %v4675 = vmul.f32 %v4563, %v4659
        %v4676 = vmul.f32 %v4564, %v4660
        %v4677 = vmul.f32 %v4565, %v4661
        %v4678 = vmul.f32 %v4566, %v4662
        %v4679 = vlaneseq
        %v4680 = vshrl.u32 %v4679, 7
        %v4681 = vsub.s32 6, %v4680
        %v4682 = vrot.slane %v615, %v4681
        %v4683 = vmul.f32 %v4663, %v4682
        %v4684 = vmul.f32 %v4664, %v4682
        %v4685 = vmul.f32 %v4665, %v4682
        %v4686 = vmul.f32 %v4666, %v4682
        %v4687 = vmul.f32 %v4667, %v4682
        %v4688 = vmul.f32 %v4668, %v4682
        %v4689 = vmul.f32 %v4669, %v4682
        %v4690 = vmul.f32 %v4670, %v4682
        %v4691 = vmul.f32 %v4671, %v4682
        %v4692 = vmul.f32 %v4672, %v4682
        %v4693 = vmul.f32 %v4673, %v4682
        %v4694 = vmul.f32 %v4674, %v4682
        %v4695 = vmul.f32 %v4675, %v4682
        %v4696 = vmul.f32 %v4676, %v4682
        %v4697 = vmul.f32 %v4677, %v4682
        %v4698 = vmul.f32 %v4678, %v4682
        %v4699 = vlaneseq
        %v4700 = vshrl.u32 %v4699, 7
        %v4701 = vsub.s32 7, %v4700
        %v4702 = vrot.slane %v615, %v4701
        %v4703 = vadd.f32 %v4683, %v4702
        %v4704 = vadd.f32 %v4684, %v4702
        %v4705 = vadd.f32 %v4685, %v4702
        %v4706 = vadd.f32 %v4686, %v4702
        %v4707 = vadd.f32 %v4687, %v4702
        %v4708 = vadd.f32 %v4688, %v4702
        %v4709 = vadd.f32 %v4689, %v4702
        %v4710 = vadd.f32 %v4690, %v4702
        %v4711 = vadd.f32 %v4691, %v4702
        %v4712 = vadd.f32 %v4692, %v4702
        %v4713 = vadd.f32 %v4693, %v4702
        %v4714 = vadd.f32 %v4694, %v4702
        %v4715 = vadd.f32 %v4695, %v4702
        %v4716 = vadd.f32 %v4696, %v4702
        %v4717 = vadd.f32 %v4697, %v4702
        %v4718 = vadd.f32 %v4698, %v4702
        %v4719 = vadd.f32 %v4703, %v503
        %v4720 = vadd.f32 %v4704, %v504
        %v4721 = vadd.f32 %v4705, %v505
        %v4722 = vadd.f32 %v4706, %v506
        %v4723 = vadd.f32 %v4707, %v507
        %v4724 = vadd.f32 %v4708, %v508
        %v4725 = vadd.f32 %v4709, %v509
        %v4726 = vadd.f32 %v4710, %v510
        %v4727 = vadd.f32 %v4711, %v511
        %v4728 = vadd.f32 %v4712, %v512
        %v4729 = vadd.f32 %v4713, %v513
        %v4730 = vadd.f32 %v4714, %v514
        %v4731 = vadd.f32 %v4715, %v515
        %v4732 = vadd.f32 %v4716, %v516
        %v4733 = vadd.f32 %v4717, %v517
        %v4734 = vadd.f32 %v4718, %v518
        %4735 = vst [vmem:[#allocation2] sm:$0xff] %v4719
        %4736 = vst [vmem:[#allocation2 + $0x8] sm:$0xff] %v4720
        %4737 = vst [vmem:[#allocation2 + $0x10] sm:$0xff] %v4721
        %4738 = vst [vmem:[#allocation2 + $0x18] sm:$0xff] %v4722
        %4739 = vst [vmem:[#allocation2 + $0x20] sm:$0xff] %v4723
        %4740 = vst [vmem:[#allocation2 + $0x28] sm:$0xff] %v4724
        %4741 = vst [vmem:[#allocation2 + $0x30] sm:$0xff] %v4725
        %4742 = vst [vmem:[#allocation2 + $0x38] sm:$0xff] %v4726
        %4743 = vst [vmem:[#allocation2 + $0x40] sm:$0xff] %v4727
        %4744 = vst [vmem:[#allocation2 + $0x48] sm:$0xff] %v4728
        %4745 = vst [vmem:[#allocation2 + $0x50] sm:$0xff] %v4729
        %4746 = vst [vmem:[#allocation2 + $0x58] sm:$0xff] %v4730
        %4747 = vst [vmem:[#allocation2 + $0x60] sm:$0xff] %v4731
        %4748 = vst [vmem:[#allocation2 + $0x68] sm:$0xff] %v4732
        %4749 = vst [vmem:[#allocation2 + $0x70] sm:$0xff] %v4733
        %4750 = vst [vmem:[#allocation2 + $0x78] sm:$0xff] %v4734
        %4751 = vst [vmem:[#allocation3] sm:$0xff] %v1524
        %4752 = vst [vmem:[#allocation3 + $0x8] sm:$0xff] %v1525
        %4753 = vst [vmem:[#allocation3 + $0x10] sm:$0xff] %v1526
        %4754 = vst [vmem:[#allocation3 + $0x18] sm:$0xff] %v1527
        %4755 = vst [vmem:[#allocation3 + $0x20] sm:$0xff] %v1528
        %4756 = vst [vmem:[#allocation3 + $0x28] sm:$0xff] %v1529
        %4757 = vst [vmem:[#allocation3 + $0x30] sm:$0xff] %v1530
        %4758 = vst [vmem:[#allocation3 + $0x38] sm:$0xff] %v1531
        %4759 = vst [vmem:[#allocation3 + $0x40] sm:$0xff] %v1532
        %4760 = vst [vmem:[#allocation3 + $0x48] sm:$0xff] %v1533
        %4761 = vst [vmem:[#allocation3 + $0x50] sm:$0xff] %v1534
        %4762 = vst [vmem:[#allocation3 + $0x58] sm:$0xff] %v1535
        %4763 = vst [vmem:[#allocation3 + $0x60] sm:$0xff] %v1536
        %4764 = vst [vmem:[#allocation3 + $0x68] sm:$0xff] %v1537
        %4765 = vst [vmem:[#allocation3 + $0x70] sm:$0xff] %v1538
        %4766 = vst [vmem:[#allocation3 + $0x78] sm:$0xff] %v1539
        %4767 = vst [vmem:[#allocation3 + $0x80] sm:$0xff] %v1804
        %4768 = vst [vmem:[#allocation3 + $0x88] sm:$0xff] %v1805
        %4769 = vst [vmem:[#allocation3 + $0x90] sm:$0xff] %v1806
        %4770 = vst [vmem:[#allocation3 + $0x98] sm:$0xff] %v1807
        %4771 = vst [vmem:[#allocation3 + $0xa0] sm:$0xff] %v1808
        %4772 = vst [vmem:[#allocation3 + $0xa8] sm:$0xff] %v1809
        %4773 = vst [vmem:[#allocation3 + $0xb0] sm:$0xff] %v1810
        %4774 = vst [vmem:[#allocation3 + $0xb8] sm:$0xff] %v1811
        %4775 = vst [vmem:[#allocation3 + $0xc0] sm:$0xff] %v1812
        %4776 = vst [vmem:[#allocation3 + $0xc8] sm:$0xff] %v1813
        %4777 = vst [vmem:[#allocation3 + $0xd0] sm:$0xff] %v1814
        %4778 = vst [vmem:[#allocation3 + $0xd8] sm:$0xff] %v1815
        %4779 = vst [vmem:[#allocation3 + $0xe0] sm:$0xff] %v1816
        %4780 = vst [vmem:[#allocation3 + $0xe8] sm:$0xff] %v1817
        %4781 = vst [vmem:[#allocation3 + $0xf0] sm:$0xff] %v1818
        %4782 = vst [vmem:[#allocation3 + $0xf8] sm:$0xff] %v1819
        %p4783 = scmp.eq.s32.totalorder %s29, 1
        // Predicated region
        $region73: #{tpu_custom_call.1} parent=43 // pred_check
          %p4784 = pneg %p4783
        $region74: #{tpu_custom_call.1} parent=43 // pred_check_branch
          %4786 = sbr.rel (%p4784) target = $region76
        $region75: #{tpu_custom_call.1} parent=43 // pred_region
          %4787 = vst [vmem:[#allocation15] sm:$0xff] %v4719
          %4788 = vst [vmem:[#allocation15 + $0x8] sm:$0xff] %v4720
          %4789 = vst [vmem:[#allocation15 + $0x10] sm:$0xff] %v4721
          %4790 = vst [vmem:[#allocation15 + $0x18] sm:$0xff] %v4722
          %4791 = vst [vmem:[#allocation15 + $0x20] sm:$0xff] %v4723
          %4792 = vst [vmem:[#allocation15 + $0x28] sm:$0xff] %v4724
          %4793 = vst [vmem:[#allocation15 + $0x30] sm:$0xff] %v4725
          %4794 = vst [vmem:[#allocation15 + $0x38] sm:$0xff] %v4726
          %4795 = vst [vmem:[#allocation15 + $0x40] sm:$0xff] %v4727
          %4796 = vst [vmem:[#allocation15 + $0x48] sm:$0xff] %v4728
          %4797 = vst [vmem:[#allocation15 + $0x50] sm:$0xff] %v4729
          %4798 = vst [vmem:[#allocation15 + $0x58] sm:$0xff] %v4730
          %4799 = vst [vmem:[#allocation15 + $0x60] sm:$0xff] %v4731
          %4800 = vst [vmem:[#allocation15 + $0x68] sm:$0xff] %v4732
          %4801 = vst [vmem:[#allocation15 + $0x70] sm:$0xff] %v4733
          %4802 = vst [vmem:[#allocation15 + $0x78] sm:$0xff] %v4734
          %4803 = vst [vmem:[#allocation16] sm:$0xff] %v1524
          %4804 = vst [vmem:[#allocation16 + $0x8] sm:$0xff] %v1525
          %4805 = vst [vmem:[#allocation16 + $0x10] sm:$0xff] %v1526
          %4806 = vst [vmem:[#allocation16 + $0x18] sm:$0xff] %v1527
          %4807 = vst [vmem:[#allocation16 + $0x20] sm:$0xff] %v1528
          %4808 = vst [vmem:[#allocation16 + $0x28] sm:$0xff] %v1529
          %4809 = vst [vmem:[#allocation16 + $0x30] sm:$0xff] %v1530
          %4810 = vst [vmem:[#allocation16 + $0x38] sm:$0xff] %v1531
          %4811 = vst [vmem:[#allocation16 + $0x40] sm:$0xff] %v1532
          %4812 = vst [vmem:[#allocation16 + $0x48] sm:$0xff] %v1533
          %4813 = vst [vmem:[#allocation16 + $0x50] sm:$0xff] %v1534
          %4814 = vst [vmem:[#allocation16 + $0x58] sm:$0xff] %v1535
          %4815 = vst [vmem:[#allocation16 + $0x60] sm:$0xff] %v1536
          %4816 = vst [vmem:[#allocation16 + $0x68] sm:$0xff] %v1537
          %4817 = vst [vmem:[#allocation16 + $0x70] sm:$0xff] %v1538
          %4818 = vst [vmem:[#allocation16 + $0x78] sm:$0xff] %v1539
          %4819 = vst [vmem:[#allocation16 + $0x80] sm:$0xff] %v1804
          %4820 = vst [vmem:[#allocation16 + $0x88] sm:$0xff] %v1805
          %4821 = vst [vmem:[#allocation16 + $0x90] sm:$0xff] %v1806
          %4822 = vst [vmem:[#allocation16 + $0x98] sm:$0xff] %v1807
          %4823 = vst [vmem:[#allocation16 + $0xa0] sm:$0xff] %v1808
          %4824 = vst [vmem:[#allocation16 + $0xa8] sm:$0xff] %v1809
          %4825 = vst [vmem:[#allocation16 + $0xb0] sm:$0xff] %v1810
          %4826 = vst [vmem:[#allocation16 + $0xb8] sm:$0xff] %v1811
          %4827 = vst [vmem:[#allocation16 + $0xc0] sm:$0xff] %v1812
          %4828 = vst [vmem:[#allocation16 + $0xc8] sm:$0xff] %v1813
          %4829 = vst [vmem:[#allocation16 + $0xd0] sm:$0xff] %v1814
          %4830 = vst [vmem:[#allocation16 + $0xd8] sm:$0xff] %v1815
          %4831 = vst [vmem:[#allocation16 + $0xe0] sm:$0xff] %v1816
          %4832 = vst [vmem:[#allocation16 + $0xe8] sm:$0xff] %v1817
          %4833 = vst [vmem:[#allocation16 + $0xf0] sm:$0xff] %v1818
          %4834 = vst [vmem:[#allocation16 + $0xf8] sm:$0xff] %v1819
        $region76: #{tpu_custom_call.1} parent=43 // pred_fallthru
          _
        // Predicated region
        $region77: #{tpu_custom_call.1} parent=43 // pred_check
          %p4835 = pneg %p183
        $region78: #{tpu_custom_call.1} parent=43 // pred_check_branch
          %4837 = sbr.rel (%p4835) target = $region80
        $region79: #{tpu_custom_call.1} parent=43 // pred_region
          %s4839 = ssub.s32 2048, 2048
          %4840 = vsyncadd [#allocation6], %s4839
          %s4841 = sshll.u32 [#allocation15], 4
          %s4842 = int_to_ptr.vmem [resolvable:$true] %s4841
          %4847 = dma.vmem_to_hbm [thread:$0]  %s4842, 2048, %s6, [#allocation6], 128, 128, 8
        $region80: #{tpu_custom_call.1} parent=43 // pred_fallthru
          _
        // Predicated region
        $region81: #{tpu_custom_call.1} parent=43 // pred_check
          %p4848 = pneg %p204
        $region82: #{tpu_custom_call.1} parent=43 // pred_check_branch
          %4850 = sbr.rel (%p4848) target = $region84
        $region83: #{tpu_custom_call.1} parent=43 // pred_region
          %s4852 = ssub.s32 4096, 4096
          %4853 = vsyncadd [#allocation17], %s4852
          %s4854 = sshll.u32 [#allocation16], 4
          %s4855 = int_to_ptr.vmem [resolvable:$true] %s4854
          %4860 = dma.vmem_to_hbm [thread:$0]  %s4855, 4096, %s7, [#allocation17], 128, 128, 8
        $region84: #{tpu_custom_call.1} parent=43 // pred_fallthru
          _
        // Predicated region
        $region85: #{tpu_custom_call.1} parent=43 // pred_check
          %p4861 = pneg %p183
        $region86: #{tpu_custom_call.1} parent=43 // pred_check_branch
          %4863 = sbr.rel (%p4861) target = $region88
        $region87: #{tpu_custom_call.1} parent=43 // pred_region
          %4864 = dma.done [#allocation6], 2048
        $region88: #{tpu_custom_call.1} parent=43 // pred_fallthru
          _
        // Predicated region
        $region89: #{tpu_custom_call.1} parent=43 // pred_check
          %p4865 = pneg %p204
        $region90: #{tpu_custom_call.1} parent=43 // pred_check_branch
          %4867 = sbr.rel (%p4865) target = $region92
        $region91: #{tpu_custom_call.1} parent=43 // pred_region
          %4868 = dma.done [#allocation17], 4096
        $region92: #{tpu_custom_call.1} parent=43 // pred_fallthru
          _
      $region44: #{tpu_custom_call.1} parent=5 // pred_fallthru
        _
      %p4869 = scmp.le.s32.totalorder 2, %s24
      // Predicated region
      $region93: #{tpu_custom_call.1} parent=5 // pred_check
        %p4870 = pneg %p4869
      $region94: #{tpu_custom_call.1} parent=5 // pred_check_branch
        %4872 = sbr.rel (%p4870) target = $region96
      $region95: #{tpu_custom_call.1} parent=5 // pred_region
        %s4873 = ssub.s32 %s24, 2
      $region96: #{tpu_custom_call.1} parent=5 // pred_fallthru
        _
    $region6: #{tpu_custom_call.1} parent=1 // loop_footer
      %s28 = sadd.s32 1, %s24
    $region7: #{tpu_custom_call.1} parent=1 // loop_footer_branch
      %23 = sbr.rel target = $region3
    $region8: #{tpu_custom_call.1} parent=1 // loop_exit
      _
    %4874 = vsyncpa [#allocation5], 1
    %s4875 = scalar_lea.sflag [#allocation5], 1
    %4876 = vsyncpa %s4875, 1
    %4877 = vsyncpa [#allocation8], 1
    %4878 = vsyncpa [#allocation11], 1
    %s4879 = scalar_lea.sflag [#allocation11], 1
    %4880 = vsyncpa %s4879, 1
    %4881 = vsyncpa [#allocation14], 1
    %s4882 = scalar_lea.sflag [#allocation14], 1
    %4883 = vsyncpa %s4882, 1
    %4884 = vsyncpa [#allocation6], 1
    %s4885 = scalar_lea.sflag [#allocation6], 1
    %4886 = vsyncpa %s4885, 1
    %4887 = vsyncpa [#allocation17], 1

</llo_original>
